<compile_context>
chip_gen: v7x
topology: tpu7x:2x2x1
jax: 0.10.0
libtpu: 0.0.40
codegen_flags: <defaults>
</compile_context>

<pallas_src>
import functools

import jax
import jax.numpy as jnp
from jax.experimental import pallas as pl
from jax.experimental.pallas import tpu as pltpu


# --------------------------- fused forward kernel ------------------------- #
def dyged_ct_kernel(x_ref, a_ref,
                    gw1_ref, gb1_ref, gw2_ref, gb2_ref,
                    pw_ref,
                    mw1_ref, mb1_ref, mw2_ref, mb2_ref,
                    outs_ref, xcat_ref, snode_ref, *, k):
    X = x_ref[...]                      # (T, N, F)
    A = a_ref[...]                      # (T, N, N)
    T, N, F = X.shape
    H1 = gw1_ref.shape[1]
    H2 = gw2_ref.shape[1]

    # ---- GCN layer 1: relu(A @ X @ W1 + b1) ----
    # (A @ X) first (F < H1), then one (T*N, F) @ (F, H1) slab matmul.
    ax = jnp.einsum("tij,tjf->tif", A, X, preferred_element_type=jnp.float32)
    h1 = jnp.dot(ax.reshape(T * N, F), gw1_ref[...],
                 preferred_element_type=jnp.float32) + gb1_ref[...]
    h1 = jnp.maximum(h1, 0.0).reshape(T, N, H1)

    # ---- GCN layer 2: relu(A @ h1 @ W2 + b2) ----
    ax2 = jnp.einsum("tij,tjh->tih", A, h1, preferred_element_type=jnp.float32)
    h2 = jnp.dot(ax2.reshape(T * N, H1), gw2_ref[...],
                 preferred_element_type=jnp.float32) + gb2_ref[...]
    h2 = jnp.maximum(h2, 0.0).reshape(T, N, H2)

    # ---- structural self-attention pooling over nodes ----
    e = jnp.sum(h2 * pw_ref[...], axis=-1)                       # (T, N) scores
    e = e - jnp.max(e, axis=-1, keepdims=True)
    p = jnp.exp(e)
    s = p / jnp.sum(p, axis=-1, keepdims=True)                   # softmax over nodes
    snode_ref[...] = s                                           # (T, N) lane-dense

    pooled = jnp.einsum("tin,tnh->tih", s[:, None, :], h2,
                        preferred_element_type=jnp.float32)[:, 0, :]   # (T, H2)

    # ---- Concat of the k+1 most recent pooled snapshots (zero pad at start) ----
    # column block j holds pooled[t - (k - j)]  (oldest first).
    for j in range(k + 1):
        shift = k - j
        c0, c1 = j * H2, (j + 1) * H2
        if shift == 0:
            xcat_ref[:, c0:c1] = pooled
        else:
            xcat_ref[0:shift, c0:c1] = jnp.zeros((shift, H2), jnp.float32)
            xcat_ref[shift:T, c0:c1] = pooled[0:T - shift, :]

    # ---- MLP head: relu(Xc W1 + b1) W2 + b2 ----
    xcat = xcat_ref[...]                                         # (T, (k+1)*H2)
    hm = jnp.dot(xcat, mw1_ref[...],
                 preferred_element_type=jnp.float32) + mb1_ref[...]
    hm = jnp.maximum(hm, 0.0)
    outs_ref[...] = jnp.dot(hm, mw2_ref[...],
                            preferred_element_type=jnp.float32) + mb2_ref[...]


def _full_spec(shape):
    nd = len(shape)
    return pl.BlockSpec(shape, lambda *_: (0,) * nd)


def dyged_ct_forward(X, A, params, k):
    """Fused DyGED_CT forward.  Returns (outs, X_concat, S_node, None)."""
    T, N, _ = X.shape
    H2 = params["gcn_w2"].shape[1]
    O = params["mlp_w2"].shape[1]
    K = k + 1

    args = (
        X, A,
        params["gcn_w1"], params["gcn_b1"],
        params["gcn_w2"], params["gcn_b2"],
        params["pool_w"],
        params["mlp_w1"], params["mlp_b1"],
        params["mlp_w2"], params["mlp_b2"],
    )
    outs, xcat, s_node = pl.pallas_call(
        functools.partial(dyged_ct_kernel, k=k),
        out_shape=(
            jax.ShapeDtypeStruct((T, O), jnp.float32),
            jax.ShapeDtypeStruct((T, K * H2), jnp.float32),
            jax.ShapeDtypeStruct((T, N), jnp.float32),
        ),
        grid=(1,),
        in_specs=[_full_spec(a.shape) for a in args],
        out_specs=(
            _full_spec((T, O)),
            _full_spec((T, K * H2)),
            _full_spec((T, N)),
        ),
        compiler_params=pltpu.CompilerParams(
            dimension_semantics=("arbitrary",)),
    )(*args)
    return outs, xcat, s_node, None


# ----------------------- pure-JAX reference (for checking) ---------------- #
def reference_forward(X, A, p, k):
    h = X
    for w, b in ((p["gcn_w1"], p["gcn_b1"]), (p["gcn_w2"], p["gcn_b2"])):
        h = jax.nn.relu(jnp.einsum("tij,tjf->tif", A, h) @ w + b)
    e = jnp.sum(h * p["pool_w"], axis=-1)                        # (T, N)
    s = jax.nn.softmax(e, axis=-1)
    pooled = jnp.einsum("tn,tnh->th", s, h)                      # (T, H)
    T, H = pooled.shape
    padded = jnp.concatenate([jnp.zeros((k, H), pooled.dtype), pooled], axis=0)
    xcat = jnp.concatenate([padded[j:j + T] for j in range(k + 1)], axis=-1)
    hm = jax.nn.relu(xcat @ p["mlp_w1"] + p["mlp_b1"])
    outs = hm @ p["mlp_w2"] + p["mlp_b2"]
    return outs, xcat, s


if __name__ == "__main__":
    T = 8            # graph snapshots (time steps)
    N = 16           # adj_size (nodes per snapshot)
    F = 8            # n_feature
    H_GCN = [32, 32] # n_hidden_gcn
    K_WIN = 3        # k  -> Concat over k+1 snapshots
    H_MLP = 32       # n_hidden_mlp
    N_OUT = 2        # n_output

    key = jax.random.PRNGKey(0)
    ks = jax.random.split(key, 12)

    def init(kk, shape, scale=0.1):
        return scale * jax.random.normal(kk, shape, dtype=jnp.float32)

    params = {
        "gcn_w1": init(ks[0], (F, H_GCN[0])),
        "gcn_b1": init(ks[1], (1, H_GCN[0])),
        "gcn_w2": init(ks[2], (H_GCN[0], H_GCN[1])),
        "gcn_b2": init(ks[3], (1, H_GCN[1])),
        "pool_w": init(ks[4], (1, H_GCN[1])),                    # lane-major (1, H)
        "mlp_w1": init(ks[5], (H_GCN[1] * (K_WIN + 1), H_MLP)),
        "mlp_b1": init(ks[6], (1, H_MLP)),
        "mlp_w2": init(ks[7], (H_MLP, N_OUT)),
        "mlp_b2": init(ks[8], (1, N_OUT)),
    }

    # Inputs: node features + symmetric, self-looped, row-normalized adjacency.
    X = jax.random.normal(ks[9], (T, N, F), dtype=jnp.float32)
    adj = (jax.random.uniform(ks[10], (T, N, N)) > 0.7).astype(jnp.float32)
    adj = jnp.maximum(jnp.maximum(adj, jnp.transpose(adj, (0, 2, 1))),
                      jnp.eye(N, dtype=jnp.float32)[None])
    A = adj / jnp.sum(adj, axis=-1, keepdims=True)

    outs, Xc, S_node, S_time = dyged_ct_forward(X, A, params, K_WIN)
    jax.block_until_ready((outs, Xc, S_node))

    assert outs.shape == (T, N_OUT)
    assert Xc.shape == (T, H_GCN[1] * (K_WIN + 1))
    assert S_node.shape == (T, N)
    assert S_time is None

    # Numerical check against the pure-JAX reference.
    with jax.default_matmul_precision("highest"):
        ref_outs, ref_xcat, ref_s = reference_forward(X, A, params, K_WIN)
    assert jnp.allclose(outs, ref_outs, atol=1e-3, rtol=1e-2), "outs mismatch"
    assert jnp.allclose(Xc, ref_xcat, atol=1e-3, rtol=1e-2), "concat mismatch"
    assert jnp.allclose(S_node, ref_s, atol=1e-3, rtol=1e-2), "S_node mismatch"

    print("KERNEL_OK")
</pallas_src>

<mosaic_0001>
module attributes {stable_mosaic.version = 11 : i64} {
  func.func @dyged_ct_kernel(%arg0: i32, %arg1: memref<8x16x8xf32, #tpu.memory_space<vmem>>, %arg2: memref<8x16x16xf32, #tpu.memory_space<vmem>>, %arg3: memref<8x32xf32, #tpu.memory_space<vmem>>, %arg4: memref<1x32xf32, #tpu.memory_space<vmem>>, %arg5: memref<32x32xf32, #tpu.memory_space<vmem>>, %arg6: memref<1x32xf32, #tpu.memory_space<vmem>>, %arg7: memref<1x32xf32, #tpu.memory_space<vmem>>, %arg8: memref<128x32xf32, #tpu.memory_space<vmem>>, %arg9: memref<1x32xf32, #tpu.memory_space<vmem>>, %arg10: memref<32x2xf32, #tpu.memory_space<vmem>>, %arg11: memref<1x2xf32, #tpu.memory_space<vmem>>, %arg12: memref<8x2xf32, #tpu.memory_space<vmem>>, %arg13: memref<8x128xf32, #tpu.memory_space<vmem>>, %arg14: memref<8x16xf32, #tpu.memory_space<vmem>>) attributes {dimension_semantics = [#tpu.dimension_semantics<arbitrary>], iteration_bounds = array<i64: 1>, scalar_prefetch = 0 : i64, scratch_operands = 0 : i64, tpu.core_type = #tpu.core_type<tc>, window_params = [{pipeline_mode = #tpu.pipeline_mode<synchronous>, transform_indices = @transform_0, window_bounds = array<i64: 8, 16, 8>}, {pipeline_mode = #tpu.pipeline_mode<synchronous>, transform_indices = @transform_1, window_bounds = array<i64: 8, 16, 16>}, {pipeline_mode = #tpu.pipeline_mode<synchronous>, transform_indices = @transform_2, window_bounds = array<i64: 8, 32>}, {pipeline_mode = #tpu.pipeline_mode<synchronous>, transform_indices = @transform_3, window_bounds = array<i64: 1, 32>}, {pipeline_mode = #tpu.pipeline_mode<synchronous>, transform_indices = @transform_4, window_bounds = array<i64: 32, 32>}, {pipeline_mode = #tpu.pipeline_mode<synchronous>, transform_indices = @transform_5, window_bounds = array<i64: 1, 32>}, {pipeline_mode = #tpu.pipeline_mode<synchronous>, transform_indices = @transform_6, window_bounds = array<i64: 1, 32>}, {pipeline_mode = #tpu.pipeline_mode<synchronous>, transform_indices = @transform_7, window_bounds = array<i64: 128, 32>}, {pipeline_mode = #tpu.pipeline_mode<synchronous>, transform_indices = @transform_8, window_bounds = array<i64: 1, 32>}, {pipeline_mode = #tpu.pipeline_mode<synchronous>, transform_indices = @transform_9, window_bounds = array<i64: 32, 2>}, {pipeline_mode = #tpu.pipeline_mode<synchronous>, transform_indices = @transform_10, window_bounds = array<i64: 1, 2>}, {pipeline_mode = #tpu.pipeline_mode<synchronous>, transform_indices = @transform_11, window_bounds = array<i64: 8, 2>}, {pipeline_mode = #tpu.pipeline_mode<synchronous>, transform_indices = @transform_12, window_bounds = array<i64: 8, 128>}, {pipeline_mode = #tpu.pipeline_mode<synchronous>, transform_indices = @transform_13, window_bounds = array<i64: 8, 16>}]} {
    %c0 = arith.constant 0 : index
    %c0_0 = arith.constant 0 : index
    %c0_1 = arith.constant 0 : index
    %0 = vector.load %arg1[%c0, %c0_0, %c0_1] : memref<8x16x8xf32, #tpu.memory_space<vmem>>, vector<8x16x8xf32>
    %c0_2 = arith.constant 0 : index
    %c0_3 = arith.constant 0 : index
    %c0_4 = arith.constant 0 : index
    %1 = vector.load %arg2[%c0_2, %c0_3, %c0_4] : memref<8x16x16xf32, #tpu.memory_space<vmem>>, vector<8x16x16xf32>
    "tpu.trace_start"() <{level = 10 : i32, message = "tij,tjf->tif"}> : () -> ()
    %cst = arith.constant dense<0.000000e+00> : vector<8x16x8xf32>
    %2 = tpu.matmul %1, %0, %cst {dimension_numbers = #tpu.dot_dimension_numbers<[2], [1], [1], [2], [0, 0, 0, 1, 1, 2], [0], [0]>} : vector<8x16x16xf32>, vector<8x16x8xf32>, vector<8x16x8xf32> -> vector<8x16x8xf32>
    "tpu.trace_stop"() : () -> ()
    %3 = vector.shape_cast %2 : vector<8x16x8xf32> to vector<128x8xf32>
    %c0_5 = arith.constant 0 : index
    %c0_6 = arith.constant 0 : index
    %4 = vector.load %arg3[%c0_5, %c0_6] : memref<8x32xf32, #tpu.memory_space<vmem>>, vector<8x32xf32>
    %cst_7 = arith.constant dense<0.000000e+00> : vector<128x32xf32>
    %5 = tpu.matmul %3, %4, %cst_7 {dimension_numbers = #tpu.dot_dimension_numbers<[1], [0], [0], [1], [0, 0, 1, 1], [], []>} : vector<128x8xf32>, vector<8x32xf32>, vector<128x32xf32> -> vector<128x32xf32>
    %c0_8 = arith.constant 0 : index
    %c0_9 = arith.constant 0 : index
    %6 = vector.load %arg4[%c0_8, %c0_9] : memref<1x32xf32, #tpu.memory_space<vmem>>, vector<1x32xf32>
    %7 = vector.broadcast %6 : vector<1x32xf32> to vector<128x32xf32>
    %8 = arith.addf %5, %7 : vector<128x32xf32>
    %cst_10 = arith.constant 0.000000e+00 : f32
    %9 = vector.broadcast %cst_10 : f32 to vector<128x32xf32>
    %10 = arith.maximumf %8, %9 : vector<128x32xf32>
    %11 = vector.shape_cast %10 : vector<128x32xf32> to vector<8x16x32xf32>
    "tpu.trace_start"() <{level = 10 : i32, message = "tij,tjh->tih"}> : () -> ()
    %cst_11 = arith.constant dense<0.000000e+00> : vector<8x16x32xf32>
    %12 = tpu.matmul %1, %11, %cst_11 {dimension_numbers = #tpu.dot_dimension_numbers<[2], [1], [1], [2], [0, 0, 0, 1, 1, 2], [0], [0]>} : vector<8x16x16xf32>, vector<8x16x32xf32>, vector<8x16x32xf32> -> vector<8x16x32xf32>
    "tpu.trace_stop"() : () -> ()
    %13 = vector.shape_cast %12 : vector<8x16x32xf32> to vector<128x32xf32>
    %c0_12 = arith.constant 0 : index
    %c0_13 = arith.constant 0 : index
    %14 = vector.load %arg5[%c0_12, %c0_13] : memref<32x32xf32, #tpu.memory_space<vmem>>, vector<32x32xf32>
    %cst_14 = arith.constant dense<0.000000e+00> : vector<128x32xf32>
    %15 = tpu.matmul %13, %14, %cst_14 {dimension_numbers = #tpu.dot_dimension_numbers<[1], [0], [0], [1], [0, 0, 1, 1], [], []>} : vector<128x32xf32>, vector<32x32xf32>, vector<128x32xf32> -> vector<128x32xf32>
    %c0_15 = arith.constant 0 : index
    %c0_16 = arith.constant 0 : index
    %16 = vector.load %arg6[%c0_15, %c0_16] : memref<1x32xf32, #tpu.memory_space<vmem>>, vector<1x32xf32>
    %17 = vector.broadcast %16 : vector<1x32xf32> to vector<128x32xf32>
    %18 = arith.addf %15, %17 : vector<128x32xf32>
    %cst_17 = arith.constant 0.000000e+00 : f32
    %19 = vector.broadcast %cst_17 : f32 to vector<128x32xf32>
    %20 = arith.maximumf %18, %19 : vector<128x32xf32>
    %21 = vector.shape_cast %20 : vector<128x32xf32> to vector<8x16x32xf32>
    %c0_18 = arith.constant 0 : index
    %c0_19 = arith.constant 0 : index
    %22 = vector.load %arg7[%c0_18, %c0_19] : memref<1x32xf32, #tpu.memory_space<vmem>>, vector<1x32xf32>
    %23 = vector.shape_cast %22 : vector<1x32xf32> to vector<1x1x32xf32>
    %24 = vector.broadcast %23 : vector<1x1x32xf32> to vector<8x16x32xf32>
    %25 = arith.mulf %21, %24 : vector<8x16x32xf32>
    %cst_20 = arith.constant dense<0.000000e+00> : vector<8x16xf32>
    %26 = vector.multi_reduction <add>, %25, %cst_20 [2] : vector<8x16x32xf32> to vector<8x16xf32>
    %cst_21 = arith.constant dense<0xFF800000> : vector<8xf32>
    %27 = vector.multi_reduction <maximumf>, %26, %cst_21 [1] : vector<8x16xf32> to vector<8xf32>
    %28 = vector.shape_cast %27 : vector<8xf32> to vector<8x1xf32>
    %29 = vector.broadcast %28 : vector<8x1xf32> to vector<8x16xf32>
    %30 = arith.subf %26, %29 : vector<8x16xf32>
    %31 = math.exp %30 : vector<8x16xf32>
    %cst_22 = arith.constant dense<0.000000e+00> : vector<8xf32>
    %32 = vector.multi_reduction <add>, %31, %cst_22 [1] : vector<8x16xf32> to vector<8xf32>
    %33 = vector.shape_cast %32 : vector<8xf32> to vector<8x1xf32>
    %34 = vector.broadcast %33 : vector<8x1xf32> to vector<8x16xf32>
    %35 = arith.divf %31, %34 : vector<8x16xf32>
    %c0_23 = arith.constant 0 : index
    %c0_24 = arith.constant 0 : index
    %36 = vector.load %arg14[%c0_23, %c0_24] : memref<8x16xf32, #tpu.memory_space<vmem>>, vector<8x16xf32>
    tpu.vector_store %arg14[%c0_23, %c0_24], %35 {strides = array<i32>} : memref<8x16xf32, #tpu.memory_space<vmem>>, vector<8x16xf32>,
    %37 = vector.shape_cast %35 : vector<8x16xf32> to vector<8x1x16xf32>
    "tpu.trace_start"() <{level = 10 : i32, message = "tin,tnh->tih"}> : () -> ()
    %cst_25 = arith.constant dense<0.000000e+00> : vector<8x1x32xf32>
    %38 = tpu.matmul %37, %21, %cst_25 {dimension_numbers = #tpu.dot_dimension_numbers<[2], [1], [1], [2], [0, 0, 0, 1, 1, 2], [0], [0]>} : vector<8x1x16xf32>, vector<8x16x32xf32>, vector<8x1x32xf32> -> vector<8x1x32xf32>
    "tpu.trace_stop"() : () -> ()
    %39 = vector.shape_cast %38 : vector<8x1x32xf32> to vector<8x32xf32>
    %cst_26 = arith.constant 0.000000e+00 : f32
    %40 = vector.broadcast %cst_26 : f32 to vector<3x32xf32>
    %c0_27 = arith.constant 0 : index
    %c0_28 = arith.constant 0 : index
    %41 = vector.load %arg13[%c0_27, %c0_28] : memref<8x128xf32, #tpu.memory_space<vmem>>, vector<3x32xf32>
    tpu.vector_store %arg13[%c0_27, %c0_28], %40 {strides = array<i32>} : memref<8x128xf32, #tpu.memory_space<vmem>>, vector<3x32xf32>,
    %42 = vector.extract_strided_slice %39 {offsets = [0, 0], sizes = [5, 32], strides = [1, 1]} : vector<8x32xf32> to vector<5x32xf32>
    %c3 = arith.constant 3 : index
    %c0_29 = arith.constant 0 : index
    %43 = vector.load %arg13[%c3, %c0_29] : memref<8x128xf32, #tpu.memory_space<vmem>>, vector<5x32xf32>
    tpu.vector_store %arg13[%c3, %c0_29], %42 {strides = array<i32>} : memref<8x128xf32, #tpu.memory_space<vmem>>, vector<5x32xf32>,
    %cst_30 = arith.constant 0.000000e+00 : f32
    %44 = vector.broadcast %cst_30 : f32 to vector<2x32xf32>
    %c0_31 = arith.constant 0 : index
    %c32 = arith.constant 32 : index
    %45 = vector.load %arg13[%c0_31, %c32] : memref<8x128xf32, #tpu.memory_space<vmem>>, vector<2x32xf32>
    tpu.vector_store %arg13[%c0_31, %c32], %44 {strides = array<i32>} : memref<8x128xf32, #tpu.memory_space<vmem>>, vector<2x32xf32>,
    %46 = vector.extract_strided_slice %39 {offsets = [0, 0], sizes = [6, 32], strides = [1, 1]} : vector<8x32xf32> to vector<6x32xf32>
    %c2 = arith.constant 2 : index
    %c32_32 = arith.constant 32 : index
    %47 = vector.load %arg13[%c2, %c32_32] : memref<8x128xf32, #tpu.memory_space<vmem>>, vector<6x32xf32>
    tpu.vector_store %arg13[%c2, %c32_32], %46 {strides = array<i32>} : memref<8x128xf32, #tpu.memory_space<vmem>>, vector<6x32xf32>,
    %cst_33 = arith.constant 0.000000e+00 : f32
    %48 = vector.broadcast %cst_33 : f32 to vector<1x32xf32>
    %c0_34 = arith.constant 0 : index
    %c64 = arith.constant 64 : index
    %49 = vector.load %arg13[%c0_34, %c64] : memref<8x128xf32, #tpu.memory_space<vmem>>, vector<1x32xf32>
    tpu.vector_store %arg13[%c0_34, %c64], %48 {strides = array<i32>} : memref<8x128xf32, #tpu.memory_space<vmem>>, vector<1x32xf32>,
    %50 = vector.extract_strided_slice %39 {offsets = [0, 0], sizes = [7, 32], strides = [1, 1]} : vector<8x32xf32> to vector<7x32xf32>
    %c1 = arith.constant 1 : index
    %c64_35 = arith.constant 64 : index
    %51 = vector.load %arg13[%c1, %c64_35] : memref<8x128xf32, #tpu.memory_space<vmem>>, vector<7x32xf32>
    tpu.vector_store %arg13[%c1, %c64_35], %50 {strides = array<i32>} : memref<8x128xf32, #tpu.memory_space<vmem>>, vector<7x32xf32>,
    %c0_36 = arith.constant 0 : index
    %c96 = arith.constant 96 : index
    %52 = vector.load %arg13[%c0_36, %c96] : memref<8x128xf32, #tpu.memory_space<vmem>>, vector<8x32xf32>
    tpu.vector_store %arg13[%c0_36, %c96], %39 {strides = array<i32>} : memref<8x128xf32, #tpu.memory_space<vmem>>, vector<8x32xf32>,
    %c0_37 = arith.constant 0 : index
    %c0_38 = arith.constant 0 : index
    %53 = vector.load %arg13[%c0_37, %c0_38] : memref<8x128xf32, #tpu.memory_space<vmem>>, vector<8x128xf32>
    %c0_39 = arith.constant 0 : index
    %c0_40 = arith.constant 0 : index
    %54 = vector.load %arg8[%c0_39, %c0_40] : memref<128x32xf32, #tpu.memory_space<vmem>>, vector<128x32xf32>
    %cst_41 = arith.constant dense<0.000000e+00> : vector<8x32xf32>
    %55 = tpu.matmul %53, %54, %cst_41 {dimension_numbers = #tpu.dot_dimension_numbers<[1], [0], [0], [1], [0, 0, 1, 1], [], []>} : vector<8x128xf32>, vector<128x32xf32>, vector<8x32xf32> -> vector<8x32xf32>
    %c0_42 = arith.constant 0 : index
    %c0_43 = arith.constant 0 : index
    %56 = vector.load %arg9[%c0_42, %c0_43] : memref<1x32xf32, #tpu.memory_space<vmem>>, vector<1x32xf32>
    %57 = vector.broadcast %56 : vector<1x32xf32> to vector<8x32xf32>
    %58 = arith.addf %55, %57 : vector<8x32xf32>
    %cst_44 = arith.constant 0.000000e+00 : f32
    %59 = vector.broadcast %cst_44 : f32 to vector<8x32xf32>
    %60 = arith.maximumf %58, %59 : vector<8x32xf32>
    %c0_45 = arith.constant 0 : index
    %c0_46 = arith.constant 0 : index
    %61 = vector.load %arg10[%c0_45, %c0_46] : memref<32x2xf32, #tpu.memory_space<vmem>>, vector<32x2xf32>
    %cst_47 = arith.constant dense<0.000000e+00> : vector<8x2xf32>
    %62 = tpu.matmul %60, %61, %cst_47 {dimension_numbers = #tpu.dot_dimension_numbers<[1], [0], [0], [1], [0, 0, 1, 1], [], []>} : vector<8x32xf32>, vector<32x2xf32>, vector<8x2xf32> -> vector<8x2xf32>
    %c0_48 = arith.constant 0 : index
    %c0_49 = arith.constant 0 : index
    %63 = vector.load %arg11[%c0_48, %c0_49] : memref<1x2xf32, #tpu.memory_space<vmem>>, vector<1x2xf32>
    %64 = vector.broadcast %63 : vector<1x2xf32> to vector<8x2xf32>
    %65 = arith.addf %62, %64 : vector<8x2xf32>
    %c0_50 = arith.constant 0 : index
    %c0_51 = arith.constant 0 : index
    %66 = vector.load %arg12[%c0_50, %c0_51] : memref<8x2xf32, #tpu.memory_space<vmem>>, vector<8x2xf32>
    tpu.vector_store %arg12[%c0_50, %c0_51], %65 {strides = array<i32>} : memref<8x2xf32, #tpu.memory_space<vmem>>, vector<8x2xf32>,
    return
  }
  func.func @transform_0(%arg0: i32) -> (i32, i32, i32) {
    %c0_i32 = arith.constant 0 : i32
    %c0_i32_0 = arith.constant 0 : i32
    %c0_i32_1 = arith.constant 0 : i32
    %c0_i32_2 = arith.constant 0 : i32
    return %c0_i32, %c0_i32_0, %c0_i32_1 : i32, i32, i32
  }
  func.func @transform_1(%arg0: i32) -> (i32, i32, i32) {
    %c0_i32 = arith.constant 0 : i32
    %c0_i32_0 = arith.constant 0 : i32
    %c0_i32_1 = arith.constant 0 : i32
    %c0_i32_2 = arith.constant 0 : i32
    return %c0_i32, %c0_i32_0, %c0_i32_1 : i32, i32, i32
  }
  func.func @transform_2(%arg0: i32) -> (i32, i32) {
    %c0_i32 = arith.constant 0 : i32
    %c0_i32_0 = arith.constant 0 : i32
    %c0_i32_1 = arith.constant 0 : i32
    return %c0_i32, %c0_i32_0 : i32, i32
  }
  func.func @transform_3(%arg0: i32) -> (i32, i32) {
    %c0_i32 = arith.constant 0 : i32
    %c0_i32_0 = arith.constant 0 : i32
    %c0_i32_1 = arith.constant 0 : i32
    return %c0_i32, %c0_i32_0 : i32, i32
  }
  func.func @transform_4(%arg0: i32) -> (i32, i32) {
    %c0_i32 = arith.constant 0 : i32
    %c0_i32_0 = arith.constant 0 : i32
    %c0_i32_1 = arith.constant 0 : i32
    return %c0_i32, %c0_i32_0 : i32, i32
  }
  func.func @transform_5(%arg0: i32) -> (i32, i32) {
    %c0_i32 = arith.constant 0 : i32
    %c0_i32_0 = arith.constant 0 : i32
    %c0_i32_1 = arith.constant 0 : i32
    return %c0_i32, %c0_i32_0 : i32, i32
  }
  func.func @transform_6(%arg0: i32) -> (i32, i32) {
    %c0_i32 = arith.constant 0 : i32
    %c0_i32_0 = arith.constant 0 : i32
    %c0_i32_1 = arith.constant 0 : i32
    return %c0_i32, %c0_i32_0 : i32, i32
  }
  func.func @transform_7(%arg0: i32) -> (i32, i32) {
    %c0_i32 = arith.constant 0 : i32
    %c0_i32_0 = arith.constant 0 : i32
    %c0_i32_1 = arith.constant 0 : i32
    return %c0_i32, %c0_i32_0 : i32, i32
  }
  func.func @transform_8(%arg0: i32) -> (i32, i32) {
    %c0_i32 = arith.constant 0 : i32
    %c0_i32_0 = arith.constant 0 : i32
    %c0_i32_1 = arith.constant 0 : i32
    return %c0_i32, %c0_i32_0 : i32, i32
  }
  func.func @transform_9(%arg0: i32) -> (i32, i32) {
    %c0_i32 = arith.constant 0 : i32
    %c0_i32_0 = arith.constant 0 : i32
    %c0_i32_1 = arith.constant 0 : i32
    return %c0_i32, %c0_i32_0 : i32, i32
  }
  func.func @transform_10(%arg0: i32) -> (i32, i32) {
    %c0_i32 = arith.constant 0 : i32
    %c0_i32_0 = arith.constant 0 : i32
    %c0_i32_1 = arith.constant 0 : i32
    return %c0_i32, %c0_i32_0 : i32, i32
  }
  func.func @transform_11(%arg0: i32) -> (i32, i32) {
    %c0_i32 = arith.constant 0 : i32
    %c0_i32_0 = arith.constant 0 : i32
    %c0_i32_1 = arith.constant 0 : i32
    return %c0_i32, %c0_i32_0 : i32, i32
  }
  func.func @transform_12(%arg0: i32) -> (i32, i32) {
    %c0_i32 = arith.constant 0 : i32
    %c0_i32_0 = arith.constant 0 : i32
    %c0_i32_1 = arith.constant 0 : i32
    return %c0_i32, %c0_i32_0 : i32, i32
  }
  func.func @transform_13(%arg0: i32) -> (i32, i32) {
    %c0_i32 = arith.constant 0 : i32
    %c0_i32_0 = arith.constant 0 : i32
    %c0_i32_1 = arith.constant 0 : i32
    return %c0_i32, %c0_i32_0 : i32, i32
  }
}

</mosaic_0001>

<llo_original>
// kernel: tpu_custom_call.1
$region0: #{tpu_custom_call.1}
  #allocation0 [shape = 'u32[]', space=smem, size = 0x4, offset = 0x4, fixed_abs, tag = 'smem constant byte address 0x4 - core index']
  #allocation1 [shape = 'u32[144,128]{1,0:T(1,128)}', space=vmem, size = 0x12000, scoped, tag = 'internal scratch']
  %s0 = inlined_call_operand.vmem [shape: f32[8,16,8], index: 0, kind: input, shape index: {}]
  %s1 = inlined_call_operand.vmem [shape: f32[8,16,16], index: 1, kind: input, shape index: {}]
  %s2 = inlined_call_operand.vmem [shape: f32[8,32], index: 2, kind: input, shape index: {}]
  %s3 = inlined_call_operand.vmem [shape: f32[1,32], index: 3, kind: input, shape index: {}]
  %s4 = inlined_call_operand.vmem [shape: f32[32,32], index: 4, kind: input, shape index: {}]
  %s5 = inlined_call_operand.vmem [shape: f32[1,32], index: 5, kind: input, shape index: {}]
  %s6 = inlined_call_operand.vmem [shape: f32[1,32], index: 6, kind: input, shape index: {}]
  %s7 = inlined_call_operand.vmem [shape: f32[128,32], index: 7, kind: input, shape index: {}]
  %s8 = inlined_call_operand.vmem [shape: f32[1,32], index: 8, kind: input, shape index: {}]
  %s9 = inlined_call_operand.vmem [shape: f32[32,2], index: 9, kind: input, shape index: {}]
  %s10 = inlined_call_operand.vmem [shape: f32[1,2], index: 10, kind: input, shape index: {}]
  %s11 = inlined_call_operand.vmem [shape: f32[8,2], index: 11, kind: output, shape index: {0}]
  %s12 = inlined_call_operand.hbm [shape: f32[8,128], index: 12, kind: output, shape index: {1}]
  %s13 = inlined_call_operand.hbm [shape: f32[8,16], index: 13, kind: output, shape index: {2}]
  %14 = xla_tuple %s11, %s12, %s13
  %s15 = sld [smem:[#allocation0]]
  $region70: #{tpu_custom_call.1} parent=0
    _
  %s17 = ssub.s32 1, %s15
  %s18 = scalar_select 0, %s17, %s15
  $region1: #{tpu_custom_call.1} parent=0
    #allocation2 [shape = 'u8[4096]{0}', space=vmem, size = 0x1000, scoped, tag = 'output window, operand 1, single buffered']
    #allocation3 [shape = 's32[1]{0}', space=sflag, size = 0x4, scoped, tag = 'scoped memory for tpu_custom_call.1']
    #allocation4 [shape = 'u8[4096]{0}', space=vmem, size = 0x1000, scoped, tag = 'output window, operand 2, single buffered']
    #allocation5 [shape = 's32[1]{0}', space=sflag, size = 0x4, scoped, tag = 'scoped memory for tpu_custom_call.1']
    %19 = vsyncpa [#allocation3], 0
    %20 = vsyncpa [#allocation5], 0
    // Predicated region
    $region2: #{tpu_custom_call.1} parent=1 // pred_check
      _
    $region3: #{tpu_custom_call.1} parent=1 // pred_check_branch
      %22 = sbr.rel (0) target = $region5
    $region4: #{tpu_custom_call.1} parent=1 // pred_region
      _
    $region5: #{tpu_custom_call.1} parent=1 // pred_fallthru
      _
    // Predicated region
    $region6: #{tpu_custom_call.1} parent=1 // pred_check
      _
    $region7: #{tpu_custom_call.1} parent=1 // pred_check_branch
      %24 = sbr.rel (0) target = $region9
    $region8: #{tpu_custom_call.1} parent=1 // pred_region
      _
    $region9: #{tpu_custom_call.1} parent=1 // pred_fallthru
      _
    // Predicated region
    $region10: #{tpu_custom_call.1} parent=1 // pred_check
      _
    $region11: #{tpu_custom_call.1} parent=1 // pred_check_branch
      %26 = sbr.rel (0) target = $region13
    $region12: #{tpu_custom_call.1} parent=1 // pred_region
      _
    $region13: #{tpu_custom_call.1} parent=1 // pred_fallthru
      _
    // Predicated region
    $region14: #{tpu_custom_call.1} parent=1 // pred_check
      _
    $region15: #{tpu_custom_call.1} parent=1 // pred_check_branch
      %28 = sbr.rel (0) target = $region17
    $region16: #{tpu_custom_call.1} parent=1 // pred_region
      _
    $region17: #{tpu_custom_call.1} parent=1 // pred_fallthru
      _
    // Predicated region
    $region18: #{tpu_custom_call.1} parent=1 // pred_check
      _
    $region19: #{tpu_custom_call.1} parent=1 // pred_check_branch
      %30 = sbr.rel (0) target = $region21
    $region20: #{tpu_custom_call.1} parent=1 // pred_region
      _
    $region21: #{tpu_custom_call.1} parent=1 // pred_fallthru
      _
    // Predicated region
    $region22: #{tpu_custom_call.1} parent=1 // pred_check
      _
    $region23: #{tpu_custom_call.1} parent=1 // pred_check_branch
      %32 = sbr.rel (0) target = $region25
    $region24: #{tpu_custom_call.1} parent=1 // pred_region
      _
    $region25: #{tpu_custom_call.1} parent=1 // pred_fallthru
      _
    // Predicated region
    $region26: #{tpu_custom_call.1} parent=1 // pred_check
      _
    $region27: #{tpu_custom_call.1} parent=1 // pred_check_branch
      %34 = sbr.rel (0) target = $region29
    $region28: #{tpu_custom_call.1} parent=1 // pred_region
      _
    $region29: #{tpu_custom_call.1} parent=1 // pred_fallthru
      _
    // Predicated region
    $region30: #{tpu_custom_call.1} parent=1 // pred_check
      _
    $region31: #{tpu_custom_call.1} parent=1 // pred_check_branch
      %36 = sbr.rel (0) target = $region33
    $region32: #{tpu_custom_call.1} parent=1 // pred_region
      _
    $region33: #{tpu_custom_call.1} parent=1 // pred_fallthru
      _
    // Predicated region
    $region34: #{tpu_custom_call.1} parent=1 // pred_check
      _
    $region35: #{tpu_custom_call.1} parent=1 // pred_check_branch
      %38 = sbr.rel (0) target = $region37
    $region36: #{tpu_custom_call.1} parent=1 // pred_region
      _
    $region37: #{tpu_custom_call.1} parent=1 // pred_fallthru
      _
    // Predicated region
    $region38: #{tpu_custom_call.1} parent=1 // pred_check
      _
    $region39: #{tpu_custom_call.1} parent=1 // pred_check_branch
      %40 = sbr.rel (0) target = $region41
    $region40: #{tpu_custom_call.1} parent=1 // pred_region
      _
    $region41: #{tpu_custom_call.1} parent=1 // pred_fallthru
      _
    // Predicated region
    $region42: #{tpu_custom_call.1} parent=1 // pred_check
      _
    $region43: #{tpu_custom_call.1} parent=1 // pred_check_branch
      %42 = sbr.rel (0) target = $region45
    $region44: #{tpu_custom_call.1} parent=1 // pred_region
      _
    $region45: #{tpu_custom_call.1} parent=1 // pred_fallthru
      _
    %v43 = vld [vmem:[%s0] sm:$0xff]
    %v44 = vld [vmem:[%s0 + $0x8] sm:$0xff]
    %v45 = vld [vmem:[%s0 + $0x10] sm:$0xff]
    %v46 = vld [vmem:[%s0 + $0x18] sm:$0xff]
    %v47 = vld [vmem:[%s0 + $0x20] sm:$0xff]
    %v48 = vld [vmem:[%s0 + $0x28] sm:$0xff]
    %v49 = vld [vmem:[%s0 + $0x30] sm:$0xff]
    %v50 = vld [vmem:[%s0 + $0x38] sm:$0xff]
    %v51 = vld [vmem:[%s0 + $0x40] sm:$0xff]
    %v52 = vld [vmem:[%s0 + $0x48] sm:$0xff]
    %v53 = vld [vmem:[%s0 + $0x50] sm:$0xff]
    %v54 = vld [vmem:[%s0 + $0x58] sm:$0xff]
    %v55 = vld [vmem:[%s0 + $0x60] sm:$0xff]
    %v56 = vld [vmem:[%s0 + $0x68] sm:$0xff]
    %v57 = vld [vmem:[%s0 + $0x70] sm:$0xff]
    %v58 = vld [vmem:[%s0 + $0x78] sm:$0xff]
    %v59 = vld [vmem:[%s1] sm:$0xff]
    %v60 = vld [vmem:[%s1 + $0x8] sm:$0xff]
    %v61 = vld [vmem:[%s1 + $0x10] sm:$0xff]
    %v62 = vld [vmem:[%s1 + $0x18] sm:$0xff]
    %v63 = vld [vmem:[%s1 + $0x20] sm:$0xff]
    %v64 = vld [vmem:[%s1 + $0x28] sm:$0xff]
    %v65 = vld [vmem:[%s1 + $0x30] sm:$0xff]
    %v66 = vld [vmem:[%s1 + $0x38] sm:$0xff]
    %v67 = vld [vmem:[%s1 + $0x40] sm:$0xff]
    %v68 = vld [vmem:[%s1 + $0x48] sm:$0xff]
    %v69 = vld [vmem:[%s1 + $0x50] sm:$0xff]
    %v70 = vld [vmem:[%s1 + $0x58] sm:$0xff]
    %v71 = vld [vmem:[%s1 + $0x60] sm:$0xff]
    %v72 = vld [vmem:[%s1 + $0x68] sm:$0xff]
    %v73 = vld [vmem:[%s1 + $0x70] sm:$0xff]
    %v74 = vld [vmem:[%s1 + $0x78] sm:$0xff]
    %vm75 = vcmask 130048
    %v77 = vsel %vm75, %v59, 0
    %v80 = vsel %vm75, %v60, 0
    %82 = vmatprep.subr.mxu0 0.0
    %83 = vmatpush1.msra.mxu0 %v43
    %84 = vmatprep.subr.mxu0 0.0
    %85 = vmatpush1.msra.mxu0 %v44
    %86 = vmatprep.subr.mxu0 0.0
    %87 = vmatpush1.msra.mxu0 0.0
    %88 = vmatprep.subr.mxu0 0.0
    %89 = vmatpush1.msra.mxu0 0.0
    %90 = vmatprep.subr.mxu0 0.0
    %91 = vmatpush1.msra.mxu0 0.0
    %92 = vmatprep.subr.mxu0 0.0
    %93 = vmatpush1.msra.mxu0 0.0
    %94 = vmatprep.subr.mxu0 0.0
    %95 = vmatpush1.msra.mxu0 0.0
    %96 = vmatprep.subr.mxu0 0.0
    %97 = vmatpush1.msra.mxu0 0.0
    %98 = vmatprep.subr.mxu0 0.0
    %99 = vmatpush1.msra.mxu0 0.0
    %100 = vmatprep.subr.mxu0 0.0
    %101 = vmatpush1.msra.mxu0 0.0
    %102 = vmatprep.subr.mxu0 0.0
    %103 = vmatpush1.msra.mxu0 0.0
    %104 = vmatprep.subr.mxu0 0.0
    %105 = vmatpush1.msra.mxu0 0.0
    %106 = vmatprep.subr.mxu0 0.0
    %107 = vmatpush1.msra.mxu0 0.0
    %108 = vmatprep.subr.mxu0 0.0
    %109 = vmatpush1.msra.mxu0 0.0
    %110 = vmatprep.subr.mxu0 0.0
    %111 = vmatpush1.msra.mxu0 0.0
    %112 = vmatprep.subr.mxu0 0.0
    %113 = vmatpush1.msra.mxu0 0.0
    %114 = vmatprep.subr.mxu0 0.0
    %115 = vmatpush1.msra.mxu0 0.0
    %116 = vmatprep.subr.mxu0 0.0
    %117 = vmatpush1.msra.mxu0 0.0
    %118 = vmatprep.subr.mxu0 0.0
    %119 = vmatpush1.msra.mxu0 0.0
    %120 = vmatprep.subr.mxu0 0.0
    %121 = vmatpush1.msra.mxu0 0.0
    %122 = vmatprep.subr.mxu0 0.0
    %123 = vmatpush1.msra.mxu0 0.0
    %124 = vmatprep.subr.mxu0 0.0
    %125 = vmatpush1.msra.mxu0 0.0
    %126 = vmatprep.subr.mxu0 0.0
    %127 = vmatpush1.msra.mxu0 0.0
    %128 = vmatprep.subr.mxu0 0.0
    %129 = vmatpush1.msra.mxu0 0.0
    %130 = vmatprep.subr.mxu0 0.0
    %131 = vmatpush1.msra.mxu0 0.0
    %132 = vmatprep.subr.mxu0 0.0
    %133 = vmatpush1.msra.mxu0 0.0
    %134 = vmatprep.subr.mxu0 0.0
    %135 = vmatpush1.msra.mxu0 0.0
    %136 = vmatprep.subr.mxu0 0.0
    %137 = vmatpush1.msra.mxu0 0.0
    %138 = vmatprep.subr.mxu0 0.0
    %139 = vmatpush1.msra.mxu0 0.0
    %140 = vmatprep.subr.mxu0 0.0
    %141 = vmatpush1.msra.mxu0 0.0
    %142 = vmatprep.subr.mxu0 0.0
    %143 = vmatpush1.msra.mxu0 0.0
    %144 = vmatprep.subr.mxu0 0.0
    %145 = vmatpush1.msra.mxu0 0.0
    %146 = vmatprep.mubr.f32.mxu0 0.0
    %147 = vmatmul.mubr.f32.gmra.mrb[0].mxu0 %v77
    %v148 = vpop.f32.mrb[0].mxu0
    %v149 = vadd.f32 0.0, %v148
    %v150 = vpop.f32.mrb[0].mxu0
    %151 = vmatprep.mubr.f32.mxu0 0.0
    %152 = vmatmul.mubr.f32.gmra.mrb[0].mxu0 %v80
    %v153 = vpop.f32.mrb[0].mxu0
    %v154 = vadd.f32 0.0, %v153
    %v155 = vpop.f32.mrb[0].mxu0
    %156 = vdwg.mxu0
    %v158 = vsel %vm75, %v61, 0
    %v161 = vsel %vm75, %v62, 0
    %163 = vmatprep.subr.mxu0 0.0
    %164 = vmatpush1.msra.mxu0 %v45
    %165 = vmatprep.subr.mxu0 0.0
    %166 = vmatpush1.msra.mxu0 %v46
    %167 = vmatprep.subr.mxu0 0.0
    %168 = vmatpush1.msra.mxu0 0.0
    %169 = vmatprep.subr.mxu0 0.0
    %170 = vmatpush1.msra.mxu0 0.0
    %171 = vmatprep.subr.mxu0 0.0
    %172 = vmatpush1.msra.mxu0 0.0
    %173 = vmatprep.subr.mxu0 0.0
    %174 = vmatpush1.msra.mxu0 0.0
    %175 = vmatprep.subr.mxu0 0.0
    %176 = vmatpush1.msra.mxu0 0.0
    %177 = vmatprep.subr.mxu0 0.0
    %178 = vmatpush1.msra.mxu0 0.0
    %179 = vmatprep.subr.mxu0 0.0
    %180 = vmatpush1.msra.mxu0 0.0
    %181 = vmatprep.subr.mxu0 0.0
    %182 = vmatpush1.msra.mxu0 0.0
    %183 = vmatprep.subr.mxu0 0.0
    %184 = vmatpush1.msra.mxu0 0.0
    %185 = vmatprep.subr.mxu0 0.0
    %186 = vmatpush1.msra.mxu0 0.0
    %187 = vmatprep.subr.mxu0 0.0
    %188 = vmatpush1.msra.mxu0 0.0
    %189 = vmatprep.subr.mxu0 0.0
    %190 = vmatpush1.msra.mxu0 0.0
    %191 = vmatprep.subr.mxu0 0.0
    %192 = vmatpush1.msra.mxu0 0.0
    %193 = vmatprep.subr.mxu0 0.0
    %194 = vmatpush1.msra.mxu0 0.0
    %195 = vmatprep.subr.mxu0 0.0
    %196 = vmatpush1.msra.mxu0 0.0
    %197 = vmatprep.subr.mxu0 0.0
    %198 = vmatpush1.msra.mxu0 0.0
    %199 = vmatprep.subr.mxu0 0.0
    %200 = vmatpush1.msra.mxu0 0.0
    %201 = vmatprep.subr.mxu0 0.0
    %202 = vmatpush1.msra.mxu0 0.0
    %203 = vmatprep.subr.mxu0 0.0
    %204 = vmatpush1.msra.mxu0 0.0
    %205 = vmatprep.subr.mxu0 0.0
    %206 = vmatpush1.msra.mxu0 0.0
    %207 = vmatprep.subr.mxu0 0.0
    %208 = vmatpush1.msra.mxu0 0.0
    %209 = vmatprep.subr.mxu0 0.0
    %210 = vmatpush1.msra.mxu0 0.0
    %211 = vmatprep.subr.mxu0 0.0
    %212 = vmatpush1.msra.mxu0 0.0
    %213 = vmatprep.subr.mxu0 0.0
    %214 = vmatpush1.msra.mxu0 0.0
    %215 = vmatprep.subr.mxu0 0.0
    %216 = vmatpush1.msra.mxu0 0.0
    %217 = vmatprep.subr.mxu0 0.0
    %218 = vmatpush1.msra.mxu0 0.0
    %219 = vmatprep.subr.mxu0 0.0
    %220 = vmatpush1.msra.mxu0 0.0
    %221 = vmatprep.subr.mxu0 0.0
    %222 = vmatpush1.msra.mxu0 0.0
    %223 = vmatprep.subr.mxu0 0.0
    %224 = vmatpush1.msra.mxu0 0.0
    %225 = vmatprep.subr.mxu0 0.0
    %226 = vmatpush1.msra.mxu0 0.0
    %227 = vmatprep.mubr.f32.mxu0 0.0
    %228 = vmatmul.mubr.f32.gmra.mrb[0].mxu0 %v158
    %v229 = vpop.f32.mrb[0].mxu0
    %v230 = vadd.f32 0.0, %v229
    %v231 = vpop.f32.mrb[0].mxu0
    %232 = vmatprep.mubr.f32.mxu0 0.0
    %233 = vmatmul.mubr.f32.gmra.mrb[0].mxu0 %v161
    %v234 = vpop.f32.mrb[0].mxu0
    %v235 = vadd.f32 0.0, %v234
    %v236 = vpop.f32.mrb[0].mxu0
    %237 = vdwg.mxu0
    %v239 = vsel %vm75, %v63, 0
    %v242 = vsel %vm75, %v64, 0
    %244 = vmatprep.subr.mxu0 0.0
    %245 = vmatpush1.msra.mxu0 %v47
    %246 = vmatprep.subr.mxu0 0.0
    %247 = vmatpush1.msra.mxu0 %v48
    %248 = vmatprep.subr.mxu0 0.0
    %249 = vmatpush1.msra.mxu0 0.0
    %250 = vmatprep.subr.mxu0 0.0
    %251 = vmatpush1.msra.mxu0 0.0
    %252 = vmatprep.subr.mxu0 0.0
    %253 = vmatpush1.msra.mxu0 0.0
    %254 = vmatprep.subr.mxu0 0.0
    %255 = vmatpush1.msra.mxu0 0.0
    %256 = vmatprep.subr.mxu0 0.0
    %257 = vmatpush1.msra.mxu0 0.0
    %258 = vmatprep.subr.mxu0 0.0
    %259 = vmatpush1.msra.mxu0 0.0
    %260 = vmatprep.subr.mxu0 0.0
    %261 = vmatpush1.msra.mxu0 0.0
    %262 = vmatprep.subr.mxu0 0.0
    %263 = vmatpush1.msra.mxu0 0.0
    %264 = vmatprep.subr.mxu0 0.0
    %265 = vmatpush1.msra.mxu0 0.0
    %266 = vmatprep.subr.mxu0 0.0
    %267 = vmatpush1.msra.mxu0 0.0
    %268 = vmatprep.subr.mxu0 0.0
    %269 = vmatpush1.msra.mxu0 0.0
    %270 = vmatprep.subr.mxu0 0.0
    %271 = vmatpush1.msra.mxu0 0.0
    %272 = vmatprep.subr.mxu0 0.0
    %273 = vmatpush1.msra.mxu0 0.0
    %274 = vmatprep.subr.mxu0 0.0
    %275 = vmatpush1.msra.mxu0 0.0
    %276 = vmatprep.subr.mxu0 0.0
    %277 = vmatpush1.msra.mxu0 0.0
    %278 = vmatprep.subr.mxu0 0.0
    %279 = vmatpush1.msra.mxu0 0.0
    %280 = vmatprep.subr.mxu0 0.0
    %281 = vmatpush1.msra.mxu0 0.0
    %282 = vmatprep.subr.mxu0 0.0
    %283 = vmatpush1.msra.mxu0 0.0
    %284 = vmatprep.subr.mxu0 0.0
    %285 = vmatpush1.msra.mxu0 0.0
    %286 = vmatprep.subr.mxu0 0.0
    %287 = vmatpush1.msra.mxu0 0.0
    %288 = vmatprep.subr.mxu0 0.0
    %289 = vmatpush1.msra.mxu0 0.0
    %290 = vmatprep.subr.mxu0 0.0
    %291 = vmatpush1.msra.mxu0 0.0
    %292 = vmatprep.subr.mxu0 0.0
    %293 = vmatpush1.msra.mxu0 0.0
    %294 = vmatprep.subr.mxu0 0.0
    %295 = vmatpush1.msra.mxu0 0.0
    %296 = vmatprep.subr.mxu0 0.0
    %297 = vmatpush1.msra.mxu0 0.0
    %298 = vmatprep.subr.mxu0 0.0
    %299 = vmatpush1.msra.mxu0 0.0
    %300 = vmatprep.subr.mxu0 0.0
    %301 = vmatpush1.msra.mxu0 0.0
    %302 = vmatprep.subr.mxu0 0.0
    %303 = vmatpush1.msra.mxu0 0.0
    %304 = vmatprep.subr.mxu0 0.0
    %305 = vmatpush1.msra.mxu0 0.0
    %306 = vmatprep.subr.mxu0 0.0
    %307 = vmatpush1.msra.mxu0 0.0
    %308 = vmatprep.mubr.f32.mxu0 0.0
    %309 = vmatmul.mubr.f32.gmra.mrb[0].mxu0 %v239
    %v310 = vpop.f32.mrb[0].mxu0
    %v311 = vadd.f32 0.0, %v310
    %v312 = vpop.f32.mrb[0].mxu0
    %313 = vmatprep.mubr.f32.mxu0 0.0
    %314 = vmatmul.mubr.f32.gmra.mrb[0].mxu0 %v242
    %v315 = vpop.f32.mrb[0].mxu0
    %v316 = vadd.f32 0.0, %v315
    %v317 = vpop.f32.mrb[0].mxu0
    %318 = vdwg.mxu0
    %v320 = vsel %vm75, %v65, 0
    %v323 = vsel %vm75, %v66, 0
    %325 = vmatprep.subr.mxu0 0.0
    %326 = vmatpush1.msra.mxu0 %v49
    %327 = vmatprep.subr.mxu0 0.0
    %328 = vmatpush1.msra.mxu0 %v50
    %329 = vmatprep.subr.mxu0 0.0
    %330 = vmatpush1.msra.mxu0 0.0
    %331 = vmatprep.subr.mxu0 0.0
    %332 = vmatpush1.msra.mxu0 0.0
    %333 = vmatprep.subr.mxu0 0.0
    %334 = vmatpush1.msra.mxu0 0.0
    %335 = vmatprep.subr.mxu0 0.0
    %336 = vmatpush1.msra.mxu0 0.0
    %337 = vmatprep.subr.mxu0 0.0
    %338 = vmatpush1.msra.mxu0 0.0
    %339 = vmatprep.subr.mxu0 0.0
    %340 = vmatpush1.msra.mxu0 0.0
    %341 = vmatprep.subr.mxu0 0.0
    %342 = vmatpush1.msra.mxu0 0.0
    %343 = vmatprep.subr.mxu0 0.0
    %344 = vmatpush1.msra.mxu0 0.0
    %345 = vmatprep.subr.mxu0 0.0
    %346 = vmatpush1.msra.mxu0 0.0
    %347 = vmatprep.subr.mxu0 0.0
    %348 = vmatpush1.msra.mxu0 0.0
    %349 = vmatprep.subr.mxu0 0.0
    %350 = vmatpush1.msra.mxu0 0.0
    %351 = vmatprep.subr.mxu0 0.0
    %352 = vmatpush1.msra.mxu0 0.0
    %353 = vmatprep.subr.mxu0 0.0
    %354 = vmatpush1.msra.mxu0 0.0
    %355 = vmatprep.subr.mxu0 0.0
    %356 = vmatpush1.msra.mxu0 0.0
    %357 = vmatprep.subr.mxu0 0.0
    %358 = vmatpush1.msra.mxu0 0.0
    %359 = vmatprep.subr.mxu0 0.0
    %360 = vmatpush1.msra.mxu0 0.0
    %361 = vmatprep.subr.mxu0 0.0
    %362 = vmatpush1.msra.mxu0 0.0
    %363 = vmatprep.subr.mxu0 0.0
    %364 = vmatpush1.msra.mxu0 0.0
    %365 = vmatprep.subr.mxu0 0.0
    %366 = vmatpush1.msra.mxu0 0.0
    %367 = vmatprep.subr.mxu0 0.0
    %368 = vmatpush1.msra.mxu0 0.0
    %369 = vmatprep.subr.mxu0 0.0
    %370 = vmatpush1.msra.mxu0 0.0
    %371 = vmatprep.subr.mxu0 0.0
    %372 = vmatpush1.msra.mxu0 0.0
    %373 = vmatprep.subr.mxu0 0.0
    %374 = vmatpush1.msra.mxu0 0.0
    %375 = vmatprep.subr.mxu0 0.0
    %376 = vmatpush1.msra.mxu0 0.0
    %377 = vmatprep.subr.mxu0 0.0
    %378 = vmatpush1.msra.mxu0 0.0
    %379 = vmatprep.subr.mxu0 0.0
    %380 = vmatpush1.msra.mxu0 0.0
    %381 = vmatprep.subr.mxu0 0.0
    %382 = vmatpush1.msra.mxu0 0.0
    %383 = vmatprep.subr.mxu0 0.0
    %384 = vmatpush1.msra.mxu0 0.0
    %385 = vmatprep.subr.mxu0 0.0
    %386 = vmatpush1.msra.mxu0 0.0
    %387 = vmatprep.subr.mxu0 0.0
    %388 = vmatpush1.msra.mxu0 0.0
    %389 = vmatprep.mubr.f32.mxu0 0.0
    %390 = vmatmul.mubr.f32.gmra.mrb[0].mxu0 %v320
    %v391 = vpop.f32.mrb[0].mxu0
    %v392 = vadd.f32 0.0, %v391
    %v393 = vpop.f32.mrb[0].mxu0
    %394 = vmatprep.mubr.f32.mxu0 0.0
    %395 = vmatmul.mubr.f32.gmra.mrb[0].mxu0 %v323
    %v396 = vpop.f32.mrb[0].mxu0
    %v397 = vadd.f32 0.0, %v396
    %v398 = vpop.f32.mrb[0].mxu0
    %399 = vdwg.mxu0
    %v401 = vsel %vm75, %v67, 0
    %v404 = vsel %vm75, %v68, 0
    %406 = vmatprep.subr.mxu0 0.0
    %407 = vmatpush1.msra.mxu0 %v51
    %408 = vmatprep.subr.mxu0 0.0
    %409 = vmatpush1.msra.mxu0 %v52
    %410 = vmatprep.subr.mxu0 0.0
    %411 = vmatpush1.msra.mxu0 0.0
    %412 = vmatprep.subr.mxu0 0.0
    %413 = vmatpush1.msra.mxu0 0.0
    %414 = vmatprep.subr.mxu0 0.0
    %415 = vmatpush1.msra.mxu0 0.0
    %416 = vmatprep.subr.mxu0 0.0
    %417 = vmatpush1.msra.mxu0 0.0
    %418 = vmatprep.subr.mxu0 0.0
    %419 = vmatpush1.msra.mxu0 0.0
    %420 = vmatprep.subr.mxu0 0.0
    %421 = vmatpush1.msra.mxu0 0.0
    %422 = vmatprep.subr.mxu0 0.0
    %423 = vmatpush1.msra.mxu0 0.0
    %424 = vmatprep.subr.mxu0 0.0
    %425 = vmatpush1.msra.mxu0 0.0
    %426 = vmatprep.subr.mxu0 0.0
    %427 = vmatpush1.msra.mxu0 0.0
    %428 = vmatprep.subr.mxu0 0.0
    %429 = vmatpush1.msra.mxu0 0.0
    %430 = vmatprep.subr.mxu0 0.0
    %431 = vmatpush1.msra.mxu0 0.0
    %432 = vmatprep.subr.mxu0 0.0
    %433 = vmatpush1.msra.mxu0 0.0
    %434 = vmatprep.subr.mxu0 0.0
    %435 = vmatpush1.msra.mxu0 0.0
    %436 = vmatprep.subr.mxu0 0.0
    %437 = vmatpush1.msra.mxu0 0.0
    %438 = vmatprep.subr.mxu0 0.0
    %439 = vmatpush1.msra.mxu0 0.0
    %440 = vmatprep.subr.mxu0 0.0
    %441 = vmatpush1.msra.mxu0 0.0
    %442 = vmatprep.subr.mxu0 0.0
    %443 = vmatpush1.msra.mxu0 0.0
    %444 = vmatprep.subr.mxu0 0.0
    %445 = vmatpush1.msra.mxu0 0.0
    %446 = vmatprep.subr.mxu0 0.0
    %447 = vmatpush1.msra.mxu0 0.0
    %448 = vmatprep.subr.mxu0 0.0
    %449 = vmatpush1.msra.mxu0 0.0
    %450 = vmatprep.subr.mxu0 0.0
    %451 = vmatpush1.msra.mxu0 0.0
    %452 = vmatprep.subr.mxu0 0.0
    %453 = vmatpush1.msra.mxu0 0.0
    %454 = vmatprep.subr.mxu0 0.0
    %455 = vmatpush1.msra.mxu0 0.0
    %456 = vmatprep.subr.mxu0 0.0
    %457 = vmatpush1.msra.mxu0 0.0
    %458 = vmatprep.subr.mxu0 0.0
    %459 = vmatpush1.msra.mxu0 0.0
    %460 = vmatprep.subr.mxu0 0.0
    %461 = vmatpush1.msra.mxu0 0.0
    %462 = vmatprep.subr.mxu0 0.0
    %463 = vmatpush1.msra.mxu0 0.0
    %464 = vmatprep.subr.mxu0 0.0
    %465 = vmatpush1.msra.mxu0 0.0
    %466 = vmatprep.subr.mxu0 0.0
    %467 = vmatpush1.msra.mxu0 0.0
    %468 = vmatprep.subr.mxu0 0.0
    %469 = vmatpush1.msra.mxu0 0.0
    %470 = vmatprep.mubr.f32.mxu0 0.0
    %471 = vmatmul.mubr.f32.gmra.mrb[0].mxu0 %v401
    %v472 = vpop.f32.mrb[0].mxu0
    %v473 = vadd.f32 0.0, %v472
    %v474 = vpop.f32.mrb[0].mxu0
    %475 = vmatprep.mubr.f32.mxu0 0.0
    %476 = vmatmul.mubr.f32.gmra.mrb[0].mxu0 %v404
    %v477 = vpop.f32.mrb[0].mxu0
    %v478 = vadd.f32 0.0, %v477
    %v479 = vpop.f32.mrb[0].mxu0
    %480 = vdwg.mxu0
    %v482 = vsel %vm75, %v69, 0
    %v485 = vsel %vm75, %v70, 0
    %487 = vmatprep.subr.mxu0 0.0
    %488 = vmatpush1.msra.mxu0 %v53
    %489 = vmatprep.subr.mxu0 0.0
    %490 = vmatpush1.msra.mxu0 %v54
    %491 = vmatprep.subr.mxu0 0.0
    %492 = vmatpush1.msra.mxu0 0.0
    %493 = vmatprep.subr.mxu0 0.0
    %494 = vmatpush1.msra.mxu0 0.0
    %495 = vmatprep.subr.mxu0 0.0
    %496 = vmatpush1.msra.mxu0 0.0
    %497 = vmatprep.subr.mxu0 0.0
    %498 = vmatpush1.msra.mxu0 0.0
    %499 = vmatprep.subr.mxu0 0.0
    %500 = vmatpush1.msra.mxu0 0.0
    %501 = vmatprep.subr.mxu0 0.0
    %502 = vmatpush1.msra.mxu0 0.0
    %503 = vmatprep.subr.mxu0 0.0
    %504 = vmatpush1.msra.mxu0 0.0
    %505 = vmatprep.subr.mxu0 0.0
    %506 = vmatpush1.msra.mxu0 0.0
    %507 = vmatprep.subr.mxu0 0.0
    %508 = vmatpush1.msra.mxu0 0.0
    %509 = vmatprep.subr.mxu0 0.0
    %510 = vmatpush1.msra.mxu0 0.0
    %511 = vmatprep.subr.mxu0 0.0
    %512 = vmatpush1.msra.mxu0 0.0
    %513 = vmatprep.subr.mxu0 0.0
    %514 = vmatpush1.msra.mxu0 0.0
    %515 = vmatprep.subr.mxu0 0.0
    %516 = vmatpush1.msra.mxu0 0.0
    %517 = vmatprep.subr.mxu0 0.0
    %518 = vmatpush1.msra.mxu0 0.0
    %519 = vmatprep.subr.mxu0 0.0
    %520 = vmatpush1.msra.mxu0 0.0
    %521 = vmatprep.subr.mxu0 0.0
    %522 = vmatpush1.msra.mxu0 0.0
    %523 = vmatprep.subr.mxu0 0.0
    %524 = vmatpush1.msra.mxu0 0.0
    %525 = vmatprep.subr.mxu0 0.0
    %526 = vmatpush1.msra.mxu0 0.0
    %527 = vmatprep.subr.mxu0 0.0
    %528 = vmatpush1.msra.mxu0 0.0
    %529 = vmatprep.subr.mxu0 0.0
    %530 = vmatpush1.msra.mxu0 0.0
    %531 = vmatprep.subr.mxu0 0.0
    %532 = vmatpush1.msra.mxu0 0.0
    %533 = vmatprep.subr.mxu0 0.0
    %534 = vmatpush1.msra.mxu0 0.0
    %535 = vmatprep.subr.mxu0 0.0
    %536 = vmatpush1.msra.mxu0 0.0
    %537 = vmatprep.subr.mxu0 0.0
    %538 = vmatpush1.msra.mxu0 0.0
    %539 = vmatprep.subr.mxu0 0.0
    %540 = vmatpush1.msra.mxu0 0.0
    %541 = vmatprep.subr.mxu0 0.0
    %542 = vmatpush1.msra.mxu0 0.0
    %543 = vmatprep.subr.mxu0 0.0
    %544 = vmatpush1.msra.mxu0 0.0
    %545 = vmatprep.subr.mxu0 0.0
    %546 = vmatpush1.msra.mxu0 0.0
    %547 = vmatprep.subr.mxu0 0.0
    %548 = vmatpush1.msra.mxu0 0.0
    %549 = vmatprep.subr.mxu0 0.0
    %550 = vmatpush1.msra.mxu0 0.0
    %551 = vmatprep.mubr.f32.mxu0 0.0
    %552 = vmatmul.mubr.f32.gmra.mrb[0].mxu0 %v482
    %v553 = vpop.f32.mrb[0].mxu0
    %v554 = vadd.f32 0.0, %v553
    %v555 = vpop.f32.mrb[0].mxu0
    %556 = vmatprep.mubr.f32.mxu0 0.0
    %557 = vmatmul.mubr.f32.gmra.mrb[0].mxu0 %v485
    %v558 = vpop.f32.mrb[0].mxu0
    %v559 = vadd.f32 0.0, %v558
    %v560 = vpop.f32.mrb[0].mxu0
    %561 = vdwg.mxu0
    %v563 = vsel %vm75, %v71, 0
    %v566 = vsel %vm75, %v72, 0
    %568 = vmatprep.subr.mxu0 0.0
    %569 = vmatpush1.msra.mxu0 %v55
    %570 = vmatprep.subr.mxu0 0.0
    %571 = vmatpush1.msra.mxu0 %v56
    %572 = vmatprep.subr.mxu0 0.0
    %573 = vmatpush1.msra.mxu0 0.0
    %574 = vmatprep.subr.mxu0 0.0
    %575 = vmatpush1.msra.mxu0 0.0
    %576 = vmatprep.subr.mxu0 0.0
    %577 = vmatpush1.msra.mxu0 0.0
    %578 = vmatprep.subr.mxu0 0.0
    %579 = vmatpush1.msra.mxu0 0.0
    %580 = vmatprep.subr.mxu0 0.0
    %581 = vmatpush1.msra.mxu0 0.0
    %582 = vmatprep.subr.mxu0 0.0
    %583 = vmatpush1.msra.mxu0 0.0
    %584 = vmatprep.subr.mxu0 0.0
    %585 = vmatpush1.msra.mxu0 0.0
    %586 = vmatprep.subr.mxu0 0.0
    %587 = vmatpush1.msra.mxu0 0.0
    %588 = vmatprep.subr.mxu0 0.0
    %589 = vmatpush1.msra.mxu0 0.0
    %590 = vmatprep.subr.mxu0 0.0
    %591 = vmatpush1.msra.mxu0 0.0
    %592 = vmatprep.subr.mxu0 0.0
    %593 = vmatpush1.msra.mxu0 0.0
    %594 = vmatprep.subr.mxu0 0.0
    %595 = vmatpush1.msra.mxu0 0.0
    %596 = vmatprep.subr.mxu0 0.0
    %597 = vmatpush1.msra.mxu0 0.0
    %598 = vmatprep.subr.mxu0 0.0
    %599 = vmatpush1.msra.mxu0 0.0
    %600 = vmatprep.subr.mxu0 0.0
    %601 = vmatpush1.msra.mxu0 0.0
    %602 = vmatprep.subr.mxu0 0.0
    %603 = vmatpush1.msra.mxu0 0.0
    %604 = vmatprep.subr.mxu0 0.0
    %605 = vmatpush1.msra.mxu0 0.0
    %606 = vmatprep.subr.mxu0 0.0
    %607 = vmatpush1.msra.mxu0 0.0
    %608 = vmatprep.subr.mxu0 0.0
    %609 = vmatpush1.msra.mxu0 0.0
    %610 = vmatprep.subr.mxu0 0.0
    %611 = vmatpush1.msra.mxu0 0.0
    %612 = vmatprep.subr.mxu0 0.0
    %613 = vmatpush1.msra.mxu0 0.0
    %614 = vmatprep.subr.mxu0 0.0
    %615 = vmatpush1.msra.mxu0 0.0
    %616 = vmatprep.subr.mxu0 0.0
    %617 = vmatpush1.msra.mxu0 0.0
    %618 = vmatprep.subr.mxu0 0.0
    %619 = vmatpush1.msra.mxu0 0.0
    %620 = vmatprep.subr.mxu0 0.0
    %621 = vmatpush1.msra.mxu0 0.0
    %622 = vmatprep.subr.mxu0 0.0
    %623 = vmatpush1.msra.mxu0 0.0
    %624 = vmatprep.subr.mxu0 0.0
    %625 = vmatpush1.msra.mxu0 0.0
    %626 = vmatprep.subr.mxu0 0.0
    %627 = vmatpush1.msra.mxu0 0.0
    %628 = vmatprep.subr.mxu0 0.0
    %629 = vmatpush1.msra.mxu0 0.0
    %630 = vmatprep.subr.mxu0 0.0
    %631 = vmatpush1.msra.mxu0 0.0
    %632 = vmatprep.mubr.f32.mxu0 0.0
    %633 = vmatmul.mubr.f32.gmra.mrb[0].mxu0 %v563
    %v634 = vpop.f32.mrb[0].mxu0
    %v635 = vadd.f32 0.0, %v634
    %v636 = vpop.f32.mrb[0].mxu0
    %637 = vmatprep.mubr.f32.mxu0 0.0
    %638 = vmatmul.mubr.f32.gmra.mrb[0].mxu0 %v566
    %v639 = vpop.f32.mrb[0].mxu0
    %v640 = vadd.f32 0.0, %v639
    %v641 = vpop.f32.mrb[0].mxu0
    %642 = vdwg.mxu0
    %v644 = vsel %vm75, %v73, 0
    %v647 = vsel %vm75, %v74, 0
    %649 = vmatprep.subr.mxu0 0.0
    %650 = vmatpush1.msra.mxu0 %v57
    %651 = vmatprep.subr.mxu0 0.0
    %652 = vmatpush1.msra.mxu0 %v58
    %653 = vmatprep.subr.mxu0 0.0
    %654 = vmatpush1.msra.mxu0 0.0
    %655 = vmatprep.subr.mxu0 0.0
    %656 = vmatpush1.msra.mxu0 0.0
    %657 = vmatprep.subr.mxu0 0.0
    %658 = vmatpush1.msra.mxu0 0.0
    %659 = vmatprep.subr.mxu0 0.0
    %660 = vmatpush1.msra.mxu0 0.0
    %661 = vmatprep.subr.mxu0 0.0
    %662 = vmatpush1.msra.mxu0 0.0
    %663 = vmatprep.subr.mxu0 0.0
    %664 = vmatpush1.msra.mxu0 0.0
    %665 = vmatprep.subr.mxu0 0.0
    %666 = vmatpush1.msra.mxu0 0.0
    %667 = vmatprep.subr.mxu0 0.0
    %668 = vmatpush1.msra.mxu0 0.0
    %669 = vmatprep.subr.mxu0 0.0
    %670 = vmatpush1.msra.mxu0 0.0
    %671 = vmatprep.subr.mxu0 0.0
    %672 = vmatpush1.msra.mxu0 0.0
    %673 = vmatprep.subr.mxu0 0.0
    %674 = vmatpush1.msra.mxu0 0.0
    %675 = vmatprep.subr.mxu0 0.0
    %676 = vmatpush1.msra.mxu0 0.0
    %677 = vmatprep.subr.mxu0 0.0
    %678 = vmatpush1.msra.mxu0 0.0
    %679 = vmatprep.subr.mxu0 0.0
    %680 = vmatpush1.msra.mxu0 0.0
    %681 = vmatprep.subr.mxu0 0.0
    %682 = vmatpush1.msra.mxu0 0.0
    %683 = vmatprep.subr.mxu0 0.0
    %684 = vmatpush1.msra.mxu0 0.0
    %685 = vmatprep.subr.mxu0 0.0
    %686 = vmatpush1.msra.mxu0 0.0
    %687 = vmatprep.subr.mxu0 0.0
    %688 = vmatpush1.msra.mxu0 0.0
    %689 = vmatprep.subr.mxu0 0.0
    %690 = vmatpush1.msra.mxu0 0.0
    %691 = vmatprep.subr.mxu0 0.0
    %692 = vmatpush1.msra.mxu0 0.0
    %693 = vmatprep.subr.mxu0 0.0
    %694 = vmatpush1.msra.mxu0 0.0
    %695 = vmatprep.subr.mxu0 0.0
    %696 = vmatpush1.msra.mxu0 0.0
    %697 = vmatprep.subr.mxu0 0.0
    %698 = vmatpush1.msra.mxu0 0.0
    %699 = vmatprep.subr.mxu0 0.0
    %700 = vmatpush1.msra.mxu0 0.0
    %701 = vmatprep.subr.mxu0 0.0
    %702 = vmatpush1.msra.mxu0 0.0
    %703 = vmatprep.subr.mxu0 0.0
    %704 = vmatpush1.msra.mxu0 0.0
    %705 = vmatprep.subr.mxu0 0.0
    %706 = vmatpush1.msra.mxu0 0.0
    %707 = vmatprep.subr.mxu0 0.0
    %708 = vmatpush1.msra.mxu0 0.0
    %709 = vmatprep.subr.mxu0 0.0
    %710 = vmatpush1.msra.mxu0 0.0
    %711 = vmatprep.subr.mxu0 0.0
    %712 = vmatpush1.msra.mxu0 0.0
    %713 = vmatprep.mubr.f32.mxu0 0.0
    %714 = vmatmul.mubr.f32.gmra.mrb[0].mxu0 %v644
    %v715 = vpop.f32.mrb[0].mxu0
    %v716 = vadd.f32 0.0, %v715
    %v717 = vpop.f32.mrb[0].mxu0
    %718 = vmatprep.mubr.f32.mxu0 0.0
    %719 = vmatmul.mubr.f32.gmra.mrb[0].mxu0 %v647
    %v720 = vpop.f32.mrb[0].mxu0
    %v721 = vadd.f32 0.0, %v720
    %v722 = vpop.f32.mrb[0].mxu0
    %723 = vdwg.mxu0
    %v724 = vld [vmem:[%s2] sm:$0xff]
    %v725 = vld [vmem:[%s3] sm:$0x1]
    %v727 = vlaneseq
    %v728 = vshrl.u32 %v727, 7
    %v729 = vsub.s32 0, %v728
    %v730 = vrot.slane %v725, %v729
    %vm732 = vcmask 64512
    %v734 = vsel %vm732, %v149, 0
    %v737 = vsel %vm732, %v154, 0
    %v740 = vsel %vm732, %v230, 0
    %v743 = vsel %vm732, %v235, 0
    %v746 = vsel %vm732, %v311, 0
    %v749 = vsel %vm732, %v316, 0
    %v752 = vsel %vm732, %v392, 0
    %v755 = vsel %vm732, %v397, 0
    %v758 = vsel %vm732, %v473, 0
    %v761 = vsel %vm732, %v478, 0
    %v764 = vsel %vm732, %v554, 0
    %v767 = vsel %vm732, %v559, 0
    %v770 = vsel %vm732, %v635, 0
    %v773 = vsel %vm732, %v640, 0
    %v776 = vsel %vm732, %v716, 0
    %v779 = vsel %vm732, %v721, 0
    %781 = vmatprep.subr.mxu0 0.0
    %782 = vmatpush1.msra.mxu0 %v724
    %783 = vmatprep.subr.mxu0 0.0
    %784 = vmatpush1.msra.mxu0 0.0
    %785 = vmatprep.subr.mxu0 0.0
    %786 = vmatpush1.msra.mxu0 0.0
    %787 = vmatprep.subr.mxu0 0.0
    %788 = vmatpush1.msra.mxu0 0.0
    %789 = vmatprep.subr.mxu0 0.0
    %790 = vmatpush1.msra.mxu0 0.0
    %791 = vmatprep.subr.mxu0 0.0
    %792 = vmatpush1.msra.mxu0 0.0
    %793 = vmatprep.subr.mxu0 0.0
    %794 = vmatpush1.msra.mxu0 0.0
    %795 = vmatprep.subr.mxu0 0.0
    %796 = vmatpush1.msra.mxu0 0.0
    %797 = vmatprep.subr.mxu0 0.0
    %798 = vmatpush1.msra.mxu0 0.0
    %799 = vmatprep.subr.mxu0 0.0
    %800 = vmatpush1.msra.mxu0 0.0
    %801 = vmatprep.subr.mxu0 0.0
    %802 = vmatpush1.msra.mxu0 0.0
    %803 = vmatprep.subr.mxu0 0.0
    %804 = vmatpush1.msra.mxu0 0.0
    %805 = vmatprep.subr.mxu0 0.0
    %806 = vmatpush1.msra.mxu0 0.0
    %807 = vmatprep.subr.mxu0 0.0
    %808 = vmatpush1.msra.mxu0 0.0
    %809 = vmatprep.subr.mxu0 0.0
    %810 = vmatpush1.msra.mxu0 0.0
    %811 = vmatprep.subr.mxu0 0.0
    %812 = vmatpush1.msra.mxu0 0.0
    %813 = vmatprep.subr.mxu0 0.0
    %814 = vmatpush1.msra.mxu0 0.0
    %815 = vmatprep.subr.mxu0 0.0
    %816 = vmatpush1.msra.mxu0 0.0
    %817 = vmatprep.subr.mxu0 0.0
    %818 = vmatpush1.msra.mxu0 0.0
    %819 = vmatprep.subr.mxu0 0.0
    %820 = vmatpush1.msra.mxu0 0.0
    %821 = vmatprep.subr.mxu0 0.0
    %822 = vmatpush1.msra.mxu0 0.0
    %823 = vmatprep.subr.mxu0 0.0
    %824 = vmatpush1.msra.mxu0 0.0
    %825 = vmatprep.subr.mxu0 0.0
    %826 = vmatpush1.msra.mxu0 0.0
    %827 = vmatprep.subr.mxu0 0.0
    %828 = vmatpush1.msra.mxu0 0.0
    %829 = vmatprep.subr.mxu0 0.0
    %830 = vmatpush1.msra.mxu0 0.0
    %831 = vmatprep.subr.mxu0 0.0
    %832 = vmatpush1.msra.mxu0 0.0
    %833 = vmatprep.subr.mxu0 0.0
    %834 = vmatpush1.msra.mxu0 0.0
    %835 = vmatprep.subr.mxu0 0.0
    %836 = vmatpush1.msra.mxu0 0.0
    %837 = vmatprep.subr.mxu0 0.0
    %838 = vmatpush1.msra.mxu0 0.0
    %839 = vmatprep.subr.mxu0 0.0
    %840 = vmatpush1.msra.mxu0 0.0
    %841 = vmatprep.subr.mxu0 0.0
    %842 = vmatpush1.msra.mxu0 0.0
    %843 = vmatprep.subr.mxu0 0.0
    %844 = vmatpush1.msra.mxu0 0.0
    %845 = vmatprep.mubr.f32.mxu0 0.0
    %846 = vmatmul.mubr.f32.gmra.mrb[0].mxu0 %v734
    %v847 = vpop.f32.mrb[0].mxu0
    %v848 = vadd.f32 %v730, %v847
    %v849 = vpop.f32.mrb[0].mxu0
    %850 = vmatprep.mubr.f32.mxu0 0.0
    %851 = vmatmul.mubr.f32.gmra.mrb[0].mxu0 %v737
    %v852 = vpop.f32.mrb[0].mxu0
    %v853 = vadd.f32 %v730, %v852
    %v854 = vpop.f32.mrb[0].mxu0
    %855 = vmatprep.mubr.f32.mxu0 0.0
    %856 = vmatmul.mubr.f32.gmra.mrb[0].mxu0 %v740
    %v857 = vpop.f32.mrb[0].mxu0
    %v858 = vadd.f32 %v730, %v857
    %v859 = vpop.f32.mrb[0].mxu0
    %860 = vmatprep.mubr.f32.mxu0 0.0
    %861 = vmatmul.mubr.f32.gmra.mrb[0].mxu0 %v743
    %v862 = vpop.f32.mrb[0].mxu0
    %v863 = vadd.f32 %v730, %v862
    %v864 = vpop.f32.mrb[0].mxu0
    %865 = vmatprep.mubr.f32.mxu0 0.0
    %866 = vmatmul.mubr.f32.gmra.mrb[0].mxu0 %v746
    %v867 = vpop.f32.mrb[0].mxu0
    %v868 = vadd.f32 %v730, %v867
    %v869 = vpop.f32.mrb[0].mxu0
    %870 = vmatprep.mubr.f32.mxu0 0.0
    %871 = vmatmul.mubr.f32.gmra.mrb[0].mxu0 %v749
    %v872 = vpop.f32.mrb[0].mxu0
    %v873 = vadd.f32 %v730, %v872
    %v874 = vpop.f32.mrb[0].mxu0
    %875 = vmatprep.mubr.f32.mxu0 0.0
    %876 = vmatmul.mubr.f32.gmra.mrb[0].mxu0 %v752
    %v877 = vpop.f32.mrb[0].mxu0
    %v878 = vadd.f32 %v730, %v877
    %v879 = vpop.f32.mrb[0].mxu0
    %880 = vmatprep.mubr.f32.mxu0 0.0
    %881 = vmatmul.mubr.f32.gmra.mrb[0].mxu0 %v755
    %v882 = vpop.f32.mrb[0].mxu0
    %v883 = vadd.f32 %v730, %v882
    %v884 = vpop.f32.mrb[0].mxu0
    %885 = vmatprep.mubr.f32.mxu0 0.0
    %886 = vmatmul.mubr.f32.gmra.mrb[0].mxu0 %v758
    %v887 = vpop.f32.mrb[0].mxu0
    %v888 = vadd.f32 %v730, %v887
    %v889 = vpop.f32.mrb[0].mxu0
    %890 = vmatprep.mubr.f32.mxu0 0.0
    %891 = vmatmul.mubr.f32.gmra.mrb[0].mxu0 %v761
    %v892 = vpop.f32.mrb[0].mxu0
    %v893 = vadd.f32 %v730, %v892
    %v894 = vpop.f32.mrb[0].mxu0
    %895 = vmatprep.mubr.f32.mxu0 0.0
    %896 = vmatmul.mubr.f32.gmra.mrb[0].mxu0 %v764
    %v897 = vpop.f32.mrb[0].mxu0
    %v898 = vadd.f32 %v730, %v897
    %v899 = vpop.f32.mrb[0].mxu0
    %900 = vmatprep.mubr.f32.mxu0 0.0
    %901 = vmatmul.mubr.f32.gmra.mrb[0].mxu0 %v767
    %v902 = vpop.f32.mrb[0].mxu0
    %v903 = vadd.f32 %v730, %v902
    %v904 = vpop.f32.mrb[0].mxu0
    %905 = vmatprep.mubr.f32.mxu0 0.0
    %906 = vmatmul.mubr.f32.gmra.mrb[0].mxu0 %v770
    %v907 = vpop.f32.mrb[0].mxu0
    %v908 = vadd.f32 %v730, %v907
    %v909 = vpop.f32.mrb[0].mxu0
    %910 = vmatprep.mubr.f32.mxu0 0.0
    %911 = vmatmul.mubr.f32.gmra.mrb[0].mxu0 %v773
    %v912 = vpop.f32.mrb[0].mxu0
    %v913 = vadd.f32 %v730, %v912
    %v914 = vpop.f32.mrb[0].mxu0
    %915 = vmatprep.mubr.f32.mxu0 0.0
    %916 = vmatmul.mubr.f32.gmra.mrb[0].mxu0 %v776
    %v917 = vpop.f32.mrb[0].mxu0
    %v918 = vadd.f32 %v730, %v917
    %v919 = vpop.f32.mrb[0].mxu0
    %920 = vmatprep.mubr.f32.mxu0 0.0
    %921 = vmatmul.mubr.f32.gmra.mrb[0].mxu0 %v779
    %v922 = vpop.f32.mrb[0].mxu0
    %v923 = vadd.f32 %v730, %v922
    %v924 = vpop.f32.mrb[0].mxu0
    %925 = vdwg.mxu0
    %v926 = vmax.f32 %v848, 0.0
    %v927 = vmax.f32 %v853, 0.0
    %v928 = vmax.f32 %v858, 0.0
    %v929 = vmax.f32 %v863, 0.0
    %v930 = vmax.f32 %v868, 0.0
    %v931 = vmax.f32 %v873, 0.0
    %v932 = vmax.f32 %v878, 0.0
    %v933 = vmax.f32 %v883, 0.0
    %v934 = vmax.f32 %v888, 0.0
    %v935 = vmax.f32 %v893, 0.0
    %v936 = vmax.f32 %v898, 0.0
    %v937 = vmax.f32 %v903, 0.0
    %v938 = vmax.f32 %v908, 0.0
    %v939 = vmax.f32 %v913, 0.0
    %v940 = vmax.f32 %v918, 0.0
    %v941 = vmax.f32 %v923, 0.0
    %942 = vmatprep.subr.mxu0 0.0
    %943 = vmatpush1.msra.mxu0 %v926
    %944 = vmatprep.subr.mxu0 0.0
    %945 = vmatpush1.msra.mxu0 %v927
    %946 = vmatprep.subr.mxu0 0.0
    %947 = vmatpush1.msra.mxu0 0.0
    %948 = vmatprep.subr.mxu0 0.0
    %949 = vmatpush1.msra.mxu0 0.0
    %950 = vmatprep.subr.mxu0 0.0
    %951 = vmatpush1.msra.mxu0 0.0
    %952 = vmatprep.subr.mxu0 0.0
    %953 = vmatpush1.msra.mxu0 0.0
    %954 = vmatprep.subr.mxu0 0.0
    %955 = vmatpush1.msra.mxu0 0.0
    %956 = vmatprep.subr.mxu0 0.0
    %957 = vmatpush1.msra.mxu0 0.0
    %958 = vmatprep.subr.mxu0 0.0
    %959 = vmatpush1.msra.mxu0 0.0
    %960 = vmatprep.subr.mxu0 0.0
    %961 = vmatpush1.msra.mxu0 0.0
    %962 = vmatprep.subr.mxu0 0.0
    %963 = vmatpush1.msra.mxu0 0.0
    %964 = vmatprep.subr.mxu0 0.0
    %965 = vmatpush1.msra.mxu0 0.0
    %966 = vmatprep.subr.mxu0 0.0
    %967 = vmatpush1.msra.mxu0 0.0
    %968 = vmatprep.subr.mxu0 0.0
    %969 = vmatpush1.msra.mxu0 0.0
    %970 = vmatprep.subr.mxu0 0.0
    %971 = vmatpush1.msra.mxu0 0.0
    %972 = vmatprep.subr.mxu0 0.0
    %973 = vmatpush1.msra.mxu0 0.0
    %974 = vmatprep.subr.mxu0 0.0
    %975 = vmatpush1.msra.mxu0 0.0
    %976 = vmatprep.subr.mxu0 0.0
    %977 = vmatpush1.msra.mxu0 0.0
    %978 = vmatprep.subr.mxu0 0.0
    %979 = vmatpush1.msra.mxu0 0.0
    %980 = vmatprep.subr.mxu0 0.0
    %981 = vmatpush1.msra.mxu0 0.0
    %982 = vmatprep.subr.mxu0 0.0
    %983 = vmatpush1.msra.mxu0 0.0
    %984 = vmatprep.subr.mxu0 0.0
    %985 = vmatpush1.msra.mxu0 0.0
    %986 = vmatprep.subr.mxu0 0.0
    %987 = vmatpush1.msra.mxu0 0.0
    %988 = vmatprep.subr.mxu0 0.0
    %989 = vmatpush1.msra.mxu0 0.0
    %990 = vmatprep.subr.mxu0 0.0
    %991 = vmatpush1.msra.mxu0 0.0
    %992 = vmatprep.subr.mxu0 0.0
    %993 = vmatpush1.msra.mxu0 0.0
    %994 = vmatprep.subr.mxu0 0.0
    %995 = vmatpush1.msra.mxu0 0.0
    %996 = vmatprep.subr.mxu0 0.0
    %997 = vmatpush1.msra.mxu0 0.0
    %998 = vmatprep.subr.mxu0 0.0
    %999 = vmatpush1.msra.mxu0 0.0
    %1000 = vmatprep.subr.mxu0 0.0
    %1001 = vmatpush1.msra.mxu0 0.0
    %1002 = vmatprep.subr.mxu0 0.0
    %1003 = vmatpush1.msra.mxu0 0.0
    %1004 = vmatprep.subr.mxu0 0.0
    %1005 = vmatpush1.msra.mxu0 0.0
    %1006 = vmatprep.mubr.f32.mxu0 0.0
    %1007 = vmatmul.mubr.f32.gmra.mrb[0].mxu0 %v77
    %v1008 = vpop.f32.mrb[0].mxu0
    %v1009 = vadd.f32 0.0, %v1008
    %v1010 = vpop.f32.mrb[0].mxu0
    %1011 = vmatprep.mubr.f32.mxu0 0.0
    %1012 = vmatmul.mubr.f32.gmra.mrb[0].mxu0 %v80
    %v1013 = vpop.f32.mrb[0].mxu0
    %v1014 = vadd.f32 0.0, %v1013
    %v1015 = vpop.f32.mrb[0].mxu0
    %1016 = vdwg.mxu0
    %1017 = vmatprep.subr.mxu0 0.0
    %1018 = vmatpush1.msra.mxu0 %v928
    %1019 = vmatprep.subr.mxu0 0.0
    %1020 = vmatpush1.msra.mxu0 %v929
    %1021 = vmatprep.subr.mxu0 0.0
    %1022 = vmatpush1.msra.mxu0 0.0
    %1023 = vmatprep.subr.mxu0 0.0
    %1024 = vmatpush1.msra.mxu0 0.0
    %1025 = vmatprep.subr.mxu0 0.0
    %1026 = vmatpush1.msra.mxu0 0.0
    %1027 = vmatprep.subr.mxu0 0.0
    %1028 = vmatpush1.msra.mxu0 0.0
    %1029 = vmatprep.subr.mxu0 0.0
    %1030 = vmatpush1.msra.mxu0 0.0
    %1031 = vmatprep.subr.mxu0 0.0
    %1032 = vmatpush1.msra.mxu0 0.0
    %1033 = vmatprep.subr.mxu0 0.0
    %1034 = vmatpush1.msra.mxu0 0.0
    %1035 = vmatprep.subr.mxu0 0.0
    %1036 = vmatpush1.msra.mxu0 0.0
    %1037 = vmatprep.subr.mxu0 0.0
    %1038 = vmatpush1.msra.mxu0 0.0
    %1039 = vmatprep.subr.mxu0 0.0
    %1040 = vmatpush1.msra.mxu0 0.0
    %1041 = vmatprep.subr.mxu0 0.0
    %1042 = vmatpush1.msra.mxu0 0.0
    %1043 = vmatprep.subr.mxu0 0.0
    %1044 = vmatpush1.msra.mxu0 0.0
    %1045 = vmatprep.subr.mxu0 0.0
    %1046 = vmatpush1.msra.mxu0 0.0
    %1047 = vmatprep.subr.mxu0 0.0
    %1048 = vmatpush1.msra.mxu0 0.0
    %1049 = vmatprep.subr.mxu0 0.0
    %1050 = vmatpush1.msra.mxu0 0.0
    %1051 = vmatprep.subr.mxu0 0.0
    %1052 = vmatpush1.msra.mxu0 0.0
    %1053 = vmatprep.subr.mxu0 0.0
    %1054 = vmatpush1.msra.mxu0 0.0
    %1055 = vmatprep.subr.mxu0 0.0
    %1056 = vmatpush1.msra.mxu0 0.0
    %1057 = vmatprep.subr.mxu0 0.0
    %1058 = vmatpush1.msra.mxu0 0.0
    %1059 = vmatprep.subr.mxu0 0.0
    %1060 = vmatpush1.msra.mxu0 0.0
    %1061 = vmatprep.subr.mxu0 0.0
    %1062 = vmatpush1.msra.mxu0 0.0
    %1063 = vmatprep.subr.mxu0 0.0
    %1064 = vmatpush1.msra.mxu0 0.0
    %1065 = vmatprep.subr.mxu0 0.0
    %1066 = vmatpush1.msra.mxu0 0.0
    %1067 = vmatprep.subr.mxu0 0.0
    %1068 = vmatpush1.msra.mxu0 0.0
    %1069 = vmatprep.subr.mxu0 0.0
    %1070 = vmatpush1.msra.mxu0 0.0
    %1071 = vmatprep.subr.mxu0 0.0
    %1072 = vmatpush1.msra.mxu0 0.0
    %1073 = vmatprep.subr.mxu0 0.0
    %1074 = vmatpush1.msra.mxu0 0.0
    %1075 = vmatprep.subr.mxu0 0.0
    %1076 = vmatpush1.msra.mxu0 0.0
    %1077 = vmatprep.subr.mxu0 0.0
    %1078 = vmatpush1.msra.mxu0 0.0
    %1079 = vmatprep.subr.mxu0 0.0
    %1080 = vmatpush1.msra.mxu0 0.0
    %1081 = vmatprep.mubr.f32.mxu0 0.0
    %1082 = vmatmul.mubr.f32.gmra.mrb[0].mxu0 %v158
    %v1083 = vpop.f32.mrb[0].mxu0
    %v1084 = vadd.f32 0.0, %v1083
    %v1085 = vpop.f32.mrb[0].mxu0
    %1086 = vmatprep.mubr.f32.mxu0 0.0
    %1087 = vmatmul.mubr.f32.gmra.mrb[0].mxu0 %v161
    %v1088 = vpop.f32.mrb[0].mxu0
    %v1089 = vadd.f32 0.0, %v1088
    %v1090 = vpop.f32.mrb[0].mxu0
    %1091 = vdwg.mxu0
    %1092 = vmatprep.subr.mxu0 0.0
    %1093 = vmatpush1.msra.mxu0 %v930
    %1094 = vmatprep.subr.mxu0 0.0
    %1095 = vmatpush1.msra.mxu0 %v931
    %1096 = vmatprep.subr.mxu0 0.0
    %1097 = vmatpush1.msra.mxu0 0.0
    %1098 = vmatprep.subr.mxu0 0.0
    %1099 = vmatpush1.msra.mxu0 0.0
    %1100 = vmatprep.subr.mxu0 0.0
    %1101 = vmatpush1.msra.mxu0 0.0
    %1102 = vmatprep.subr.mxu0 0.0
    %1103 = vmatpush1.msra.mxu0 0.0
    %1104 = vmatprep.subr.mxu0 0.0
    %1105 = vmatpush1.msra.mxu0 0.0
    %1106 = vmatprep.subr.mxu0 0.0
    %1107 = vmatpush1.msra.mxu0 0.0
    %1108 = vmatprep.subr.mxu0 0.0
    %1109 = vmatpush1.msra.mxu0 0.0
    %1110 = vmatprep.subr.mxu0 0.0
    %1111 = vmatpush1.msra.mxu0 0.0
    %1112 = vmatprep.subr.mxu0 0.0
    %1113 = vmatpush1.msra.mxu0 0.0
    %1114 = vmatprep.subr.mxu0 0.0
    %1115 = vmatpush1.msra.mxu0 0.0
    %1116 = vmatprep.subr.mxu0 0.0
    %1117 = vmatpush1.msra.mxu0 0.0
    %1118 = vmatprep.subr.mxu0 0.0
    %1119 = vmatpush1.msra.mxu0 0.0
    %1120 = vmatprep.subr.mxu0 0.0
    %1121 = vmatpush1.msra.mxu0 0.0
    %1122 = vmatprep.subr.mxu0 0.0
    %1123 = vmatpush1.msra.mxu0 0.0
    %1124 = vmatprep.subr.mxu0 0.0
    %1125 = vmatpush1.msra.mxu0 0.0
    %1126 = vmatprep.subr.mxu0 0.0
    %1127 = vmatpush1.msra.mxu0 0.0
    %1128 = vmatprep.subr.mxu0 0.0
    %1129 = vmatpush1.msra.mxu0 0.0
    %1130 = vmatprep.subr.mxu0 0.0
    %1131 = vmatpush1.msra.mxu0 0.0
    %1132 = vmatprep.subr.mxu0 0.0
    %1133 = vmatpush1.msra.mxu0 0.0
    %1134 = vmatprep.subr.mxu0 0.0
    %1135 = vmatpush1.msra.mxu0 0.0
    %1136 = vmatprep.subr.mxu0 0.0
    %1137 = vmatpush1.msra.mxu0 0.0
    %1138 = vmatprep.subr.mxu0 0.0
    %1139 = vmatpush1.msra.mxu0 0.0
    %1140 = vmatprep.subr.mxu0 0.0
    %1141 = vmatpush1.msra.mxu0 0.0
    %1142 = vmatprep.subr.mxu0 0.0
    %1143 = vmatpush1.msra.mxu0 0.0
    %1144 = vmatprep.subr.mxu0 0.0
    %1145 = vmatpush1.msra.mxu0 0.0
    %1146 = vmatprep.subr.mxu0 0.0
    %1147 = vmatpush1.msra.mxu0 0.0
    %1148 = vmatprep.subr.mxu0 0.0
    %1149 = vmatpush1.msra.mxu0 0.0
    %1150 = vmatprep.subr.mxu0 0.0
    %1151 = vmatpush1.msra.mxu0 0.0
    %1152 = vmatprep.subr.mxu0 0.0
    %1153 = vmatpush1.msra.mxu0 0.0
    %1154 = vmatprep.subr.mxu0 0.0
    %1155 = vmatpush1.msra.mxu0 0.0
    %1156 = vmatprep.mubr.f32.mxu0 0.0
    %1157 = vmatmul.mubr.f32.gmra.mrb[0].mxu0 %v239
    %v1158 = vpop.f32.mrb[0].mxu0
    %v1159 = vadd.f32 0.0, %v1158
    %v1160 = vpop.f32.mrb[0].mxu0
    %1161 = vmatprep.mubr.f32.mxu0 0.0
    %1162 = vmatmul.mubr.f32.gmra.mrb[0].mxu0 %v242
    %v1163 = vpop.f32.mrb[0].mxu0
    %v1164 = vadd.f32 0.0, %v1163
    %v1165 = vpop.f32.mrb[0].mxu0
    %1166 = vdwg.mxu0
    %1167 = vmatprep.subr.mxu0 0.0
    %1168 = vmatpush1.msra.mxu0 %v932
    %1169 = vmatprep.subr.mxu0 0.0
    %1170 = vmatpush1.msra.mxu0 %v933
    %1171 = vmatprep.subr.mxu0 0.0
    %1172 = vmatpush1.msra.mxu0 0.0
    %1173 = vmatprep.subr.mxu0 0.0
    %1174 = vmatpush1.msra.mxu0 0.0
    %1175 = vmatprep.subr.mxu0 0.0
    %1176 = vmatpush1.msra.mxu0 0.0
    %1177 = vmatprep.subr.mxu0 0.0
    %1178 = vmatpush1.msra.mxu0 0.0
    %1179 = vmatprep.subr.mxu0 0.0
    %1180 = vmatpush1.msra.mxu0 0.0
    %1181 = vmatprep.subr.mxu0 0.0
    %1182 = vmatpush1.msra.mxu0 0.0
    %1183 = vmatprep.subr.mxu0 0.0
    %1184 = vmatpush1.msra.mxu0 0.0
    %1185 = vmatprep.subr.mxu0 0.0
    %1186 = vmatpush1.msra.mxu0 0.0
    %1187 = vmatprep.subr.mxu0 0.0
    %1188 = vmatpush1.msra.mxu0 0.0
    %1189 = vmatprep.subr.mxu0 0.0
    %1190 = vmatpush1.msra.mxu0 0.0
    %1191 = vmatprep.subr.mxu0 0.0
    %1192 = vmatpush1.msra.mxu0 0.0
    %1193 = vmatprep.subr.mxu0 0.0
    %1194 = vmatpush1.msra.mxu0 0.0
    %1195 = vmatprep.subr.mxu0 0.0
    %1196 = vmatpush1.msra.mxu0 0.0
    %1197 = vmatprep.subr.mxu0 0.0
    %1198 = vmatpush1.msra.mxu0 0.0
    %1199 = vmatprep.subr.mxu0 0.0
    %1200 = vmatpush1.msra.mxu0 0.0
    %1201 = vmatprep.subr.mxu0 0.0
    %1202 = vmatpush1.msra.mxu0 0.0
    %1203 = vmatprep.subr.mxu0 0.0
    %1204 = vmatpush1.msra.mxu0 0.0
    %1205 = vmatprep.subr.mxu0 0.0
    %1206 = vmatpush1.msra.mxu0 0.0
    %1207 = vmatprep.subr.mxu0 0.0
    %1208 = vmatpush1.msra.mxu0 0.0
    %1209 = vmatprep.subr.mxu0 0.0
    %1210 = vmatpush1.msra.mxu0 0.0
    %1211 = vmatprep.subr.mxu0 0.0
    %1212 = vmatpush1.msra.mxu0 0.0
    %1213 = vmatprep.subr.mxu0 0.0
    %1214 = vmatpush1.msra.mxu0 0.0
    %1215 = vmatprep.subr.mxu0 0.0
    %1216 = vmatpush1.msra.mxu0 0.0
    %1217 = vmatprep.subr.mxu0 0.0
    %1218 = vmatpush1.msra.mxu0 0.0
    %1219 = vmatprep.subr.mxu0 0.0
    %1220 = vmatpush1.msra.mxu0 0.0
    %1221 = vmatprep.subr.mxu0 0.0
    %1222 = vmatpush1.msra.mxu0 0.0
    %1223 = vmatprep.subr.mxu0 0.0
    %1224 = vmatpush1.msra.mxu0 0.0
    %1225 = vmatprep.subr.mxu0 0.0
    %1226 = vmatpush1.msra.mxu0 0.0
    %1227 = vmatprep.subr.mxu0 0.0
    %1228 = vmatpush1.msra.mxu0 0.0
    %1229 = vmatprep.subr.mxu0 0.0
    %1230 = vmatpush1.msra.mxu0 0.0
    %1231 = vmatprep.mubr.f32.mxu0 0.0
    %1232 = vmatmul.mubr.f32.gmra.mrb[0].mxu0 %v320
    %v1233 = vpop.f32.mrb[0].mxu0
    %v1234 = vadd.f32 0.0, %v1233
    %v1235 = vpop.f32.mrb[0].mxu0
    %1236 = vmatprep.mubr.f32.mxu0 0.0
    %1237 = vmatmul.mubr.f32.gmra.mrb[0].mxu0 %v323
    %v1238 = vpop.f32.mrb[0].mxu0
    %v1239 = vadd.f32 0.0, %v1238
    %v1240 = vpop.f32.mrb[0].mxu0
    %1241 = vdwg.mxu0
    %1242 = vmatprep.subr.mxu0 0.0
    %1243 = vmatpush1.msra.mxu0 %v934
    %1244 = vmatprep.subr.mxu0 0.0
    %1245 = vmatpush1.msra.mxu0 %v935
    %1246 = vmatprep.subr.mxu0 0.0
    %1247 = vmatpush1.msra.mxu0 0.0
    %1248 = vmatprep.subr.mxu0 0.0
    %1249 = vmatpush1.msra.mxu0 0.0
    %1250 = vmatprep.subr.mxu0 0.0
    %1251 = vmatpush1.msra.mxu0 0.0
    %1252 = vmatprep.subr.mxu0 0.0
    %1253 = vmatpush1.msra.mxu0 0.0
    %1254 = vmatprep.subr.mxu0 0.0
    %1255 = vmatpush1.msra.mxu0 0.0
    %1256 = vmatprep.subr.mxu0 0.0
    %1257 = vmatpush1.msra.mxu0 0.0
    %1258 = vmatprep.subr.mxu0 0.0
    %1259 = vmatpush1.msra.mxu0 0.0
    %1260 = vmatprep.subr.mxu0 0.0
    %1261 = vmatpush1.msra.mxu0 0.0
    %1262 = vmatprep.subr.mxu0 0.0
    %1263 = vmatpush1.msra.mxu0 0.0
    %1264 = vmatprep.subr.mxu0 0.0
    %1265 = vmatpush1.msra.mxu0 0.0
    %1266 = vmatprep.subr.mxu0 0.0
    %1267 = vmatpush1.msra.mxu0 0.0
    %1268 = vmatprep.subr.mxu0 0.0
    %1269 = vmatpush1.msra.mxu0 0.0
    %1270 = vmatprep.subr.mxu0 0.0
    %1271 = vmatpush1.msra.mxu0 0.0
    %1272 = vmatprep.subr.mxu0 0.0
    %1273 = vmatpush1.msra.mxu0 0.0
    %1274 = vmatprep.subr.mxu0 0.0
    %1275 = vmatpush1.msra.mxu0 0.0
    %1276 = vmatprep.subr.mxu0 0.0
    %1277 = vmatpush1.msra.mxu0 0.0
    %1278 = vmatprep.subr.mxu0 0.0
    %1279 = vmatpush1.msra.mxu0 0.0
    %1280 = vmatprep.subr.mxu0 0.0
    %1281 = vmatpush1.msra.mxu0 0.0
    %1282 = vmatprep.subr.mxu0 0.0
    %1283 = vmatpush1.msra.mxu0 0.0
    %1284 = vmatprep.subr.mxu0 0.0
    %1285 = vmatpush1.msra.mxu0 0.0
    %1286 = vmatprep.subr.mxu0 0.0
    %1287 = vmatpush1.msra.mxu0 0.0
    %1288 = vmatprep.subr.mxu0 0.0
    %1289 = vmatpush1.msra.mxu0 0.0
    %1290 = vmatprep.subr.mxu0 0.0
    %1291 = vmatpush1.msra.mxu0 0.0
    %1292 = vmatprep.subr.mxu0 0.0
    %1293 = vmatpush1.msra.mxu0 0.0
    %1294 = vmatprep.subr.mxu0 0.0
    %1295 = vmatpush1.msra.mxu0 0.0
    %1296 = vmatprep.subr.mxu0 0.0
    %1297 = vmatpush1.msra.mxu0 0.0
    %1298 = vmatprep.subr.mxu0 0.0
    %1299 = vmatpush1.msra.mxu0 0.0
    %1300 = vmatprep.subr.mxu0 0.0
    %1301 = vmatpush1.msra.mxu0 0.0
    %1302 = vmatprep.subr.mxu0 0.0
    %1303 = vmatpush1.msra.mxu0 0.0
    %1304 = vmatprep.subr.mxu0 0.0
    %1305 = vmatpush1.msra.mxu0 0.0
    %1306 = vmatprep.mubr.f32.mxu0 0.0
    %1307 = vmatmul.mubr.f32.gmra.mrb[0].mxu0 %v401
    %v1308 = vpop.f32.mrb[0].mxu0
    %v1309 = vadd.f32 0.0, %v1308
    %v1310 = vpop.f32.mrb[0].mxu0
    %1311 = vmatprep.mubr.f32.mxu0 0.0
    %1312 = vmatmul.mubr.f32.gmra.mrb[0].mxu0 %v404
    %v1313 = vpop.f32.mrb[0].mxu0
    %v1314 = vadd.f32 0.0, %v1313
    %v1315 = vpop.f32.mrb[0].mxu0
    %1316 = vdwg.mxu0
    %1317 = vmatprep.subr.mxu0 0.0
    %1318 = vmatpush1.msra.mxu0 %v936
    %1319 = vmatprep.subr.mxu0 0.0
    %1320 = vmatpush1.msra.mxu0 %v937
    %1321 = vmatprep.subr.mxu0 0.0
    %1322 = vmatpush1.msra.mxu0 0.0
    %1323 = vmatprep.subr.mxu0 0.0
    %1324 = vmatpush1.msra.mxu0 0.0
    %1325 = vmatprep.subr.mxu0 0.0
    %1326 = vmatpush1.msra.mxu0 0.0
    %1327 = vmatprep.subr.mxu0 0.0
    %1328 = vmatpush1.msra.mxu0 0.0
    %1329 = vmatprep.subr.mxu0 0.0
    %1330 = vmatpush1.msra.mxu0 0.0
    %1331 = vmatprep.subr.mxu0 0.0
    %1332 = vmatpush1.msra.mxu0 0.0
    %1333 = vmatprep.subr.mxu0 0.0
    %1334 = vmatpush1.msra.mxu0 0.0
    %1335 = vmatprep.subr.mxu0 0.0
    %1336 = vmatpush1.msra.mxu0 0.0
    %1337 = vmatprep.subr.mxu0 0.0
    %1338 = vmatpush1.msra.mxu0 0.0
    %1339 = vmatprep.subr.mxu0 0.0
    %1340 = vmatpush1.msra.mxu0 0.0
    %1341 = vmatprep.subr.mxu0 0.0
    %1342 = vmatpush1.msra.mxu0 0.0
    %1343 = vmatprep.subr.mxu0 0.0
    %1344 = vmatpush1.msra.mxu0 0.0
    %1345 = vmatprep.subr.mxu0 0.0
    %1346 = vmatpush1.msra.mxu0 0.0
    %1347 = vmatprep.subr.mxu0 0.0
    %1348 = vmatpush1.msra.mxu0 0.0
    %1349 = vmatprep.subr.mxu0 0.0
    %1350 = vmatpush1.msra.mxu0 0.0
    %1351 = vmatprep.subr.mxu0 0.0
    %1352 = vmatpush1.msra.mxu0 0.0
    %1353 = vmatprep.subr.mxu0 0.0
    %1354 = vmatpush1.msra.mxu0 0.0
    %1355 = vmatprep.subr.mxu0 0.0
    %1356 = vmatpush1.msra.mxu0 0.0
    %1357 = vmatprep.subr.mxu0 0.0
    %1358 = vmatpush1.msra.mxu0 0.0
    %1359 = vmatprep.subr.mxu0 0.0
    %1360 = vmatpush1.msra.mxu0 0.0
    %1361 = vmatprep.subr.mxu0 0.0
    %1362 = vmatpush1.msra.mxu0 0.0
    %1363 = vmatprep.subr.mxu0 0.0
    %1364 = vmatpush1.msra.mxu0 0.0
    %1365 = vmatprep.subr.mxu0 0.0
    %1366 = vmatpush1.msra.mxu0 0.0
    %1367 = vmatprep.subr.mxu0 0.0
    %1368 = vmatpush1.msra.mxu0 0.0
    %1369 = vmatprep.subr.mxu0 0.0
    %1370 = vmatpush1.msra.mxu0 0.0
    %1371 = vmatprep.subr.mxu0 0.0
    %1372 = vmatpush1.msra.mxu0 0.0
    %1373 = vmatprep.subr.mxu0 0.0
    %1374 = vmatpush1.msra.mxu0 0.0
    %1375 = vmatprep.subr.mxu0 0.0
    %1376 = vmatpush1.msra.mxu0 0.0
    %1377 = vmatprep.subr.mxu0 0.0
    %1378 = vmatpush1.msra.mxu0 0.0
    %1379 = vmatprep.subr.mxu0 0.0
    %1380 = vmatpush1.msra.mxu0 0.0
    %1381 = vmatprep.mubr.f32.mxu0 0.0
    %1382 = vmatmul.mubr.f32.gmra.mrb[0].mxu0 %v482
    %v1383 = vpop.f32.mrb[0].mxu0
    %v1384 = vadd.f32 0.0, %v1383
    %v1385 = vpop.f32.mrb[0].mxu0
    %1386 = vmatprep.mubr.f32.mxu0 0.0
    %1387 = vmatmul.mubr.f32.gmra.mrb[0].mxu0 %v485
    %v1388 = vpop.f32.mrb[0].mxu0
    %v1389 = vadd.f32 0.0, %v1388
    %v1390 = vpop.f32.mrb[0].mxu0
    %1391 = vdwg.mxu0
    %1392 = vmatprep.subr.mxu0 0.0
    %1393 = vmatpush1.msra.mxu0 %v938
    %1394 = vmatprep.subr.mxu0 0.0
    %1395 = vmatpush1.msra.mxu0 %v939
    %1396 = vmatprep.subr.mxu0 0.0
    %1397 = vmatpush1.msra.mxu0 0.0
    %1398 = vmatprep.subr.mxu0 0.0
    %1399 = vmatpush1.msra.mxu0 0.0
    %1400 = vmatprep.subr.mxu0 0.0
    %1401 = vmatpush1.msra.mxu0 0.0
    %1402 = vmatprep.subr.mxu0 0.0
    %1403 = vmatpush1.msra.mxu0 0.0
    %1404 = vmatprep.subr.mxu0 0.0
    %1405 = vmatpush1.msra.mxu0 0.0
    %1406 = vmatprep.subr.mxu0 0.0
    %1407 = vmatpush1.msra.mxu0 0.0
    %1408 = vmatprep.subr.mxu0 0.0
    %1409 = vmatpush1.msra.mxu0 0.0
    %1410 = vmatprep.subr.mxu0 0.0
    %1411 = vmatpush1.msra.mxu0 0.0
    %1412 = vmatprep.subr.mxu0 0.0
    %1413 = vmatpush1.msra.mxu0 0.0
    %1414 = vmatprep.subr.mxu0 0.0
    %1415 = vmatpush1.msra.mxu0 0.0
    %1416 = vmatprep.subr.mxu0 0.0
    %1417 = vmatpush1.msra.mxu0 0.0
    %1418 = vmatprep.subr.mxu0 0.0
    %1419 = vmatpush1.msra.mxu0 0.0
    %1420 = vmatprep.subr.mxu0 0.0
    %1421 = vmatpush1.msra.mxu0 0.0
    %1422 = vmatprep.subr.mxu0 0.0
    %1423 = vmatpush1.msra.mxu0 0.0
    %1424 = vmatprep.subr.mxu0 0.0
    %1425 = vmatpush1.msra.mxu0 0.0
    %1426 = vmatprep.subr.mxu0 0.0
    %1427 = vmatpush1.msra.mxu0 0.0
    %1428 = vmatprep.subr.mxu0 0.0
    %1429 = vmatpush1.msra.mxu0 0.0
    %1430 = vmatprep.subr.mxu0 0.0
    %1431 = vmatpush1.msra.mxu0 0.0
    %1432 = vmatprep.subr.mxu0 0.0
    %1433 = vmatpush1.msra.mxu0 0.0
    %1434 = vmatprep.subr.mxu0 0.0
    %1435 = vmatpush1.msra.mxu0 0.0
    %1436 = vmatprep.subr.mxu0 0.0
    %1437 = vmatpush1.msra.mxu0 0.0
    %1438 = vmatprep.subr.mxu0 0.0
    %1439 = vmatpush1.msra.mxu0 0.0
    %1440 = vmatprep.subr.mxu0 0.0
    %1441 = vmatpush1.msra.mxu0 0.0
    %1442 = vmatprep.subr.mxu0 0.0
    %1443 = vmatpush1.msra.mxu0 0.0
    %1444 = vmatprep.subr.mxu0 0.0
    %1445 = vmatpush1.msra.mxu0 0.0
    %1446 = vmatprep.subr.mxu0 0.0
    %1447 = vmatpush1.msra.mxu0 0.0
    %1448 = vmatprep.subr.mxu0 0.0
    %1449 = vmatpush1.msra.mxu0 0.0
    %1450 = vmatprep.subr.mxu0 0.0
    %1451 = vmatpush1.msra.mxu0 0.0
    %1452 = vmatprep.subr.mxu0 0.0
    %1453 = vmatpush1.msra.mxu0 0.0
    %1454 = vmatprep.subr.mxu0 0.0
    %1455 = vmatpush1.msra.mxu0 0.0
    %1456 = vmatprep.mubr.f32.mxu0 0.0
    %1457 = vmatmul.mubr.f32.gmra.mrb[0].mxu0 %v563
    %v1458 = vpop.f32.mrb[0].mxu0
    %v1459 = vadd.f32 0.0, %v1458
    %v1460 = vpop.f32.mrb[0].mxu0
    %1461 = vmatprep.mubr.f32.mxu0 0.0
    %1462 = vmatmul.mubr.f32.gmra.mrb[0].mxu0 %v566
    %v1463 = vpop.f32.mrb[0].mxu0
    %v1464 = vadd.f32 0.0, %v1463
    %v1465 = vpop.f32.mrb[0].mxu0
    %1466 = vdwg.mxu0
    %1467 = vmatprep.subr.mxu0 0.0
    %1468 = vmatpush1.msra.mxu0 %v940
    %1469 = vmatprep.subr.mxu0 0.0
    %1470 = vmatpush1.msra.mxu0 %v941
    %1471 = vmatprep.subr.mxu0 0.0
    %1472 = vmatpush1.msra.mxu0 0.0
    %1473 = vmatprep.subr.mxu0 0.0
    %1474 = vmatpush1.msra.mxu0 0.0
    %1475 = vmatprep.subr.mxu0 0.0
    %1476 = vmatpush1.msra.mxu0 0.0
    %1477 = vmatprep.subr.mxu0 0.0
    %1478 = vmatpush1.msra.mxu0 0.0
    %1479 = vmatprep.subr.mxu0 0.0
    %1480 = vmatpush1.msra.mxu0 0.0
    %1481 = vmatprep.subr.mxu0 0.0
    %1482 = vmatpush1.msra.mxu0 0.0
    %1483 = vmatprep.subr.mxu0 0.0
    %1484 = vmatpush1.msra.mxu0 0.0
    %1485 = vmatprep.subr.mxu0 0.0
    %1486 = vmatpush1.msra.mxu0 0.0
    %1487 = vmatprep.subr.mxu0 0.0
    %1488 = vmatpush1.msra.mxu0 0.0
    %1489 = vmatprep.subr.mxu0 0.0
    %1490 = vmatpush1.msra.mxu0 0.0
    %1491 = vmatprep.subr.mxu0 0.0
    %1492 = vmatpush1.msra.mxu0 0.0
    %1493 = vmatprep.subr.mxu0 0.0
    %1494 = vmatpush1.msra.mxu0 0.0
    %1495 = vmatprep.subr.mxu0 0.0
    %1496 = vmatpush1.msra.mxu0 0.0
    %1497 = vmatprep.subr.mxu0 0.0
    %1498 = vmatpush1.msra.mxu0 0.0
    %1499 = vmatprep.subr.mxu0 0.0
    %1500 = vmatpush1.msra.mxu0 0.0
    %1501 = vmatprep.subr.mxu0 0.0
    %1502 = vmatpush1.msra.mxu0 0.0
    %1503 = vmatprep.subr.mxu0 0.0
    %1504 = vmatpush1.msra.mxu0 0.0
    %1505 = vmatprep.subr.mxu0 0.0
    %1506 = vmatpush1.msra.mxu0 0.0
    %1507 = vmatprep.subr.mxu0 0.0
    %1508 = vmatpush1.msra.mxu0 0.0
    %1509 = vmatprep.subr.mxu0 0.0
    %1510 = vmatpush1.msra.mxu0 0.0
    %1511 = vmatprep.subr.mxu0 0.0
    %1512 = vmatpush1.msra.mxu0 0.0
    %1513 = vmatprep.subr.mxu0 0.0
    %1514 = vmatpush1.msra.mxu0 0.0
    %1515 = vmatprep.subr.mxu0 0.0
    %1516 = vmatpush1.msra.mxu0 0.0
    %1517 = vmatprep.subr.mxu0 0.0
    %1518 = vmatpush1.msra.mxu0 0.0
    %1519 = vmatprep.subr.mxu0 0.0
    %1520 = vmatpush1.msra.mxu0 0.0
    %1521 = vmatprep.subr.mxu0 0.0
    %1522 = vmatpush1.msra.mxu0 0.0
    %1523 = vmatprep.subr.mxu0 0.0
    %1524 = vmatpush1.msra.mxu0 0.0
    %1525 = vmatprep.subr.mxu0 0.0
    %1526 = vmatpush1.msra.mxu0 0.0
    %1527 = vmatprep.subr.mxu0 0.0
    %1528 = vmatpush1.msra.mxu0 0.0
    %1529 = vmatprep.subr.mxu0 0.0
    %1530 = vmatpush1.msra.mxu0 0.0
    %1531 = vmatprep.mubr.f32.mxu0 0.0
    %1532 = vmatmul.mubr.f32.gmra.mrb[0].mxu0 %v644
    %v1533 = vpop.f32.mrb[0].mxu0
    %v1534 = vadd.f32 0.0, %v1533
    %v1535 = vpop.f32.mrb[0].mxu0
    %1536 = vmatprep.mubr.f32.mxu0 0.0
    %1537 = vmatmul.mubr.f32.gmra.mrb[0].mxu0 %v647
    %v1538 = vpop.f32.mrb[0].mxu0
    %v1539 = vadd.f32 0.0, %v1538
    %v1540 = vpop.f32.mrb[0].mxu0
    %1541 = vdwg.mxu0
    %v1542 = vld [vmem:[%s4] sm:$0xff]
    %v1543 = vld [vmem:[%s4 + $0x8] sm:$0xff]
    %v1544 = vld [vmem:[%s4 + $0x10] sm:$0xff]
    %v1545 = vld [vmem:[%s4 + $0x18] sm:$0xff]
    %v1546 = vld [vmem:[%s5] sm:$0x1]
    %v1548 = vlaneseq
    %v1549 = vshrl.u32 %v1548, 7
    %v1550 = vsub.s32 0, %v1549
    %v1551 = vrot.slane %v1546, %v1550
    %vm1553 = vcmask 261120
    %v1555 = vsel %vm1553, %v1009, 0
    %v1558 = vsel %vm1553, %v1014, 0
    %v1561 = vsel %vm1553, %v1084, 0
    %v1564 = vsel %vm1553, %v1089, 0
    %v1567 = vsel %vm1553, %v1159, 0
    %v1570 = vsel %vm1553, %v1164, 0
    %v1573 = vsel %vm1553, %v1234, 0
    %v1576 = vsel %vm1553, %v1239, 0
    %v1579 = vsel %vm1553, %v1309, 0
    %v1582 = vsel %vm1553, %v1314, 0
    %v1585 = vsel %vm1553, %v1384, 0
    %v1588 = vsel %vm1553, %v1389, 0
    %v1591 = vsel %vm1553, %v1459, 0
    %v1594 = vsel %vm1553, %v1464, 0
    %v1597 = vsel %vm1553, %v1534, 0
    %v1600 = vsel %vm1553, %v1539, 0
    %1602 = vmatprep.subr.mxu0 0.0
    %1603 = vmatpush1.msra.mxu0 %v1542
    %1604 = vmatprep.subr.mxu0 0.0
    %1605 = vmatpush1.msra.mxu0 %v1543
    %1606 = vmatprep.subr.mxu0 0.0
    %1607 = vmatpush1.msra.mxu0 %v1544
    %1608 = vmatprep.subr.mxu0 0.0
    %1609 = vmatpush1.msra.mxu0 %v1545
    %1610 = vmatprep.subr.mxu0 0.0
    %1611 = vmatpush1.msra.mxu0 0.0
    %1612 = vmatprep.subr.mxu0 0.0
    %1613 = vmatpush1.msra.mxu0 0.0
    %1614 = vmatprep.subr.mxu0 0.0
    %1615 = vmatpush1.msra.mxu0 0.0
    %1616 = vmatprep.subr.mxu0 0.0
    %1617 = vmatpush1.msra.mxu0 0.0
    %1618 = vmatprep.subr.mxu0 0.0
    %1619 = vmatpush1.msra.mxu0 0.0
    %1620 = vmatprep.subr.mxu0 0.0
    %1621 = vmatpush1.msra.mxu0 0.0
    %1622 = vmatprep.subr.mxu0 0.0
    %1623 = vmatpush1.msra.mxu0 0.0
    %1624 = vmatprep.subr.mxu0 0.0
    %1625 = vmatpush1.msra.mxu0 0.0
    %1626 = vmatprep.subr.mxu0 0.0
    %1627 = vmatpush1.msra.mxu0 0.0
    %1628 = vmatprep.subr.mxu0 0.0
    %1629 = vmatpush1.msra.mxu0 0.0
    %1630 = vmatprep.subr.mxu0 0.0
    %1631 = vmatpush1.msra.mxu0 0.0
    %1632 = vmatprep.subr.mxu0 0.0
    %1633 = vmatpush1.msra.mxu0 0.0
    %1634 = vmatprep.subr.mxu0 0.0
    %1635 = vmatpush1.msra.mxu0 0.0
    %1636 = vmatprep.subr.mxu0 0.0
    %1637 = vmatpush1.msra.mxu0 0.0
    %1638 = vmatprep.subr.mxu0 0.0
    %1639 = vmatpush1.msra.mxu0 0.0
    %1640 = vmatprep.subr.mxu0 0.0
    %1641 = vmatpush1.msra.mxu0 0.0
    %1642 = vmatprep.subr.mxu0 0.0
    %1643 = vmatpush1.msra.mxu0 0.0
    %1644 = vmatprep.subr.mxu0 0.0
    %1645 = vmatpush1.msra.mxu0 0.0
    %1646 = vmatprep.subr.mxu0 0.0
    %1647 = vmatpush1.msra.mxu0 0.0
    %1648 = vmatprep.subr.mxu0 0.0
    %1649 = vmatpush1.msra.mxu0 0.0
    %1650 = vmatprep.subr.mxu0 0.0
    %1651 = vmatpush1.msra.mxu0 0.0
    %1652 = vmatprep.subr.mxu0 0.0
    %1653 = vmatpush1.msra.mxu0 0.0
    %1654 = vmatprep.subr.mxu0 0.0
    %1655 = vmatpush1.msra.mxu0 0.0
    %1656 = vmatprep.subr.mxu0 0.0
    %1657 = vmatpush1.msra.mxu0 0.0
    %1658 = vmatprep.subr.mxu0 0.0
    %1659 = vmatpush1.msra.mxu0 0.0
    %1660 = vmatprep.subr.mxu0 0.0
    %1661 = vmatpush1.msra.mxu0 0.0
    %1662 = vmatprep.subr.mxu0 0.0
    %1663 = vmatpush1.msra.mxu0 0.0
    %1664 = vmatprep.subr.mxu0 0.0
    %1665 = vmatpush1.msra.mxu0 0.0
    %1666 = vmatprep.mubr.f32.mxu0 0.0
    %1667 = vmatmul.mubr.f32.gmra.mrb[0].mxu0 %v1555
    %v1668 = vpop.f32.mrb[0].mxu0
    %v1669 = vadd.f32 %v1551, %v1668
    %v1670 = vpop.f32.mrb[0].mxu0
    %1671 = vmatprep.mubr.f32.mxu0 0.0
    %1672 = vmatmul.mubr.f32.gmra.mrb[0].mxu0 %v1558
    %v1673 = vpop.f32.mrb[0].mxu0
    %v1674 = vadd.f32 %v1551, %v1673
    %v1675 = vpop.f32.mrb[0].mxu0
    %1676 = vmatprep.mubr.f32.mxu0 0.0
    %1677 = vmatmul.mubr.f32.gmra.mrb[0].mxu0 %v1561
    %v1678 = vpop.f32.mrb[0].mxu0
    %v1679 = vadd.f32 %v1551, %v1678
    %v1680 = vpop.f32.mrb[0].mxu0
    %1681 = vmatprep.mubr.f32.mxu0 0.0
    %1682 = vmatmul.mubr.f32.gmra.mrb[0].mxu0 %v1564
    %v1683 = vpop.f32.mrb[0].mxu0
    %v1684 = vadd.f32 %v1551, %v1683
    %v1685 = vpop.f32.mrb[0].mxu0
    %1686 = vmatprep.mubr.f32.mxu0 0.0
    %1687 = vmatmul.mubr.f32.gmra.mrb[0].mxu0 %v1567
    %v1688 = vpop.f32.mrb[0].mxu0
    %v1689 = vadd.f32 %v1551, %v1688
    %v1690 = vpop.f32.mrb[0].mxu0
    %1691 = vmatprep.mubr.f32.mxu0 0.0
    %1692 = vmatmul.mubr.f32.gmra.mrb[0].mxu0 %v1570
    %v1693 = vpop.f32.mrb[0].mxu0
    %v1694 = vadd.f32 %v1551, %v1693
    %v1695 = vpop.f32.mrb[0].mxu0
    %1696 = vmatprep.mubr.f32.mxu0 0.0
    %1697 = vmatmul.mubr.f32.gmra.mrb[0].mxu0 %v1573
    %v1698 = vpop.f32.mrb[0].mxu0
    %v1699 = vadd.f32 %v1551, %v1698
    %v1700 = vpop.f32.mrb[0].mxu0
    %1701 = vmatprep.mubr.f32.mxu0 0.0
    %1702 = vmatmul.mubr.f32.gmra.mrb[0].mxu0 %v1576
    %v1703 = vpop.f32.mrb[0].mxu0
    %v1704 = vadd.f32 %v1551, %v1703
    %v1705 = vpop.f32.mrb[0].mxu0
    %1706 = vmatprep.mubr.f32.mxu0 0.0
    %1707 = vmatmul.mubr.f32.gmra.mrb[0].mxu0 %v1579
    %v1708 = vpop.f32.mrb[0].mxu0
    %v1709 = vadd.f32 %v1551, %v1708
    %v1710 = vpop.f32.mrb[0].mxu0
    %1711 = vmatprep.mubr.f32.mxu0 0.0
    %1712 = vmatmul.mubr.f32.gmra.mrb[0].mxu0 %v1582
    %v1713 = vpop.f32.mrb[0].mxu0
    %v1714 = vadd.f32 %v1551, %v1713
    %v1715 = vpop.f32.mrb[0].mxu0
    %1716 = vmatprep.mubr.f32.mxu0 0.0
    %1717 = vmatmul.mubr.f32.gmra.mrb[0].mxu0 %v1585
    %v1718 = vpop.f32.mrb[0].mxu0
    %v1719 = vadd.f32 %v1551, %v1718
    %v1720 = vpop.f32.mrb[0].mxu0
    %1721 = vmatprep.mubr.f32.mxu0 0.0
    %1722 = vmatmul.mubr.f32.gmra.mrb[0].mxu0 %v1588
    %v1723 = vpop.f32.mrb[0].mxu0
    %v1724 = vadd.f32 %v1551, %v1723
    %v1725 = vpop.f32.mrb[0].mxu0
    %1726 = vmatprep.mubr.f32.mxu0 0.0
    %1727 = vmatmul.mubr.f32.gmra.mrb[0].mxu0 %v1591
    %v1728 = vpop.f32.mrb[0].mxu0
    %v1729 = vadd.f32 %v1551, %v1728
    %v1730 = vpop.f32.mrb[0].mxu0
    %1731 = vmatprep.mubr.f32.mxu0 0.0
    %1732 = vmatmul.mubr.f32.gmra.mrb[0].mxu0 %v1594
    %v1733 = vpop.f32.mrb[0].mxu0
    %v1734 = vadd.f32 %v1551, %v1733
    %v1735 = vpop.f32.mrb[0].mxu0
    %1736 = vmatprep.mubr.f32.mxu0 0.0
    %1737 = vmatmul.mubr.f32.gmra.mrb[0].mxu0 %v1597
    %v1738 = vpop.f32.mrb[0].mxu0
    %v1739 = vadd.f32 %v1551, %v1738
    %v1740 = vpop.f32.mrb[0].mxu0
    %1741 = vmatprep.mubr.f32.mxu0 0.0
    %1742 = vmatmul.mubr.f32.gmra.mrb[0].mxu0 %v1600
    %v1743 = vpop.f32.mrb[0].mxu0
    %v1744 = vadd.f32 %v1551, %v1743
    %v1745 = vpop.f32.mrb[0].mxu0
    %1746 = vdwg.mxu0
    %v1747 = vmax.f32 %v1669, 0.0
    %v1748 = vmax.f32 %v1674, 0.0
    %v1749 = vmax.f32 %v1679, 0.0
    %v1750 = vmax.f32 %v1684, 0.0
    %v1751 = vmax.f32 %v1689, 0.0
    %v1752 = vmax.f32 %v1694, 0.0
    %v1753 = vmax.f32 %v1699, 0.0
    %v1754 = vmax.f32 %v1704, 0.0
    %v1755 = vmax.f32 %v1709, 0.0
    %v1756 = vmax.f32 %v1714, 0.0
    %v1757 = vmax.f32 %v1719, 0.0
    %v1758 = vmax.f32 %v1724, 0.0
    %v1759 = vmax.f32 %v1729, 0.0
    %v1760 = vmax.f32 %v1734, 0.0
    %v1761 = vmax.f32 %v1739, 0.0
    %v1762 = vmax.f32 %v1744, 0.0
    %v1763 = vld [vmem:[%s6] sm:$0x1]
    %v1765 = vlaneseq
    %v1766 = vshrl.u32 %v1765, 7
    %v1767 = vsub.s32 0, %v1766
    %v1768 = vrot.slane %v1763, %v1767
    %v1770 = vmul.f32 %v1747, %v1768
    %v1771 = vmul.f32 %v1748, %v1768
    %v1772 = vmul.f32 %v1749, %v1768
    %v1773 = vmul.f32 %v1750, %v1768
    %v1774 = vmul.f32 %v1751, %v1768
    %v1775 = vmul.f32 %v1752, %v1768
    %v1776 = vmul.f32 %v1753, %v1768
    %v1777 = vmul.f32 %v1754, %v1768
    %v1778 = vmul.f32 %v1755, %v1768
    %v1779 = vmul.f32 %v1756, %v1768
    %v1780 = vmul.f32 %v1757, %v1768
    %v1781 = vmul.f32 %v1758, %v1768
    %v1782 = vmul.f32 %v1759, %v1768
    %v1783 = vmul.f32 %v1760, %v1768
    %v1784 = vmul.f32 %v1761, %v1768
    %v1785 = vmul.f32 %v1762, %v1768
    %v1786 = vsel %vm1553, %v1770, 0.0
    %1787 = vadd.xlane.f32.xlu0 %v1786
    %v1788 = vpop.xlane.xlu0 %1787
    %v1789 = vsel %vm1553, %v1771, 0.0
    %1790 = vadd.xlane.f32.xlu0 %v1789
    %v1791 = vpop.xlane.xlu0 %1790
    %v1792 = vsel %vm1553, %v1772, 0.0
    %1793 = vadd.xlane.f32.xlu0 %v1792
    %v1794 = vpop.xlane.xlu0 %1793
    %v1795 = vsel %vm1553, %v1773, 0.0
    %1796 = vadd.xlane.f32.xlu0 %v1795
    %v1797 = vpop.xlane.xlu0 %1796
    %v1798 = vsel %vm1553, %v1774, 0.0
    %1799 = vadd.xlane.f32.xlu0 %v1798
    %v1800 = vpop.xlane.xlu0 %1799
    %v1801 = vsel %vm1553, %v1775, 0.0
    %1802 = vadd.xlane.f32.xlu0 %v1801
    %v1803 = vpop.xlane.xlu0 %1802
    %v1804 = vsel %vm1553, %v1776, 0.0
    %1805 = vadd.xlane.f32.xlu0 %v1804
    %v1806 = vpop.xlane.xlu0 %1805
    %v1807 = vsel %vm1553, %v1777, 0.0
    %1808 = vadd.xlane.f32.xlu0 %v1807
    %v1809 = vpop.xlane.xlu0 %1808
    %v1810 = vsel %vm1553, %v1778, 0.0
    %1811 = vadd.xlane.f32.xlu0 %v1810
    %v1812 = vpop.xlane.xlu0 %1811
    %v1813 = vsel %vm1553, %v1779, 0.0
    %1814 = vadd.xlane.f32.xlu0 %v1813
    %v1815 = vpop.xlane.xlu0 %1814
    %v1816 = vsel %vm1553, %v1780, 0.0
    %1817 = vadd.xlane.f32.xlu0 %v1816
    %v1818 = vpop.xlane.xlu0 %1817
    %v1819 = vsel %vm1553, %v1781, 0.0
    %1820 = vadd.xlane.f32.xlu0 %v1819
    %v1821 = vpop.xlane.xlu0 %1820
    %v1822 = vsel %vm1553, %v1782, 0.0
    %1823 = vadd.xlane.f32.xlu0 %v1822
    %v1824 = vpop.xlane.xlu0 %1823
    %v1825 = vsel %vm1553, %v1783, 0.0
    %1826 = vadd.xlane.f32.xlu0 %v1825
    %v1827 = vpop.xlane.xlu0 %1826
    %v1828 = vsel %vm1553, %v1784, 0.0
    %1829 = vadd.xlane.f32.xlu0 %v1828
    %v1830 = vpop.xlane.xlu0 %1829
    %v1831 = vsel %vm1553, %v1785, 0.0
    %1832 = vadd.xlane.f32.xlu0 %v1831
    %v1833 = vpop.xlane.xlu0 %1832
    %v1850 = vlaneseq
    %v1851 = vand.u32 %v1850, 127
    %v1852 = vlaneseq
    %v1853 = vshrl.u32 %v1852, 7
    %v1854 = vsub.s32 %v1851, %v1853
    %v1855 = vrot.slane %v1788, %v1854
    %v1856 = vadd.s32 %v1851, 4294967288
    %v1857 = vlaneseq
    %v1858 = vshrl.u32 %v1857, 7
    %v1859 = vsub.s32 %v1856, %v1858
    %v1860 = vrot.slane %v1791, %v1859
    %vm1861 = vcmask 130112
    %v1862 = vsel %vm1861, %v1860, %v1855
    %v1863 = vlaneseq
    %v1864 = vshrl.u32 %v1863, 7
    %v1865 = vsub.s32 %v1851, %v1864
    %v1866 = vrot.slane %v1794, %v1865
    %v1867 = vlaneseq
    %v1868 = vshrl.u32 %v1867, 7
    %v1869 = vsub.s32 %v1856, %v1868
    %v1870 = vrot.slane %v1797, %v1869
    %v1871 = vsel %vm1861, %v1870, %v1866
    %v1872 = vlaneseq
    %v1873 = vshrl.u32 %v1872, 7
    %v1874 = vsub.s32 %v1851, %v1873
    %v1875 = vrot.slane %v1800, %v1874
    %v1876 = vlaneseq
    %v1877 = vshrl.u32 %v1876, 7
    %v1878 = vsub.s32 %v1856, %v1877
    %v1879 = vrot.slane %v1803, %v1878
    %v1880 = vsel %vm1861, %v1879, %v1875
    %v1881 = vlaneseq
    %v1882 = vshrl.u32 %v1881, 7
    %v1883 = vsub.s32 %v1851, %v1882
    %v1884 = vrot.slane %v1806, %v1883
    %v1885 = vlaneseq
    %v1886 = vshrl.u32 %v1885, 7
    %v1887 = vsub.s32 %v1856, %v1886
    %v1888 = vrot.slane %v1809, %v1887
    %v1889 = vsel %vm1861, %v1888, %v1884
    %v1890 = vlaneseq
    %v1891 = vshrl.u32 %v1890, 7
    %v1892 = vsub.s32 %v1851, %v1891
    %v1893 = vrot.slane %v1812, %v1892
    %v1894 = vlaneseq
    %v1895 = vshrl.u32 %v1894, 7
    %v1896 = vsub.s32 %v1856, %v1895
    %v1897 = vrot.slane %v1815, %v1896
    %v1898 = vsel %vm1861, %v1897, %v1893
    %v1899 = vlaneseq
    %v1900 = vshrl.u32 %v1899, 7
    %v1901 = vsub.s32 %v1851, %v1900
    %v1902 = vrot.slane %v1818, %v1901
    %v1903 = vlaneseq
    %v1904 = vshrl.u32 %v1903, 7
    %v1905 = vsub.s32 %v1856, %v1904
    %v1906 = vrot.slane %v1821, %v1905
    %v1907 = vsel %vm1861, %v1906, %v1902
    %v1908 = vlaneseq
    %v1909 = vshrl.u32 %v1908, 7
    %v1910 = vsub.s32 %v1851, %v1909
    %v1911 = vrot.slane %v1824, %v1910
    %v1912 = vlaneseq
    %v1913 = vshrl.u32 %v1912, 7
    %v1914 = vsub.s32 %v1856, %v1913
    %v1915 = vrot.slane %v1827, %v1914
    %v1916 = vsel %vm1861, %v1915, %v1911
    %v1917 = vlaneseq
    %v1918 = vshrl.u32 %v1917, 7
    %v1919 = vsub.s32 %v1851, %v1918
    %v1920 = vrot.slane %v1830, %v1919
    %v1921 = vlaneseq
    %v1922 = vshrl.u32 %v1921, 7
    %v1923 = vsub.s32 %v1856, %v1922
    %v1924 = vrot.slane %v1833, %v1923
    %v1925 = vsel %vm1861, %v1924, %v1920
    %vm1926 = vcmask 1041409
    %v1927 = vsel %vm1926, %v1871, %v1862
    %vm1928 = vcmask 1042434
    %v1929 = vsel %vm1928, %v1880, %v1927
    %vm1930 = vcmask 1043459
    %v1931 = vsel %vm1930, %v1889, %v1929
    %vm1932 = vcmask 1044484
    %v1933 = vsel %vm1932, %v1898, %v1931
    %vm1934 = vcmask 1045509
    %v1935 = vsel %vm1934, %v1907, %v1933
    %vm1936 = vcmask 1046534
    %v1937 = vsel %vm1936, %v1916, %v1935
    %vm1938 = vcmask 1047559
    %v1939 = vsel %vm1938, %v1925, %v1937
    %v1941 = vsel %vm75, %v1939, -inf
    %1942 = vmax.xlane.f32.xlu0 %v1941
    %v1943 = vpop.xlane.xlu0 %1942
    %v1945 = vlaneseq
    %v1946 = vshrl.u32 %v1945, 7
    %v1947 = vsub.s32 0, %v1946
    %v1948 = vrot.slane %v1943, %v1947
    %v1949 = vlaneseq
    %v1950 = vshrl.u32 %v1949, 7
    %v1951 = vsub.s32 1, %v1950
    %v1952 = vrot.slane %v1943, %v1951
    %v1953 = vlaneseq
    %v1954 = vshrl.u32 %v1953, 7
    %v1955 = vsub.s32 2, %v1954
    %v1956 = vrot.slane %v1943, %v1955
    %v1957 = vlaneseq
    %v1958 = vshrl.u32 %v1957, 7
    %v1959 = vsub.s32 3, %v1958
    %v1960 = vrot.slane %v1943, %v1959
    %v1961 = vlaneseq
    %v1962 = vshrl.u32 %v1961, 7
    %v1963 = vsub.s32 4, %v1962
    %v1964 = vrot.slane %v1943, %v1963
    %v1965 = vlaneseq
    %v1966 = vshrl.u32 %v1965, 7
    %v1967 = vsub.s32 5, %v1966
    %v1968 = vrot.slane %v1943, %v1967
    %v1969 = vlaneseq
    %v1970 = vshrl.u32 %v1969, 7
    %v1971 = vsub.s32 6, %v1970
    %v1972 = vrot.slane %v1943, %v1971
    %v1973 = vlaneseq
    %v1974 = vshrl.u32 %v1973, 7
    %v1975 = vsub.s32 7, %v1974
    %v1976 = vrot.slane %v1943, %v1975
    %v1985 = vsub.f32 %v1788, %v1948
    %v1986 = vsub.f32 %v1791, %v1948
    %v1987 = vsub.f32 %v1794, %v1952
    %v1988 = vsub.f32 %v1797, %v1952
    %v1989 = vsub.f32 %v1800, %v1956
    %v1990 = vsub.f32 %v1803, %v1956
    %v1991 = vsub.f32 %v1806, %v1960
    %v1992 = vsub.f32 %v1809, %v1960
    %v1993 = vsub.f32 %v1812, %v1964
    %v1994 = vsub.f32 %v1815, %v1964
    %v1995 = vsub.f32 %v1818, %v1968
    %v1996 = vsub.f32 %v1821, %v1968
    %v1997 = vsub.f32 %v1824, %v1972
    %v1998 = vsub.f32 %v1827, %v1972
    %v1999 = vsub.f32 %v1830, %v1976
    %v2000 = vsub.f32 %v1833, %v1976
    %v2001 = vmul.f32 %v1985, 1.442695
    %v2002 = vpow.pop %v2001
    %v2003 = vmul.f32 %v1986, 1.442695
    %v2004 = vpow.pop %v2003
    %v2005 = vmul.f32 %v1987, 1.442695
    %v2006 = vpow.pop %v2005
    %v2007 = vmul.f32 %v1988, 1.442695
    %v2008 = vpow.pop %v2007
    %v2009 = vmul.f32 %v1989, 1.442695
    %v2010 = vpow.pop %v2009
    %v2011 = vmul.f32 %v1990, 1.442695
    %v2012 = vpow.pop %v2011
    %v2013 = vmul.f32 %v1991, 1.442695
    %v2014 = vpow.pop %v2013
    %v2015 = vmul.f32 %v1992, 1.442695
    %v2016 = vpow.pop %v2015
    %v2017 = vmul.f32 %v1993, 1.442695
    %v2018 = vpow.pop %v2017
    %v2019 = vmul.f32 %v1994, 1.442695
    %v2020 = vpow.pop %v2019
    %v2021 = vmul.f32 %v1995, 1.442695
    %v2022 = vpow.pop %v2021
    %v2023 = vmul.f32 %v1996, 1.442695
    %v2024 = vpow.pop %v2023
    %v2025 = vmul.f32 %v1997, 1.442695
    %v2026 = vpow.pop %v2025
    %v2027 = vmul.f32 %v1998, 1.442695
    %v2028 = vpow.pop %v2027
    %v2029 = vmul.f32 %v1999, 1.442695
    %v2030 = vpow.pop %v2029
    %v2031 = vmul.f32 %v2000, 1.442695
    %v2032 = vpow.pop %v2031
    %2049 = vset.pattern.permute.xlu0 0
    %2050 = vperm.xlu0 %2049, %v2002
    %v2051 = vpop.permute.xlu0 %2050
    %2052 = vset.pattern.permute.xlu0 0
    %2053 = vperm.xlu0 %2052, %v2004
    %v2054 = vpop.permute.xlu0 %2053
    %2055 = vset.pattern.permute.xlu0 0
    %2056 = vperm.xlu0 %2055, %v2006
    %v2057 = vpop.permute.xlu0 %2056
    %2058 = vset.pattern.permute.xlu0 0
    %2059 = vperm.xlu0 %2058, %v2008
    %v2060 = vpop.permute.xlu0 %2059
    %2061 = vset.pattern.permute.xlu0 0
    %2062 = vperm.xlu0 %2061, %v2010
    %v2063 = vpop.permute.xlu0 %2062
    %2064 = vset.pattern.permute.xlu0 0
    %2065 = vperm.xlu0 %2064, %v2012
    %v2066 = vpop.permute.xlu0 %2065
    %2067 = vset.pattern.permute.xlu0 0
    %2068 = vperm.xlu0 %2067, %v2014
    %v2069 = vpop.permute.xlu0 %2068
    %2070 = vset.pattern.permute.xlu0 0
    %2071 = vperm.xlu0 %2070, %v2016
    %v2072 = vpop.permute.xlu0 %2071
    %2073 = vset.pattern.permute.xlu0 0
    %2074 = vperm.xlu0 %2073, %v2018
    %v2075 = vpop.permute.xlu0 %2074
    %2076 = vset.pattern.permute.xlu0 0
    %2077 = vperm.xlu0 %2076, %v2020
    %v2078 = vpop.permute.xlu0 %2077
    %2079 = vset.pattern.permute.xlu0 0
    %2080 = vperm.xlu0 %2079, %v2022
    %v2081 = vpop.permute.xlu0 %2080
    %2082 = vset.pattern.permute.xlu0 0
    %2083 = vperm.xlu0 %2082, %v2024
    %v2084 = vpop.permute.xlu0 %2083
    %2085 = vset.pattern.permute.xlu0 0
    %2086 = vperm.xlu0 %2085, %v2026
    %v2087 = vpop.permute.xlu0 %2086
    %2088 = vset.pattern.permute.xlu0 0
    %2089 = vperm.xlu0 %2088, %v2028
    %v2090 = vpop.permute.xlu0 %2089
    %2091 = vset.pattern.permute.xlu0 0
    %2092 = vperm.xlu0 %2091, %v2030
    %v2093 = vpop.permute.xlu0 %2092
    %2094 = vset.pattern.permute.xlu0 0
    %2095 = vperm.xlu0 %2094, %v2032
    %v2096 = vpop.permute.xlu0 %2095
    %v2097 = vlaneseq
    %v2098 = vshrl.u32 %v2097, 7
    %v2099 = vsub.s32 %v1851, %v2098
    %v2100 = vrot.slane %v2051, %v2099
    %v2101 = vlaneseq
    %v2102 = vshrl.u32 %v2101, 7
    %v2103 = vsub.s32 %v1856, %v2102
    %v2104 = vrot.slane %v2054, %v2103
    %v2105 = vsel %vm1861, %v2104, %v2100
    %v2106 = vlaneseq
    %v2107 = vshrl.u32 %v2106, 7
    %v2108 = vsub.s32 %v1851, %v2107
    %v2109 = vrot.slane %v2057, %v2108
    %v2110 = vlaneseq
    %v2111 = vshrl.u32 %v2110, 7
    %v2112 = vsub.s32 %v1856, %v2111
    %v2113 = vrot.slane %v2060, %v2112
    %v2114 = vsel %vm1861, %v2113, %v2109
    %v2115 = vlaneseq
    %v2116 = vshrl.u32 %v2115, 7
    %v2117 = vsub.s32 %v1851, %v2116
    %v2118 = vrot.slane %v2063, %v2117
    %v2119 = vlaneseq
    %v2120 = vshrl.u32 %v2119, 7
    %v2121 = vsub.s32 %v1856, %v2120
    %v2122 = vrot.slane %v2066, %v2121
    %v2123 = vsel %vm1861, %v2122, %v2118
    %v2124 = vlaneseq
    %v2125 = vshrl.u32 %v2124, 7
    %v2126 = vsub.s32 %v1851, %v2125
    %v2127 = vrot.slane %v2069, %v2126
    %v2128 = vlaneseq
    %v2129 = vshrl.u32 %v2128, 7
    %v2130 = vsub.s32 %v1856, %v2129
    %v2131 = vrot.slane %v2072, %v2130
    %v2132 = vsel %vm1861, %v2131, %v2127
    %v2133 = vlaneseq
    %v2134 = vshrl.u32 %v2133, 7
    %v2135 = vsub.s32 %v1851, %v2134
    %v2136 = vrot.slane %v2075, %v2135
    %v2137 = vlaneseq
    %v2138 = vshrl.u32 %v2137, 7
    %v2139 = vsub.s32 %v1856, %v2138
    %v2140 = vrot.slane %v2078, %v2139
    %v2141 = vsel %vm1861, %v2140, %v2136
    %v2142 = vlaneseq
    %v2143 = vshrl.u32 %v2142, 7
    %v2144 = vsub.s32 %v1851, %v2143
    %v2145 = vrot.slane %v2081, %v2144
    %v2146 = vlaneseq
    %v2147 = vshrl.u32 %v2146, 7
    %v2148 = vsub.s32 %v1856, %v2147
    %v2149 = vrot.slane %v2084, %v2148
    %v2150 = vsel %vm1861, %v2149, %v2145
    %v2151 = vlaneseq
    %v2152 = vshrl.u32 %v2151, 7
    %v2153 = vsub.s32 %v1851, %v2152
    %v2154 = vrot.slane %v2087, %v2153
    %v2155 = vlaneseq
    %v2156 = vshrl.u32 %v2155, 7
    %v2157 = vsub.s32 %v1856, %v2156
    %v2158 = vrot.slane %v2090, %v2157
    %v2159 = vsel %vm1861, %v2158, %v2154
    %v2160 = vlaneseq
    %v2161 = vshrl.u32 %v2160, 7
    %v2162 = vsub.s32 %v1851, %v2161
    %v2163 = vrot.slane %v2093, %v2162
    %v2164 = vlaneseq
    %v2165 = vshrl.u32 %v2164, 7
    %v2166 = vsub.s32 %v1856, %v2165
    %v2167 = vrot.slane %v2096, %v2166
    %v2168 = vsel %vm1861, %v2167, %v2163
    %v2169 = vsel %vm1926, %v2114, %v2105
    %v2170 = vsel %vm1928, %v2123, %v2169
    %v2171 = vsel %vm1930, %v2132, %v2170
    %v2172 = vsel %vm1932, %v2141, %v2171
    %v2173 = vsel %vm1934, %v2150, %v2172
    %v2174 = vsel %vm1936, %v2159, %v2173
    %v2175 = vsel %vm1938, %v2168, %v2174
    %v2177 = vsel %vm75, %v2175, 0.0
    %2178 = vadd.xlane.f32.xlu0 %v2177
    %v2179 = vpop.xlane.xlu0 %2178
    %v2181 = vlaneseq
    %v2182 = vshrl.u32 %v2181, 7
    %v2183 = vsub.s32 0, %v2182
    %v2184 = vrot.slane %v2179, %v2183
    %v2185 = vlaneseq
    %v2186 = vshrl.u32 %v2185, 7
    %v2187 = vsub.s32 1, %v2186
    %v2188 = vrot.slane %v2179, %v2187
    %v2189 = vlaneseq
    %v2190 = vshrl.u32 %v2189, 7
    %v2191 = vsub.s32 2, %v2190
    %v2192 = vrot.slane %v2179, %v2191
    %v2193 = vlaneseq
    %v2194 = vshrl.u32 %v2193, 7
    %v2195 = vsub.s32 3, %v2194
    %v2196 = vrot.slane %v2179, %v2195
    %v2197 = vlaneseq
    %v2198 = vshrl.u32 %v2197, 7
    %v2199 = vsub.s32 4, %v2198
    %v2200 = vrot.slane %v2179, %v2199
    %v2201 = vlaneseq
    %v2202 = vshrl.u32 %v2201, 7
    %v2203 = vsub.s32 5, %v2202
    %v2204 = vrot.slane %v2179, %v2203
    %v2205 = vlaneseq
    %v2206 = vshrl.u32 %v2205, 7
    %v2207 = vsub.s32 6, %v2206
    %v2208 = vrot.slane %v2179, %v2207
    %v2209 = vlaneseq
    %v2210 = vshrl.u32 %v2209, 7
    %v2211 = vsub.s32 7, %v2210
    %v2212 = vrot.slane %v2179, %v2211
    %v2221 = vrcp.pop %v2184
    %v2222 = vmul.f32 %v2002, %v2221
    %v2223 = vmul.f32 %v2004, %v2221
    %v2224 = vrcp.pop %v2188
    %v2225 = vmul.f32 %v2006, %v2224
    %v2226 = vmul.f32 %v2008, %v2224
    %v2227 = vrcp.pop %v2192
    %v2228 = vmul.f32 %v2010, %v2227
    %v2229 = vmul.f32 %v2012, %v2227
    %v2230 = vrcp.pop %v2196
    %v2231 = vmul.f32 %v2014, %v2230
    %v2232 = vmul.f32 %v2016, %v2230
    %v2233 = vrcp.pop %v2200
    %v2234 = vmul.f32 %v2018, %v2233
    %v2235 = vmul.f32 %v2020, %v2233
    %v2236 = vrcp.pop %v2204
    %v2237 = vmul.f32 %v2022, %v2236
    %v2238 = vmul.f32 %v2024, %v2236
    %v2239 = vrcp.pop %v2208
    %v2240 = vmul.f32 %v2026, %v2239
    %v2241 = vmul.f32 %v2028, %v2239
    %v2242 = vrcp.pop %v2212
    %v2243 = vmul.f32 %v2030, %v2242
    %v2244 = vmul.f32 %v2032, %v2242
    %2261 = vset.pattern.permute.xlu0 0
    %2262 = vperm.xlu0 %2261, %v2222
    %v2263 = vpop.permute.xlu0 %2262
    %2264 = vset.pattern.permute.xlu0 0
    %2265 = vperm.xlu0 %2264, %v2223
    %v2266 = vpop.permute.xlu0 %2265
    %2267 = vset.pattern.permute.xlu0 0
    %2268 = vperm.xlu0 %2267, %v2225
    %v2269 = vpop.permute.xlu0 %2268
    %2270 = vset.pattern.permute.xlu0 0
    %2271 = vperm.xlu0 %2270, %v2226
    %v2272 = vpop.permute.xlu0 %2271
    %2273 = vset.pattern.permute.xlu0 0
    %2274 = vperm.xlu0 %2273, %v2228
    %v2275 = vpop.permute.xlu0 %2274
    %2276 = vset.pattern.permute.xlu0 0
    %2277 = vperm.xlu0 %2276, %v2229
    %v2278 = vpop.permute.xlu0 %2277
    %2279 = vset.pattern.permute.xlu0 0
    %2280 = vperm.xlu0 %2279, %v2231
    %v2281 = vpop.permute.xlu0 %2280
    %2282 = vset.pattern.permute.xlu0 0
    %2283 = vperm.xlu0 %2282, %v2232
    %v2284 = vpop.permute.xlu0 %2283
    %2285 = vset.pattern.permute.xlu0 0
    %2286 = vperm.xlu0 %2285, %v2234
    %v2287 = vpop.permute.xlu0 %2286
    %2288 = vset.pattern.permute.xlu0 0
    %2289 = vperm.xlu0 %2288, %v2235
    %v2290 = vpop.permute.xlu0 %2289
    %2291 = vset.pattern.permute.xlu0 0
    %2292 = vperm.xlu0 %2291, %v2237
    %v2293 = vpop.permute.xlu0 %2292
    %2294 = vset.pattern.permute.xlu0 0
    %2295 = vperm.xlu0 %2294, %v2238
    %v2296 = vpop.permute.xlu0 %2295
    %2297 = vset.pattern.permute.xlu0 0
    %2298 = vperm.xlu0 %2297, %v2240
    %v2299 = vpop.permute.xlu0 %2298
    %2300 = vset.pattern.permute.xlu0 0
    %2301 = vperm.xlu0 %2300, %v2241
    %v2302 = vpop.permute.xlu0 %2301
    %2303 = vset.pattern.permute.xlu0 0
    %2304 = vperm.xlu0 %2303, %v2243
    %v2305 = vpop.permute.xlu0 %2304
    %2306 = vset.pattern.permute.xlu0 0
    %2307 = vperm.xlu0 %2306, %v2244
    %v2308 = vpop.permute.xlu0 %2307
    %v2309 = vlaneseq
    %v2310 = vshrl.u32 %v2309, 7
    %v2311 = vsub.s32 %v1851, %v2310
    %v2312 = vrot.slane %v2263, %v2311
    %v2313 = vlaneseq
    %v2314 = vshrl.u32 %v2313, 7
    %v2315 = vsub.s32 %v1856, %v2314
    %v2316 = vrot.slane %v2266, %v2315
    %v2317 = vsel %vm1861, %v2316, %v2312
    %v2318 = vlaneseq
    %v2319 = vshrl.u32 %v2318, 7
    %v2320 = vsub.s32 %v1851, %v2319
    %v2321 = vrot.slane %v2269, %v2320
    %v2322 = vlaneseq
    %v2323 = vshrl.u32 %v2322, 7
    %v2324 = vsub.s32 %v1856, %v2323
    %v2325 = vrot.slane %v2272, %v2324
    %v2326 = vsel %vm1861, %v2325, %v2321
    %v2327 = vlaneseq
    %v2328 = vshrl.u32 %v2327, 7
    %v2329 = vsub.s32 %v1851, %v2328
    %v2330 = vrot.slane %v2275, %v2329
    %v2331 = vlaneseq
    %v2332 = vshrl.u32 %v2331, 7
    %v2333 = vsub.s32 %v1856, %v2332
    %v2334 = vrot.slane %v2278, %v2333
    %v2335 = vsel %vm1861, %v2334, %v2330
    %v2336 = vlaneseq
    %v2337 = vshrl.u32 %v2336, 7
    %v2338 = vsub.s32 %v1851, %v2337
    %v2339 = vrot.slane %v2281, %v2338
    %v2340 = vlaneseq
    %v2341 = vshrl.u32 %v2340, 7
    %v2342 = vsub.s32 %v1856, %v2341
    %v2343 = vrot.slane %v2284, %v2342
    %v2344 = vsel %vm1861, %v2343, %v2339
    %v2345 = vlaneseq
    %v2346 = vshrl.u32 %v2345, 7
    %v2347 = vsub.s32 %v1851, %v2346
    %v2348 = vrot.slane %v2287, %v2347
    %v2349 = vlaneseq
    %v2350 = vshrl.u32 %v2349, 7
    %v2351 = vsub.s32 %v1856, %v2350
    %v2352 = vrot.slane %v2290, %v2351
    %v2353 = vsel %vm1861, %v2352, %v2348
    %v2354 = vlaneseq
    %v2355 = vshrl.u32 %v2354, 7
    %v2356 = vsub.s32 %v1851, %v2355
    %v2357 = vrot.slane %v2293, %v2356
    %v2358 = vlaneseq
    %v2359 = vshrl.u32 %v2358, 7
    %v2360 = vsub.s32 %v1856, %v2359
    %v2361 = vrot.slane %v2296, %v2360
    %v2362 = vsel %vm1861, %v2361, %v2357
    %v2363 = vlaneseq
    %v2364 = vshrl.u32 %v2363, 7
    %v2365 = vsub.s32 %v1851, %v2364
    %v2366 = vrot.slane %v2299, %v2365
    %v2367 = vlaneseq
    %v2368 = vshrl.u32 %v2367, 7
    %v2369 = vsub.s32 %v1856, %v2368
    %v2370 = vrot.slane %v2302, %v2369
    %v2371 = vsel %vm1861, %v2370, %v2366
    %v2372 = vlaneseq
    %v2373 = vshrl.u32 %v2372, 7
    %v2374 = vsub.s32 %v1851, %v2373
    %v2375 = vrot.slane %v2305, %v2374
    %v2376 = vlaneseq
    %v2377 = vshrl.u32 %v2376, 7
    %v2378 = vsub.s32 %v1856, %v2377
    %v2379 = vrot.slane %v2308, %v2378
    %v2380 = vsel %vm1861, %v2379, %v2375
    %v2381 = vsel %vm1926, %v2326, %v2317
    %v2382 = vsel %vm1928, %v2335, %v2381
    %v2383 = vsel %vm1930, %v2344, %v2382
    %v2384 = vsel %vm1932, %v2353, %v2383
    %v2385 = vsel %vm1934, %v2362, %v2384
    %v2386 = vsel %vm1936, %v2371, %v2385
    %v2387 = vsel %vm1938, %v2380, %v2386
    %2389 = vst.msk [vmem:[#allocation4] sm:$0xff] %vm75, %v2387
    %v2390 = vsel %vm75, %v2317, 0
    %2392 = vmatprep.subr.mxu0 0.0
    %2393 = vmatpush1.msra.mxu0 %v1747
    %2394 = vmatprep.subr.mxu0 0.0
    %2395 = vmatpush1.msra.mxu0 %v1748
    %2396 = vmatprep.subr.mxu0 0.0
    %2397 = vmatpush1.msra.mxu0 0.0
    %2398 = vmatprep.subr.mxu0 0.0
    %2399 = vmatpush1.msra.mxu0 0.0
    %2400 = vmatprep.subr.mxu0 0.0
    %2401 = vmatpush1.msra.mxu0 0.0
    %2402 = vmatprep.subr.mxu0 0.0
    %2403 = vmatpush1.msra.mxu0 0.0
    %2404 = vmatprep.subr.mxu0 0.0
    %2405 = vmatpush1.msra.mxu0 0.0
    %2406 = vmatprep.subr.mxu0 0.0
    %2407 = vmatpush1.msra.mxu0 0.0
    %2408 = vmatprep.subr.mxu0 0.0
    %2409 = vmatpush1.msra.mxu0 0.0
    %2410 = vmatprep.subr.mxu0 0.0
    %2411 = vmatpush1.msra.mxu0 0.0
    %2412 = vmatprep.subr.mxu0 0.0
    %2413 = vmatpush1.msra.mxu0 0.0
    %2414 = vmatprep.subr.mxu0 0.0
    %2415 = vmatpush1.msra.mxu0 0.0
    %2416 = vmatprep.subr.mxu0 0.0
    %2417 = vmatpush1.msra.mxu0 0.0
    %2418 = vmatprep.subr.mxu0 0.0
    %2419 = vmatpush1.msra.mxu0 0.0
    %2420 = vmatprep.subr.mxu0 0.0
    %2421 = vmatpush1.msra.mxu0 0.0
    %2422 = vmatprep.subr.mxu0 0.0
    %2423 = vmatpush1.msra.mxu0 0.0
    %2424 = vmatprep.subr.mxu0 0.0
    %2425 = vmatpush1.msra.mxu0 0.0
    %2426 = vmatprep.subr.mxu0 0.0
    %2427 = vmatpush1.msra.mxu0 0.0
    %2428 = vmatprep.subr.mxu0 0.0
    %2429 = vmatpush1.msra.mxu0 0.0
    %2430 = vmatprep.subr.mxu0 0.0
    %2431 = vmatpush1.msra.mxu0 0.0
    %2432 = vmatprep.subr.mxu0 0.0
    %2433 = vmatpush1.msra.mxu0 0.0
    %2434 = vmatprep.subr.mxu0 0.0
    %2435 = vmatpush1.msra.mxu0 0.0
    %2436 = vmatprep.subr.mxu0 0.0
    %2437 = vmatpush1.msra.mxu0 0.0
    %2438 = vmatprep.subr.mxu0 0.0
    %2439 = vmatpush1.msra.mxu0 0.0
    %2440 = vmatprep.subr.mxu0 0.0
    %2441 = vmatpush1.msra.mxu0 0.0
    %2442 = vmatprep.subr.mxu0 0.0
    %2443 = vmatpush1.msra.mxu0 0.0
    %2444 = vmatprep.subr.mxu0 0.0
    %2445 = vmatpush1.msra.mxu0 0.0
    %2446 = vmatprep.subr.mxu0 0.0
    %2447 = vmatpush1.msra.mxu0 0.0
    %2448 = vmatprep.subr.mxu0 0.0
    %2449 = vmatpush1.msra.mxu0 0.0
    %2450 = vmatprep.subr.mxu0 0.0
    %2451 = vmatpush1.msra.mxu0 0.0
    %2452 = vmatprep.subr.mxu0 0.0
    %2453 = vmatpush1.msra.mxu0 0.0
    %2454 = vmatprep.subr.mxu0 0.0
    %2455 = vmatpush1.msra.mxu0 0.0
    %2456 = vmatprep.mubr.f32.mxu0 0.0
    %2457 = vmatmul.mubr.f32.gmra.mrb[0].mxu0 %v2390
    %v2458 = vpop.f32.mrb[0].mxu0
    %v2459 = vadd.f32 0.0, %v2458
    %v2460 = vpop.f32.mrb[0].mxu0
    %2461 = vdwg.mxu0
    %v2462 = vsel %vm75, %v2326, 0
    %2464 = vmatprep.subr.mxu0 0.0
    %2465 = vmatpush1.msra.mxu0 %v1749
    %2466 = vmatprep.subr.mxu0 0.0
    %2467 = vmatpush1.msra.mxu0 %v1750
    %2468 = vmatprep.subr.mxu0 0.0
    %2469 = vmatpush1.msra.mxu0 0.0
    %2470 = vmatprep.subr.mxu0 0.0
    %2471 = vmatpush1.msra.mxu0 0.0
    %2472 = vmatprep.subr.mxu0 0.0
    %2473 = vmatpush1.msra.mxu0 0.0
    %2474 = vmatprep.subr.mxu0 0.0
    %2475 = vmatpush1.msra.mxu0 0.0
    %2476 = vmatprep.subr.mxu0 0.0
    %2477 = vmatpush1.msra.mxu0 0.0
    %2478 = vmatprep.subr.mxu0 0.0
    %2479 = vmatpush1.msra.mxu0 0.0
    %2480 = vmatprep.subr.mxu0 0.0
    %2481 = vmatpush1.msra.mxu0 0.0
    %2482 = vmatprep.subr.mxu0 0.0
    %2483 = vmatpush1.msra.mxu0 0.0
    %2484 = vmatprep.subr.mxu0 0.0
    %2485 = vmatpush1.msra.mxu0 0.0
    %2486 = vmatprep.subr.mxu0 0.0
    %2487 = vmatpush1.msra.mxu0 0.0
    %2488 = vmatprep.subr.mxu0 0.0
    %2489 = vmatpush1.msra.mxu0 0.0
    %2490 = vmatprep.subr.mxu0 0.0
    %2491 = vmatpush1.msra.mxu0 0.0
    %2492 = vmatprep.subr.mxu0 0.0
    %2493 = vmatpush1.msra.mxu0 0.0
    %2494 = vmatprep.subr.mxu0 0.0
    %2495 = vmatpush1.msra.mxu0 0.0
    %2496 = vmatprep.subr.mxu0 0.0
    %2497 = vmatpush1.msra.mxu0 0.0
    %2498 = vmatprep.subr.mxu0 0.0
    %2499 = vmatpush1.msra.mxu0 0.0
    %2500 = vmatprep.subr.mxu0 0.0
    %2501 = vmatpush1.msra.mxu0 0.0
    %2502 = vmatprep.subr.mxu0 0.0
    %2503 = vmatpush1.msra.mxu0 0.0
    %2504 = vmatprep.subr.mxu0 0.0
    %2505 = vmatpush1.msra.mxu0 0.0
    %2506 = vmatprep.subr.mxu0 0.0
    %2507 = vmatpush1.msra.mxu0 0.0
    %2508 = vmatprep.subr.mxu0 0.0
    %2509 = vmatpush1.msra.mxu0 0.0
    %2510 = vmatprep.subr.mxu0 0.0
    %2511 = vmatpush1.msra.mxu0 0.0
    %2512 = vmatprep.subr.mxu0 0.0
    %2513 = vmatpush1.msra.mxu0 0.0
    %2514 = vmatprep.subr.mxu0 0.0
    %2515 = vmatpush1.msra.mxu0 0.0
    %2516 = vmatprep.subr.mxu0 0.0
    %2517 = vmatpush1.msra.mxu0 0.0
    %2518 = vmatprep.subr.mxu0 0.0
    %2519 = vmatpush1.msra.mxu0 0.0
    %2520 = vmatprep.subr.mxu0 0.0
    %2521 = vmatpush1.msra.mxu0 0.0
    %2522 = vmatprep.subr.mxu0 0.0
    %2523 = vmatpush1.msra.mxu0 0.0
    %2524 = vmatprep.subr.mxu0 0.0
    %2525 = vmatpush1.msra.mxu0 0.0
    %2526 = vmatprep.subr.mxu0 0.0
    %2527 = vmatpush1.msra.mxu0 0.0
    %2528 = vmatprep.mubr.f32.mxu0 0.0
    %2529 = vmatmul.mubr.f32.gmra.mrb[0].mxu0 %v2462
    %v2530 = vpop.f32.mrb[0].mxu0
    %v2531 = vadd.f32 0.0, %v2530
    %v2532 = vpop.f32.mrb[0].mxu0
    %2533 = vdwg.mxu0
    %v2534 = vsel %vm75, %v2335, 0
    %2536 = vmatprep.subr.mxu0 0.0
    %2537 = vmatpush1.msra.mxu0 %v1751
    %2538 = vmatprep.subr.mxu0 0.0
    %2539 = vmatpush1.msra.mxu0 %v1752
    %2540 = vmatprep.subr.mxu0 0.0
    %2541 = vmatpush1.msra.mxu0 0.0
    %2542 = vmatprep.subr.mxu0 0.0
    %2543 = vmatpush1.msra.mxu0 0.0
    %2544 = vmatprep.subr.mxu0 0.0
    %2545 = vmatpush1.msra.mxu0 0.0
    %2546 = vmatprep.subr.mxu0 0.0
    %2547 = vmatpush1.msra.mxu0 0.0
    %2548 = vmatprep.subr.mxu0 0.0
    %2549 = vmatpush1.msra.mxu0 0.0
    %2550 = vmatprep.subr.mxu0 0.0
    %2551 = vmatpush1.msra.mxu0 0.0
    %2552 = vmatprep.subr.mxu0 0.0
    %2553 = vmatpush1.msra.mxu0 0.0
    %2554 = vmatprep.subr.mxu0 0.0
    %2555 = vmatpush1.msra.mxu0 0.0
    %2556 = vmatprep.subr.mxu0 0.0
    %2557 = vmatpush1.msra.mxu0 0.0
    %2558 = vmatprep.subr.mxu0 0.0
    %2559 = vmatpush1.msra.mxu0 0.0
    %2560 = vmatprep.subr.mxu0 0.0
    %2561 = vmatpush1.msra.mxu0 0.0
    %2562 = vmatprep.subr.mxu0 0.0
    %2563 = vmatpush1.msra.mxu0 0.0
    %2564 = vmatprep.subr.mxu0 0.0
    %2565 = vmatpush1.msra.mxu0 0.0
    %2566 = vmatprep.subr.mxu0 0.0
    %2567 = vmatpush1.msra.mxu0 0.0
    %2568 = vmatprep.subr.mxu0 0.0
    %2569 = vmatpush1.msra.mxu0 0.0
    %2570 = vmatprep.subr.mxu0 0.0
    %2571 = vmatpush1.msra.mxu0 0.0
    %2572 = vmatprep.subr.mxu0 0.0
    %2573 = vmatpush1.msra.mxu0 0.0
    %2574 = vmatprep.subr.mxu0 0.0
    %2575 = vmatpush1.msra.mxu0 0.0
    %2576 = vmatprep.subr.mxu0 0.0
    %2577 = vmatpush1.msra.mxu0 0.0
    %2578 = vmatprep.subr.mxu0 0.0
    %2579 = vmatpush1.msra.mxu0 0.0
    %2580 = vmatprep.subr.mxu0 0.0
    %2581 = vmatpush1.msra.mxu0 0.0
    %2582 = vmatprep.subr.mxu0 0.0
    %2583 = vmatpush1.msra.mxu0 0.0
    %2584 = vmatprep.subr.mxu0 0.0
    %2585 = vmatpush1.msra.mxu0 0.0
    %2586 = vmatprep.subr.mxu0 0.0
    %2587 = vmatpush1.msra.mxu0 0.0
    %2588 = vmatprep.subr.mxu0 0.0
    %2589 = vmatpush1.msra.mxu0 0.0
    %2590 = vmatprep.subr.mxu0 0.0
    %2591 = vmatpush1.msra.mxu0 0.0
    %2592 = vmatprep.subr.mxu0 0.0
    %2593 = vmatpush1.msra.mxu0 0.0
    %2594 = vmatprep.subr.mxu0 0.0
    %2595 = vmatpush1.msra.mxu0 0.0
    %2596 = vmatprep.subr.mxu0 0.0
    %2597 = vmatpush1.msra.mxu0 0.0
    %2598 = vmatprep.subr.mxu0 0.0
    %2599 = vmatpush1.msra.mxu0 0.0
    %2600 = vmatprep.mubr.f32.mxu0 0.0
    %2601 = vmatmul.mubr.f32.gmra.mrb[0].mxu0 %v2534
    %v2602 = vpop.f32.mrb[0].mxu0
    %v2603 = vadd.f32 0.0, %v2602
    %v2604 = vpop.f32.mrb[0].mxu0
    %2605 = vdwg.mxu0
    %v2606 = vsel %vm75, %v2344, 0
    %2608 = vmatprep.subr.mxu0 0.0
    %2609 = vmatpush1.msra.mxu0 %v1753
    %2610 = vmatprep.subr.mxu0 0.0
    %2611 = vmatpush1.msra.mxu0 %v1754
    %2612 = vmatprep.subr.mxu0 0.0
    %2613 = vmatpush1.msra.mxu0 0.0
    %2614 = vmatprep.subr.mxu0 0.0
    %2615 = vmatpush1.msra.mxu0 0.0
    %2616 = vmatprep.subr.mxu0 0.0
    %2617 = vmatpush1.msra.mxu0 0.0
    %2618 = vmatprep.subr.mxu0 0.0
    %2619 = vmatpush1.msra.mxu0 0.0
    %2620 = vmatprep.subr.mxu0 0.0
    %2621 = vmatpush1.msra.mxu0 0.0
    %2622 = vmatprep.subr.mxu0 0.0
    %2623 = vmatpush1.msra.mxu0 0.0
    %2624 = vmatprep.subr.mxu0 0.0
    %2625 = vmatpush1.msra.mxu0 0.0
    %2626 = vmatprep.subr.mxu0 0.0
    %2627 = vmatpush1.msra.mxu0 0.0
    %2628 = vmatprep.subr.mxu0 0.0
    %2629 = vmatpush1.msra.mxu0 0.0
    %2630 = vmatprep.subr.mxu0 0.0
    %2631 = vmatpush1.msra.mxu0 0.0
    %2632 = vmatprep.subr.mxu0 0.0
    %2633 = vmatpush1.msra.mxu0 0.0
    %2634 = vmatprep.subr.mxu0 0.0
    %2635 = vmatpush1.msra.mxu0 0.0
    %2636 = vmatprep.subr.mxu0 0.0
    %2637 = vmatpush1.msra.mxu0 0.0
    %2638 = vmatprep.subr.mxu0 0.0
    %2639 = vmatpush1.msra.mxu0 0.0
    %2640 = vmatprep.subr.mxu0 0.0
    %2641 = vmatpush1.msra.mxu0 0.0
    %2642 = vmatprep.subr.mxu0 0.0
    %2643 = vmatpush1.msra.mxu0 0.0
    %2644 = vmatprep.subr.mxu0 0.0
    %2645 = vmatpush1.msra.mxu0 0.0
    %2646 = vmatprep.subr.mxu0 0.0
    %2647 = vmatpush1.msra.mxu0 0.0
    %2648 = vmatprep.subr.mxu0 0.0
    %2649 = vmatpush1.msra.mxu0 0.0
    %2650 = vmatprep.subr.mxu0 0.0
    %2651 = vmatpush1.msra.mxu0 0.0
    %2652 = vmatprep.subr.mxu0 0.0
    %2653 = vmatpush1.msra.mxu0 0.0
    %2654 = vmatprep.subr.mxu0 0.0
    %2655 = vmatpush1.msra.mxu0 0.0
    %2656 = vmatprep.subr.mxu0 0.0
    %2657 = vmatpush1.msra.mxu0 0.0
    %2658 = vmatprep.subr.mxu0 0.0
    %2659 = vmatpush1.msra.mxu0 0.0
    %2660 = vmatprep.subr.mxu0 0.0
    %2661 = vmatpush1.msra.mxu0 0.0
    %2662 = vmatprep.subr.mxu0 0.0
    %2663 = vmatpush1.msra.mxu0 0.0
    %2664 = vmatprep.subr.mxu0 0.0
    %2665 = vmatpush1.msra.mxu0 0.0
    %2666 = vmatprep.subr.mxu0 0.0
    %2667 = vmatpush1.msra.mxu0 0.0
    %2668 = vmatprep.subr.mxu0 0.0
    %2669 = vmatpush1.msra.mxu0 0.0
    %2670 = vmatprep.subr.mxu0 0.0
    %2671 = vmatpush1.msra.mxu0 0.0
    %2672 = vmatprep.mubr.f32.mxu0 0.0
    %2673 = vmatmul.mubr.f32.gmra.mrb[0].mxu0 %v2606
    %v2674 = vpop.f32.mrb[0].mxu0
    %v2675 = vadd.f32 0.0, %v2674
    %v2676 = vpop.f32.mrb[0].mxu0
    %2677 = vdwg.mxu0
    %v2678 = vsel %vm75, %v2353, 0
    %2680 = vmatprep.subr.mxu0 0.0
    %2681 = vmatpush1.msra.mxu0 %v1755
    %2682 = vmatprep.subr.mxu0 0.0
    %2683 = vmatpush1.msra.mxu0 %v1756
    %2684 = vmatprep.subr.mxu0 0.0
    %2685 = vmatpush1.msra.mxu0 0.0
    %2686 = vmatprep.subr.mxu0 0.0
    %2687 = vmatpush1.msra.mxu0 0.0
    %2688 = vmatprep.subr.mxu0 0.0
    %2689 = vmatpush1.msra.mxu0 0.0
    %2690 = vmatprep.subr.mxu0 0.0
    %2691 = vmatpush1.msra.mxu0 0.0
    %2692 = vmatprep.subr.mxu0 0.0
    %2693 = vmatpush1.msra.mxu0 0.0
    %2694 = vmatprep.subr.mxu0 0.0
    %2695 = vmatpush1.msra.mxu0 0.0
    %2696 = vmatprep.subr.mxu0 0.0
    %2697 = vmatpush1.msra.mxu0 0.0
    %2698 = vmatprep.subr.mxu0 0.0
    %2699 = vmatpush1.msra.mxu0 0.0
    %2700 = vmatprep.subr.mxu0 0.0
    %2701 = vmatpush1.msra.mxu0 0.0
    %2702 = vmatprep.subr.mxu0 0.0
    %2703 = vmatpush1.msra.mxu0 0.0
    %2704 = vmatprep.subr.mxu0 0.0
    %2705 = vmatpush1.msra.mxu0 0.0
    %2706 = vmatprep.subr.mxu0 0.0
    %2707 = vmatpush1.msra.mxu0 0.0
    %2708 = vmatprep.subr.mxu0 0.0
    %2709 = vmatpush1.msra.mxu0 0.0
    %2710 = vmatprep.subr.mxu0 0.0
    %2711 = vmatpush1.msra.mxu0 0.0
    %2712 = vmatprep.subr.mxu0 0.0
    %2713 = vmatpush1.msra.mxu0 0.0
    %2714 = vmatprep.subr.mxu0 0.0
    %2715 = vmatpush1.msra.mxu0 0.0
    %2716 = vmatprep.subr.mxu0 0.0
    %2717 = vmatpush1.msra.mxu0 0.0
    %2718 = vmatprep.subr.mxu0 0.0
    %2719 = vmatpush1.msra.mxu0 0.0
    %2720 = vmatprep.subr.mxu0 0.0
    %2721 = vmatpush1.msra.mxu0 0.0
    %2722 = vmatprep.subr.mxu0 0.0
    %2723 = vmatpush1.msra.mxu0 0.0
    %2724 = vmatprep.subr.mxu0 0.0
    %2725 = vmatpush1.msra.mxu0 0.0
    %2726 = vmatprep.subr.mxu0 0.0
    %2727 = vmatpush1.msra.mxu0 0.0
    %2728 = vmatprep.subr.mxu0 0.0
    %2729 = vmatpush1.msra.mxu0 0.0
    %2730 = vmatprep.subr.mxu0 0.0
    %2731 = vmatpush1.msra.mxu0 0.0
    %2732 = vmatprep.subr.mxu0 0.0
    %2733 = vmatpush1.msra.mxu0 0.0
    %2734 = vmatprep.subr.mxu0 0.0
    %2735 = vmatpush1.msra.mxu0 0.0
    %2736 = vmatprep.subr.mxu0 0.0
    %2737 = vmatpush1.msra.mxu0 0.0
    %2738 = vmatprep.subr.mxu0 0.0
    %2739 = vmatpush1.msra.mxu0 0.0
    %2740 = vmatprep.subr.mxu0 0.0
    %2741 = vmatpush1.msra.mxu0 0.0
    %2742 = vmatprep.subr.mxu0 0.0
    %2743 = vmatpush1.msra.mxu0 0.0
    %2744 = vmatprep.mubr.f32.mxu0 0.0
    %2745 = vmatmul.mubr.f32.gmra.mrb[0].mxu0 %v2678
    %v2746 = vpop.f32.mrb[0].mxu0
    %v2747 = vadd.f32 0.0, %v2746
    %v2748 = vpop.f32.mrb[0].mxu0
    %2749 = vdwg.mxu0
    %v2750 = vsel %vm75, %v2362, 0
    %2752 = vmatprep.subr.mxu0 0.0
    %2753 = vmatpush1.msra.mxu0 %v1757
    %2754 = vmatprep.subr.mxu0 0.0
    %2755 = vmatpush1.msra.mxu0 %v1758
    %2756 = vmatprep.subr.mxu0 0.0
    %2757 = vmatpush1.msra.mxu0 0.0
    %2758 = vmatprep.subr.mxu0 0.0
    %2759 = vmatpush1.msra.mxu0 0.0
    %2760 = vmatprep.subr.mxu0 0.0
    %2761 = vmatpush1.msra.mxu0 0.0
    %2762 = vmatprep.subr.mxu0 0.0
    %2763 = vmatpush1.msra.mxu0 0.0
    %2764 = vmatprep.subr.mxu0 0.0
    %2765 = vmatpush1.msra.mxu0 0.0
    %2766 = vmatprep.subr.mxu0 0.0
    %2767 = vmatpush1.msra.mxu0 0.0
    %2768 = vmatprep.subr.mxu0 0.0
    %2769 = vmatpush1.msra.mxu0 0.0
    %2770 = vmatprep.subr.mxu0 0.0
    %2771 = vmatpush1.msra.mxu0 0.0
    %2772 = vmatprep.subr.mxu0 0.0
    %2773 = vmatpush1.msra.mxu0 0.0
    %2774 = vmatprep.subr.mxu0 0.0
    %2775 = vmatpush1.msra.mxu0 0.0
    %2776 = vmatprep.subr.mxu0 0.0
    %2777 = vmatpush1.msra.mxu0 0.0
    %2778 = vmatprep.subr.mxu0 0.0
    %2779 = vmatpush1.msra.mxu0 0.0
    %2780 = vmatprep.subr.mxu0 0.0
    %2781 = vmatpush1.msra.mxu0 0.0
    %2782 = vmatprep.subr.mxu0 0.0
    %2783 = vmatpush1.msra.mxu0 0.0
    %2784 = vmatprep.subr.mxu0 0.0
    %2785 = vmatpush1.msra.mxu0 0.0
    %2786 = vmatprep.subr.mxu0 0.0
    %2787 = vmatpush1.msra.mxu0 0.0
    %2788 = vmatprep.subr.mxu0 0.0
    %2789 = vmatpush1.msra.mxu0 0.0
    %2790 = vmatprep.subr.mxu0 0.0
    %2791 = vmatpush1.msra.mxu0 0.0
    %2792 = vmatprep.subr.mxu0 0.0
    %2793 = vmatpush1.msra.mxu0 0.0
    %2794 = vmatprep.subr.mxu0 0.0
    %2795 = vmatpush1.msra.mxu0 0.0
    %2796 = vmatprep.subr.mxu0 0.0
    %2797 = vmatpush1.msra.mxu0 0.0
    %2798 = vmatprep.subr.mxu0 0.0
    %2799 = vmatpush1.msra.mxu0 0.0
    %2800 = vmatprep.subr.mxu0 0.0
    %2801 = vmatpush1.msra.mxu0 0.0
    %2802 = vmatprep.subr.mxu0 0.0
    %2803 = vmatpush1.msra.mxu0 0.0
    %2804 = vmatprep.subr.mxu0 0.0
    %2805 = vmatpush1.msra.mxu0 0.0
    %2806 = vmatprep.subr.mxu0 0.0
    %2807 = vmatpush1.msra.mxu0 0.0
    %2808 = vmatprep.subr.mxu0 0.0
    %2809 = vmatpush1.msra.mxu0 0.0
    %2810 = vmatprep.subr.mxu0 0.0
    %2811 = vmatpush1.msra.mxu0 0.0
    %2812 = vmatprep.subr.mxu0 0.0
    %2813 = vmatpush1.msra.mxu0 0.0
    %2814 = vmatprep.subr.mxu0 0.0
    %2815 = vmatpush1.msra.mxu0 0.0
    %2816 = vmatprep.mubr.f32.mxu0 0.0
    %2817 = vmatmul.mubr.f32.gmra.mrb[0].mxu0 %v2750
    %v2818 = vpop.f32.mrb[0].mxu0
    %v2819 = vadd.f32 0.0, %v2818
    %v2820 = vpop.f32.mrb[0].mxu0
    %2821 = vdwg.mxu0
    %v2822 = vsel %vm75, %v2371, 0
    %2824 = vmatprep.subr.mxu0 0.0
    %2825 = vmatpush1.msra.mxu0 %v1759
    %2826 = vmatprep.subr.mxu0 0.0
    %2827 = vmatpush1.msra.mxu0 %v1760
    %2828 = vmatprep.subr.mxu0 0.0
    %2829 = vmatpush1.msra.mxu0 0.0
    %2830 = vmatprep.subr.mxu0 0.0
    %2831 = vmatpush1.msra.mxu0 0.0
    %2832 = vmatprep.subr.mxu0 0.0
    %2833 = vmatpush1.msra.mxu0 0.0
    %2834 = vmatprep.subr.mxu0 0.0
    %2835 = vmatpush1.msra.mxu0 0.0
    %2836 = vmatprep.subr.mxu0 0.0
    %2837 = vmatpush1.msra.mxu0 0.0
    %2838 = vmatprep.subr.mxu0 0.0
    %2839 = vmatpush1.msra.mxu0 0.0
    %2840 = vmatprep.subr.mxu0 0.0
    %2841 = vmatpush1.msra.mxu0 0.0
    %2842 = vmatprep.subr.mxu0 0.0
    %2843 = vmatpush1.msra.mxu0 0.0
    %2844 = vmatprep.subr.mxu0 0.0
    %2845 = vmatpush1.msra.mxu0 0.0
    %2846 = vmatprep.subr.mxu0 0.0
    %2847 = vmatpush1.msra.mxu0 0.0
    %2848 = vmatprep.subr.mxu0 0.0
    %2849 = vmatpush1.msra.mxu0 0.0
    %2850 = vmatprep.subr.mxu0 0.0
    %2851 = vmatpush1.msra.mxu0 0.0
    %2852 = vmatprep.subr.mxu0 0.0
    %2853 = vmatpush1.msra.mxu0 0.0
    %2854 = vmatprep.subr.mxu0 0.0
    %2855 = vmatpush1.msra.mxu0 0.0
    %2856 = vmatprep.subr.mxu0 0.0
    %2857 = vmatpush1.msra.mxu0 0.0
    %2858 = vmatprep.subr.mxu0 0.0
    %2859 = vmatpush1.msra.mxu0 0.0
    %2860 = vmatprep.subr.mxu0 0.0
    %2861 = vmatpush1.msra.mxu0 0.0
    %2862 = vmatprep.subr.mxu0 0.0
    %2863 = vmatpush1.msra.mxu0 0.0
    %2864 = vmatprep.subr.mxu0 0.0
    %2865 = vmatpush1.msra.mxu0 0.0
    %2866 = vmatprep.subr.mxu0 0.0
    %2867 = vmatpush1.msra.mxu0 0.0
    %2868 = vmatprep.subr.mxu0 0.0
    %2869 = vmatpush1.msra.mxu0 0.0
    %2870 = vmatprep.subr.mxu0 0.0
    %2871 = vmatpush1.msra.mxu0 0.0
    %2872 = vmatprep.subr.mxu0 0.0
    %2873 = vmatpush1.msra.mxu0 0.0
    %2874 = vmatprep.subr.mxu0 0.0
    %2875 = vmatpush1.msra.mxu0 0.0
    %2876 = vmatprep.subr.mxu0 0.0
    %2877 = vmatpush1.msra.mxu0 0.0
    %2878 = vmatprep.subr.mxu0 0.0
    %2879 = vmatpush1.msra.mxu0 0.0
    %2880 = vmatprep.subr.mxu0 0.0
    %2881 = vmatpush1.msra.mxu0 0.0
    %2882 = vmatprep.subr.mxu0 0.0
    %2883 = vmatpush1.msra.mxu0 0.0
    %2884 = vmatprep.subr.mxu0 0.0
    %2885 = vmatpush1.msra.mxu0 0.0
    %2886 = vmatprep.subr.mxu0 0.0
    %2887 = vmatpush1.msra.mxu0 0.0
    %2888 = vmatprep.mubr.f32.mxu0 0.0
    %2889 = vmatmul.mubr.f32.gmra.mrb[0].mxu0 %v2822
    %v2890 = vpop.f32.mrb[0].mxu0
    %v2891 = vadd.f32 0.0, %v2890
    %v2892 = vpop.f32.mrb[0].mxu0
    %2893 = vdwg.mxu0
    %v2894 = vsel %vm75, %v2380, 0
    %2896 = vmatprep.subr.mxu0 0.0
    %2897 = vmatpush1.msra.mxu0 %v1761
    %2898 = vmatprep.subr.mxu0 0.0
    %2899 = vmatpush1.msra.mxu0 %v1762
    %2900 = vmatprep.subr.mxu0 0.0
    %2901 = vmatpush1.msra.mxu0 0.0
    %2902 = vmatprep.subr.mxu0 0.0
    %2903 = vmatpush1.msra.mxu0 0.0
    %2904 = vmatprep.subr.mxu0 0.0
    %2905 = vmatpush1.msra.mxu0 0.0
    %2906 = vmatprep.subr.mxu0 0.0
    %2907 = vmatpush1.msra.mxu0 0.0
    %2908 = vmatprep.subr.mxu0 0.0
    %2909 = vmatpush1.msra.mxu0 0.0
    %2910 = vmatprep.subr.mxu0 0.0
    %2911 = vmatpush1.msra.mxu0 0.0
    %2912 = vmatprep.subr.mxu0 0.0
    %2913 = vmatpush1.msra.mxu0 0.0
    %2914 = vmatprep.subr.mxu0 0.0
    %2915 = vmatpush1.msra.mxu0 0.0
    %2916 = vmatprep.subr.mxu0 0.0
    %2917 = vmatpush1.msra.mxu0 0.0
    %2918 = vmatprep.subr.mxu0 0.0
    %2919 = vmatpush1.msra.mxu0 0.0
    %2920 = vmatprep.subr.mxu0 0.0
    %2921 = vmatpush1.msra.mxu0 0.0
    %2922 = vmatprep.subr.mxu0 0.0
    %2923 = vmatpush1.msra.mxu0 0.0
    %2924 = vmatprep.subr.mxu0 0.0
    %2925 = vmatpush1.msra.mxu0 0.0
    %2926 = vmatprep.subr.mxu0 0.0
    %2927 = vmatpush1.msra.mxu0 0.0
    %2928 = vmatprep.subr.mxu0 0.0
    %2929 = vmatpush1.msra.mxu0 0.0
    %2930 = vmatprep.subr.mxu0 0.0
    %2931 = vmatpush1.msra.mxu0 0.0
    %2932 = vmatprep.subr.mxu0 0.0
    %2933 = vmatpush1.msra.mxu0 0.0
    %2934 = vmatprep.subr.mxu0 0.0
    %2935 = vmatpush1.msra.mxu0 0.0
    %2936 = vmatprep.subr.mxu0 0.0
    %2937 = vmatpush1.msra.mxu0 0.0
    %2938 = vmatprep.subr.mxu0 0.0
    %2939 = vmatpush1.msra.mxu0 0.0
    %2940 = vmatprep.subr.mxu0 0.0
    %2941 = vmatpush1.msra.mxu0 0.0
    %2942 = vmatprep.subr.mxu0 0.0
    %2943 = vmatpush1.msra.mxu0 0.0
    %2944 = vmatprep.subr.mxu0 0.0
    %2945 = vmatpush1.msra.mxu0 0.0
    %2946 = vmatprep.subr.mxu0 0.0
    %2947 = vmatpush1.msra.mxu0 0.0
    %2948 = vmatprep.subr.mxu0 0.0
    %2949 = vmatpush1.msra.mxu0 0.0
    %2950 = vmatprep.subr.mxu0 0.0
    %2951 = vmatpush1.msra.mxu0 0.0
    %2952 = vmatprep.subr.mxu0 0.0
    %2953 = vmatpush1.msra.mxu0 0.0
    %2954 = vmatprep.subr.mxu0 0.0
    %2955 = vmatpush1.msra.mxu0 0.0
    %2956 = vmatprep.subr.mxu0 0.0
    %2957 = vmatpush1.msra.mxu0 0.0
    %2958 = vmatprep.subr.mxu0 0.0
    %2959 = vmatpush1.msra.mxu0 0.0
    %2960 = vmatprep.mubr.f32.mxu0 0.0
    %2961 = vmatmul.mubr.f32.gmra.mrb[0].mxu0 %v2894
    %v2962 = vpop.f32.mrb[0].mxu0
    %v2963 = vadd.f32 0.0, %v2962
    %v2964 = vpop.f32.mrb[0].mxu0
    %2965 = vdwg.mxu0
    %vm2966 = vcmask 256000
    %2967 = vst.msk [vmem:[#allocation2] sm:$0x7] %vm2966, 0.0
    %v2973 = vrot.slane %v2531, 7
    %v2974 = vsel %vm1926, %v2973, %v2459
    %v2975 = vrot.slane %v2603, 6
    %v2976 = vsel %vm1928, %v2975, %v2974
    %v2977 = vrot.slane %v2675, 5
    %v2978 = vsel %vm1930, %v2977, %v2976
    %v2979 = vrot.slane %v2747, 4
    %v2980 = vsel %vm1932, %v2979, %v2978
    %vm2982 = vcmask 258048
    %2983 = vst.msk [vmem:[#allocation2 + $0x3] sm:$0x1f] %vm2982, %v2980
    %vm2984 = vcmask 517376
    %2985 = vst.msk [vmem:[#allocation2] sm:$0x3] %vm2984, 0.0
    %v2987 = vrot.slane %v2819, 3
    %v2988 = vsel %vm1934, %v2987, %v2980
    %2989 = vrot.lane.b32.xlu0 %v2988, 32
    %v2990 = vpop.permute.xlu0 %2989
    %vm2992 = vcmask 521472
    %2993 = vst.msk [vmem:[#allocation2 + $0x2] sm:$0x3f] %vm2992, %v2990
    %vm2994 = vcmask 778752
    %2995 = vst.msk [vmem:[#allocation2] sm:$0x1] %vm2994, 0.0
    %v2997 = vrot.slane %v2891, 2
    %v2998 = vsel %vm1936, %v2997, %v2988
    %2999 = vrot.lane.b32.xlu0 %v2998, 64
    %v3000 = vpop.permute.xlu0 %2999
    %vm3002 = vcmask 784896
    %3003 = vst.msk [vmem:[#allocation2 + $0x1] sm:$0x7f] %vm3002, %v3000
    %v3005 = vrot.slane %v2963, 1
    %v3006 = vsel %vm1938, %v3005, %v2998
    %3007 = vrot.lane.b32.xlu0 %v3006, 96
    %v3008 = vpop.permute.xlu0 %3007
    %vm3010 = vcmask 1048320
    %3011 = vst.msk [vmem:[#allocation2] sm:$0xff] %vm3010, %v3008
    %v3012 = vld [vmem:[#allocation2] sm:$0xff]
    %v3013 = vld [vmem:[%s7] sm:$0xff]
    %v3014 = vld [vmem:[%s7 + $0x8] sm:$0xff]
    %v3015 = vld [vmem:[%s7 + $0x10] sm:$0xff]
    %v3016 = vld [vmem:[%s7 + $0x18] sm:$0xff]
    %v3017 = vld [vmem:[%s7 + $0x20] sm:$0xff]
    %v3018 = vld [vmem:[%s7 + $0x28] sm:$0xff]
    %v3019 = vld [vmem:[%s7 + $0x30] sm:$0xff]
    %v3020 = vld [vmem:[%s7 + $0x38] sm:$0xff]
    %v3021 = vld [vmem:[%s7 + $0x40] sm:$0xff]
    %v3022 = vld [vmem:[%s7 + $0x48] sm:$0xff]
    %v3023 = vld [vmem:[%s7 + $0x50] sm:$0xff]
    %v3024 = vld [vmem:[%s7 + $0x58] sm:$0xff]
    %v3025 = vld [vmem:[%s7 + $0x60] sm:$0xff]
    %v3026 = vld [vmem:[%s7 + $0x68] sm:$0xff]
    %v3027 = vld [vmem:[%s7 + $0x70] sm:$0xff]
    %v3028 = vld [vmem:[%s7 + $0x78] sm:$0xff]
    %v3029 = vld [vmem:[%s8] sm:$0x1]
    %v3031 = vlaneseq
    %v3032 = vshrl.u32 %v3031, 7
    %v3033 = vsub.s32 0, %v3032
    %v3034 = vrot.slane %v3029, %v3033
    %3036 = vmatprep.subr.mxu0 0.0
    %3037 = vmatpush1.msra.mxu0 %v3013
    %3038 = vmatprep.subr.mxu0 0.0
    %3039 = vmatpush1.msra.mxu0 %v3014
    %3040 = vmatprep.subr.mxu0 0.0
    %3041 = vmatpush1.msra.mxu0 %v3015
    %3042 = vmatprep.subr.mxu0 0.0
    %3043 = vmatpush1.msra.mxu0 %v3016
    %3044 = vmatprep.subr.mxu0 0.0
    %3045 = vmatpush1.msra.mxu0 %v3017
    %3046 = vmatprep.subr.mxu0 0.0
    %3047 = vmatpush1.msra.mxu0 %v3018
    %3048 = vmatprep.subr.mxu0 0.0
    %3049 = vmatpush1.msra.mxu0 %v3019
    %3050 = vmatprep.subr.mxu0 0.0
    %3051 = vmatpush1.msra.mxu0 %v3020
    %3052 = vmatprep.subr.mxu0 0.0
    %3053 = vmatpush1.msra.mxu0 %v3021
    %3054 = vmatprep.subr.mxu0 0.0
    %3055 = vmatpush1.msra.mxu0 %v3022
    %3056 = vmatprep.subr.mxu0 0.0
    %3057 = vmatpush1.msra.mxu0 %v3023
    %3058 = vmatprep.subr.mxu0 0.0
    %3059 = vmatpush1.msra.mxu0 %v3024
    %3060 = vmatprep.subr.mxu0 0.0
    %3061 = vmatpush1.msra.mxu0 %v3025
    %3062 = vmatprep.subr.mxu0 0.0
    %3063 = vmatpush1.msra.mxu0 %v3026
    %3064 = vmatprep.subr.mxu0 0.0
    %3065 = vmatpush1.msra.mxu0 %v3027
    %3066 = vmatprep.subr.mxu0 0.0
    %3067 = vmatpush1.msra.mxu0 %v3028
    %3068 = vmatprep.subr.mxu0 0.0
    %3069 = vmatpush1.msra.mxu0 0.0
    %3070 = vmatprep.subr.mxu0 0.0
    %3071 = vmatpush1.msra.mxu0 0.0
    %3072 = vmatprep.subr.mxu0 0.0
    %3073 = vmatpush1.msra.mxu0 0.0
    %3074 = vmatprep.subr.mxu0 0.0
    %3075 = vmatpush1.msra.mxu0 0.0
    %3076 = vmatprep.subr.mxu0 0.0
    %3077 = vmatpush1.msra.mxu0 0.0
    %3078 = vmatprep.subr.mxu0 0.0
    %3079 = vmatpush1.msra.mxu0 0.0
    %3080 = vmatprep.subr.mxu0 0.0
    %3081 = vmatpush1.msra.mxu0 0.0
    %3082 = vmatprep.subr.mxu0 0.0
    %3083 = vmatpush1.msra.mxu0 0.0
    %3084 = vmatprep.subr.mxu0 0.0
    %3085 = vmatpush1.msra.mxu0 0.0
    %3086 = vmatprep.subr.mxu0 0.0
    %3087 = vmatpush1.msra.mxu0 0.0
    %3088 = vmatprep.subr.mxu0 0.0
    %3089 = vmatpush1.msra.mxu0 0.0
    %3090 = vmatprep.subr.mxu0 0.0
    %3091 = vmatpush1.msra.mxu0 0.0
    %3092 = vmatprep.subr.mxu0 0.0
    %3093 = vmatpush1.msra.mxu0 0.0
    %3094 = vmatprep.subr.mxu0 0.0
    %3095 = vmatpush1.msra.mxu0 0.0
    %3096 = vmatprep.subr.mxu0 0.0
    %3097 = vmatpush1.msra.mxu0 0.0
    %3098 = vmatprep.subr.mxu0 0.0
    %3099 = vmatpush1.msra.mxu0 0.0
    %3100 = vmatprep.mubr.f32.mxu0 0.0
    %3101 = vmatmul.mubr.f32.gmra.mrb[0].mxu0 %v3012
    %v3102 = vpop.f32.mrb[0].mxu0
    %v3103 = vadd.f32 %v3034, %v3102
    %v3104 = vpop.f32.mrb[0].mxu0
    %3105 = vdwg.mxu0
    %v3106 = vmax.f32 %v3103, 0.0
    %v3107 = vld [vmem:[%s9] sm:$0xff]
    %v3108 = vld [vmem:[%s9 + $0x8] sm:$0xff]
    %v3109 = vld [vmem:[%s9 + $0x10] sm:$0xff]
    %v3110 = vld [vmem:[%s9 + $0x18] sm:$0xff]
    %v3111 = vld [vmem:[%s10] sm:$0x1]
    %v3113 = vlaneseq
    %v3114 = vshrl.u32 %v3113, 7
    %v3115 = vsub.s32 0, %v3114
    %v3116 = vrot.slane %v3111, %v3115
    %v3119 = vsel %vm1553, %v3106, 0
    %3121 = vmatprep.subr.mxu0 0.0
    %3122 = vmatpush1.msra.mxu0 %v3107
    %3123 = vmatprep.subr.mxu0 0.0
    %3124 = vmatpush1.msra.mxu0 %v3108
    %3125 = vmatprep.subr.mxu0 0.0
    %3126 = vmatpush1.msra.mxu0 %v3109
    %3127 = vmatprep.subr.mxu0 0.0
    %3128 = vmatpush1.msra.mxu0 %v3110
    %3129 = vmatprep.subr.mxu0 0.0
    %3130 = vmatpush1.msra.mxu0 0.0
    %3131 = vmatprep.subr.mxu0 0.0
    %3132 = vmatpush1.msra.mxu0 0.0
    %3133 = vmatprep.subr.mxu0 0.0
    %3134 = vmatpush1.msra.mxu0 0.0
    %3135 = vmatprep.subr.mxu0 0.0
    %3136 = vmatpush1.msra.mxu0 0.0
    %3137 = vmatprep.subr.mxu0 0.0
    %3138 = vmatpush1.msra.mxu0 0.0
    %3139 = vmatprep.subr.mxu0 0.0
    %3140 = vmatpush1.msra.mxu0 0.0
    %3141 = vmatprep.subr.mxu0 0.0
    %3142 = vmatpush1.msra.mxu0 0.0
    %3143 = vmatprep.subr.mxu0 0.0
    %3144 = vmatpush1.msra.mxu0 0.0
    %3145 = vmatprep.subr.mxu0 0.0
    %3146 = vmatpush1.msra.mxu0 0.0
    %3147 = vmatprep.subr.mxu0 0.0
    %3148 = vmatpush1.msra.mxu0 0.0
    %3149 = vmatprep.subr.mxu0 0.0
    %3150 = vmatpush1.msra.mxu0 0.0
    %3151 = vmatprep.subr.mxu0 0.0
    %3152 = vmatpush1.msra.mxu0 0.0
    %3153 = vmatprep.subr.mxu0 0.0
    %3154 = vmatpush1.msra.mxu0 0.0
    %3155 = vmatprep.subr.mxu0 0.0
    %3156 = vmatpush1.msra.mxu0 0.0
    %3157 = vmatprep.subr.mxu0 0.0
    %3158 = vmatpush1.msra.mxu0 0.0
    %3159 = vmatprep.subr.mxu0 0.0
    %3160 = vmatpush1.msra.mxu0 0.0
    %3161 = vmatprep.subr.mxu0 0.0
    %3162 = vmatpush1.msra.mxu0 0.0
    %3163 = vmatprep.subr.mxu0 0.0
    %3164 = vmatpush1.msra.mxu0 0.0
    %3165 = vmatprep.subr.mxu0 0.0
    %3166 = vmatpush1.msra.mxu0 0.0
    %3167 = vmatprep.subr.mxu0 0.0
    %3168 = vmatpush1.msra.mxu0 0.0
    %3169 = vmatprep.subr.mxu0 0.0
    %3170 = vmatpush1.msra.mxu0 0.0
    %3171 = vmatprep.subr.mxu0 0.0
    %3172 = vmatpush1.msra.mxu0 0.0
    %3173 = vmatprep.subr.mxu0 0.0
    %3174 = vmatpush1.msra.mxu0 0.0
    %3175 = vmatprep.subr.mxu0 0.0
    %3176 = vmatpush1.msra.mxu0 0.0
    %3177 = vmatprep.subr.mxu0 0.0
    %3178 = vmatpush1.msra.mxu0 0.0
    %3179 = vmatprep.subr.mxu0 0.0
    %3180 = vmatpush1.msra.mxu0 0.0
    %3181 = vmatprep.subr.mxu0 0.0
    %3182 = vmatpush1.msra.mxu0 0.0
    %3183 = vmatprep.subr.mxu0 0.0
    %3184 = vmatpush1.msra.mxu0 0.0
    %3185 = vmatprep.mubr.f32.mxu0 0.0
    %3186 = vmatmul.mubr.f32.gmra.mrb[0].mxu0 %v3119
    %v3187 = vpop.f32.mrb[0].mxu0
    %v3188 = vadd.f32 %v3116, %v3187
    %v3189 = vpop.f32.mrb[0].mxu0
    %3190 = vdwg.mxu0
    %vm3191 = vcmask 15360
    %3192 = vst.msk [vmem:[%s11] sm:$0xff] %vm3191, %v3188
    // Predicated region
    $region46: #{tpu_custom_call.1} parent=1 // pred_check
      _
    $region47: #{tpu_custom_call.1} parent=1 // pred_check_branch
      %3194 = sbr.rel (0) target = $region49
    $region48: #{tpu_custom_call.1} parent=1 // pred_region
      _
    $region49: #{tpu_custom_call.1} parent=1 // pred_fallthru
      _
    // Predicated region
    $region50: #{tpu_custom_call.1} parent=1 // pred_check
      _
    $region51: #{tpu_custom_call.1} parent=1 // pred_check_branch
      %3196 = sbr.rel (0) target = $region53
    $region52: #{tpu_custom_call.1} parent=1 // pred_region
      %s3198 = ssub.s32 128, 128
      %3199 = vsyncadd [#allocation3], %s3198
      %s3201 = sshll.u32 [#allocation2], 4
      %s3202 = int_to_ptr.vmem [resolvable:$true] %s3201
      %3204 = dma.vmem_to_hbm [thread:$0]  %s3202, 128, %s12, [#allocation3]
    $region53: #{tpu_custom_call.1} parent=1 // pred_fallthru
      _
    // Predicated region
    $region54: #{tpu_custom_call.1} parent=1 // pred_check
      _
    $region55: #{tpu_custom_call.1} parent=1 // pred_check_branch
      %3206 = sbr.rel (0) target = $region57
    $region56: #{tpu_custom_call.1} parent=1 // pred_region
      %s3208 = ssub.s32 128, 128
      %3209 = vsyncadd [#allocation5], %s3208
      %s3211 = sshll.u32 [#allocation4], 4
      %s3212 = int_to_ptr.vmem [resolvable:$true] %s3211
      %3214 = dma.vmem_to_hbm [thread:$0]  %s3212, 128, %s13, [#allocation5]
    $region57: #{tpu_custom_call.1} parent=1 // pred_fallthru
      _
    // Predicated region
    $region58: #{tpu_custom_call.1} parent=1 // pred_check
      _
    $region59: #{tpu_custom_call.1} parent=1 // pred_check_branch
      %3216 = sbr.rel (0) target = $region61
    $region60: #{tpu_custom_call.1} parent=1 // pred_region
      _
    $region61: #{tpu_custom_call.1} parent=1 // pred_fallthru
      _
    // Predicated region
    $region62: #{tpu_custom_call.1} parent=1 // pred_check
      _
    $region63: #{tpu_custom_call.1} parent=1 // pred_check_branch
      %3218 = sbr.rel (0) target = $region65
    $region64: #{tpu_custom_call.1} parent=1 // pred_region
      %3219 = dma.done [#allocation3], 128
    $region65: #{tpu_custom_call.1} parent=1 // pred_fallthru
      _
    // Predicated region
    $region66: #{tpu_custom_call.1} parent=1 // pred_check
      _
    $region67: #{tpu_custom_call.1} parent=1 // pred_check_branch
      %3221 = sbr.rel (0) target = $region69
    $region68: #{tpu_custom_call.1} parent=1 // pred_region
      %3222 = dma.done [#allocation5], 128
    $region69: #{tpu_custom_call.1} parent=1 // pred_fallthru
      _
    %3223 = vsyncpa [#allocation3], 1
    %3224 = vsyncpa [#allocation5], 1

</llo_original>
